<compile_context>
chip_gen: v5e
topology: v5e:2x2
jax: 0.10.0
libtpu: 0.0.40
codegen_flags: <defaults>
</compile_context>

<pallas_src>
import jax
import jax.numpy as jnp
from jax.experimental import pallas as pl
from jax.experimental.pallas import tpu as pltpu

LEN_LATENT = 54                 # latent vector size (small, as requested)
NUM_CLASS = 10
EMB_DIM = 10                    # nn.Embedding(num_class, 10)
IN_DIM = LEN_LATENT + EMB_DIM   # 64 (the PyTorch module needs num_class == 10)
IN_PAD = 128                    # first-matmul K padded to a full vreg lane width
IMG_PIX = 28 * 28               # 784
OUT_PAD = 896                   # 7 * 128 -> lane-dense output slab
BN_EPS = 1e-5                   # PyTorch BatchNorm1d default eps
LRELU_SLOPE = 0.2               # nn.LeakyReLU(0.2)
SUBLANE = 8

assert NUM_CLASS == EMB_DIM, "PyTorch module only type-checks when num_class == 10"


# ---------------------------------------------------------------------------
# in-kernel helpers (traced inside the Pallas body)
# ---------------------------------------------------------------------------
def _matmul(x_f32, w_bf16):
    # bf16 operands into the MXU, f32 accumulation.
    return jnp.dot(x_f32.astype(jnp.bfloat16), w_bf16,
                   preferred_element_type=jnp.float32)


def _batchnorm_masked(x, gamma, beta, mask, inv_n):
    # Training-mode BN (biased variance) over the TRUE batch rows only.
    # One pass: sum and sum-of-squares are independent XLU reductions;
    # gamma / beta are folded into a single per-column scale & shift.
    xm = x * mask
    s1 = jnp.sum(xm, axis=0, keepdims=True)
    s2 = jnp.sum(xm * x, axis=0, keepdims=True)
    mean = s1 * inv_n
    var = s2 * inv_n - mean * mean
    scale = gamma[None, :] * jax.lax.rsqrt(var + BN_EPS)
    shift = beta[None, :] - mean * scale
    return x * scale + shift


def _leaky_relu(x):
    return jnp.where(x > 0, x, LRELU_SLOPE * x)


# ---------------------------------------------------------------------------
# Pallas kernel: fused MLP (Linear/LReLU -> 3x [Linear/BN/LReLU] -> Linear/Tanh)
# ---------------------------------------------------------------------------
def generator_mlp_kernel(nvalid_ref,                   # SMEM: true batch size
                         x_ref,                        # [Bp, 128] f32
                         w1_ref, w2_ref, w3_ref,       # small bf16 weights (VMEM)
                         w4_hbm, w5_hbm,               # big bf16 weights (HBM, pl.ANY)
                         pvec_ref,                     # [8, 1024] packed f32 params
                         out_ref,                      # [Bp, 896] f32
                         w4_vmem, w5_vmem, dma_sem):   # scratch
    # Kick off the two large weight DMAs immediately; they overlap layers 1-3.
    w4_cp = pltpu.make_async_copy(w4_hbm, w4_vmem, dma_sem.at[0])
    w5_cp = pltpu.make_async_copy(w5_hbm, w5_vmem, dma_sem.at[1])
    w4_cp.start()
    w5_cp.start()

    bp = x_ref.shape[0]
    # Scalar reads happen before any DMA wait (keeps sst->sld forwarding).
    nvalid = nvalid_ref[0]
    row_id = jax.lax.broadcasted_iota(jnp.int32, (bp, 1), 0)
    mask = (row_id < nvalid).astype(jnp.float32)        # [Bp, 1]
    inv_n = 1.0 / nvalid.astype(jnp.float32)

    # Packed 1-D parameters (single DMA): b2/b3/b4 are omitted on purpose --
    # a Linear bias followed by training-mode BatchNorm cancels exactly.
    b1 = pvec_ref[0, :128]
    g2 = pvec_ref[1, :256]
    be2 = pvec_ref[2, :256]
    g3 = pvec_ref[3, :512]
    be3 = pvec_ref[4, :512]
    g4 = pvec_ref[5, :1024]
    be4 = pvec_ref[6, :1024]
    b5 = pvec_ref[7, :OUT_PAD]

    x = x_ref[...]                                      # [Bp, 128]

    # g_block(len_latent + 10, 128, normalize=False)
    h = _leaky_relu(_matmul(x, w1_ref[...]) + b1[None, :])

    # g_block(128, 256)
    h = _leaky_relu(_batchnorm_masked(_matmul(h, w2_ref[...]), g2, be2, mask, inv_n))

    # g_block(256, 512)
    h = _leaky_relu(_batchnorm_masked(_matmul(h, w3_ref[...]), g3, be3, mask, inv_n))

    # g_block(512, 1024) -- wait for w4 only now (DMA has been hiding so far).
    w4_cp.wait()
    h = _leaky_relu(_batchnorm_masked(_matmul(h, w4_vmem[...]), g4, be4, mask, inv_n))

    # Linear(1024, 784 -> padded 896) + Tanh; unmasked lane-dense store.
    w5_cp.wait()
    out_ref[...] = jnp.tanh(_matmul(h, w5_vmem[...]) + b5[None, :])


# ---------------------------------------------------------------------------
# parameter init (deterministic, PyTorch-like fan-in uniform for Linear,
# N(0,1) for Embedding, gamma=1 / beta=0 for BatchNorm).  Weights are padded
# to lane-friendly shapes and stored as bf16; the small 1-D params the kernel
# needs are packed into a single f32 slab.
# ---------------------------------------------------------------------------
def init_params(key):
    dims = [IN_DIM, 128, 256, 512, 1024, IMG_PIX]
    params = {}
    key, ek = jax.random.split(key)
    params["emb"] = jax.random.normal(ek, (NUM_CLASS, EMB_DIM), jnp.float32)

    for i in range(5):
        fan_in, fan_out = dims[i], dims[i + 1]
        key, wk, bk = jax.random.split(key, 3)
        bound = 1.0 / jnp.sqrt(fan_in)
        w = jax.random.uniform(wk, (fan_in, fan_out), jnp.float32, -bound, bound)
        b = jax.random.uniform(bk, (fan_out,), jnp.float32, -bound, bound)
        if i == 0:                                   # pad K: 64 -> 128 (zero rows)
            w = jnp.pad(w, ((0, IN_PAD - fan_in), (0, 0)))
        if i == 4:                                   # pad N: 784 -> 896 (zero cols)
            w = jnp.pad(w, ((0, 0), (0, OUT_PAD - fan_out)))
            b = jnp.pad(b, (0, OUT_PAD - fan_out))
        params[f"w{i+1}"] = w.astype(jnp.bfloat16)
        params[f"b{i+1}"] = b

    for i, d in zip((2, 3, 4), (256, 512, 1024)):
        params[f"g{i}"] = jnp.ones((d,), jnp.float32)
        params[f"be{i}"] = jnp.zeros((d,), jnp.float32)

    # Packed small-parameter slab (one DMA).  b2/b3/b4 excluded: they are
    # exactly cancelled by the BatchNorm mean subtraction inside the kernel.
    pvec = jnp.zeros((8, 1024), jnp.float32)
    pvec = pvec.at[0, :128].set(params["b1"])
    pvec = pvec.at[1, :256].set(params["g2"])
    pvec = pvec.at[2, :256].set(params["be2"])
    pvec = pvec.at[3, :512].set(params["g3"])
    pvec = pvec.at[4, :512].set(params["be3"])
    pvec = pvec.at[5, :1024].set(params["g4"])
    pvec = pvec.at[6, :1024].set(params["be4"])
    pvec = pvec.at[7, :OUT_PAD].set(params["b5"])
    params["pvec"] = pvec
    return params


# ---------------------------------------------------------------------------
# wrapper
# ---------------------------------------------------------------------------
def generator_forward(params, data, label):
    # Embedding lookup + concat (glue, matches torch.cat((data, emb), dim=1))
    emb = params["emb"][label]                                    # [B, 10]
    x = jnp.concatenate([data.astype(jnp.float32), emb], axis=1)  # [B, 64]
    B = x.shape[0]
    Bp = max(SUBLANE, ((B + SUBLANE - 1) // SUBLANE) * SUBLANE)
    # Zero-pad batch to a sublane multiple and features to 128 lanes.
    x = jnp.pad(x, ((0, Bp - B), (0, IN_PAD - IN_DIM)))           # [Bp, 128]
    nvalid = jnp.full((1,), B, jnp.int32)

    vmem = pl.BlockSpec(memory_space=pltpu.MemorySpace.VMEM)
    smem = pl.BlockSpec(memory_space=pltpu.MemorySpace.SMEM)
    hbm = pl.BlockSpec(memory_space=pl.ANY)   # big weights: manual overlapped DMA

    flat = pl.pallas_call(
        generator_mlp_kernel,
        out_shape=jax.ShapeDtypeStruct((Bp, OUT_PAD), jnp.float32),
        in_specs=[smem, vmem, vmem, vmem, vmem, hbm, hbm, vmem],
        out_specs=vmem,
        scratch_shapes=[
            pltpu.VMEM((512, 1024), jnp.bfloat16),     # w4 landing buffer
            pltpu.VMEM((1024, OUT_PAD), jnp.bfloat16), # w5 landing buffer
            pltpu.SemaphoreType.DMA((2,)),
        ],
        compiler_params=pltpu.CompilerParams(vmem_limit_bytes=16 << 20),
    )(nvalid, x,
      params["w1"], params["w2"], params["w3"],
      params["w4"], params["w5"], params["pvec"])

    # Drop batch/feature padding, reshape to NCHW like `output.view(B,1,28,28)`.
    return flat[:B, :IMG_PIX].reshape(B, 1, 28, 28)


# ---------------------------------------------------------------------------
# pure-JAX reference: identical math / precision path (bf16 operands, f32
# accumulation), PyTorch-faithful structure (biases kept on every Linear; the
# kernel's bias elision for layers 2-4 is a BN identity, checked here).
# ---------------------------------------------------------------------------
def generator_forward_ref(params, data, label):
    emb = params["emb"][label]
    x = jnp.concatenate([data.astype(jnp.float32), emb], axis=1)

    def lin(h, w, b):
        y = jnp.dot(h.astype(jnp.bfloat16), w, preferred_element_type=jnp.float32)
        return y + b[None, :]

    def bn(h, g, be):
        m = jnp.mean(h, axis=0, keepdims=True)
        v = jnp.mean((h - m) ** 2, axis=0, keepdims=True)
        return (h - m) * jax.lax.rsqrt(v + BN_EPS) * g[None, :] + be[None, :]

    def lrelu(h):
        return jnp.where(h > 0, h, LRELU_SLOPE * h)

    h = lrelu(lin(x, params["w1"][:IN_DIM], params["b1"]))
    h = lrelu(bn(lin(h, params["w2"], params["b2"]), params["g2"], params["be2"]))
    h = lrelu(bn(lin(h, params["w3"], params["b3"]), params["g3"], params["be3"]))
    h = lrelu(bn(lin(h, params["w4"], params["b4"]), params["g4"], params["be4"]))
    out = jnp.tanh(lin(h, params["w5"][:, :IMG_PIX], params["b5"][:IMG_PIX]))
    return out.reshape(x.shape[0], 1, 28, 28)


if __name__ == "__main__":
    key = jax.random.PRNGKey(0)
    pkey, dkey, lkey = jax.random.split(key, 3)

    params = init_params(pkey)

    batch = 6   # not a multiple of 8 -> exercises batch padding + BN row mask
    data = jax.random.normal(dkey, (batch, LEN_LATENT), jnp.float32)
    label = jax.random.randint(lkey, (batch,), 0, NUM_CLASS, jnp.int32)

    fwd = jax.jit(generator_forward)
    out = jax.block_until_ready(fwd(params, data, label))
    ref = jax.block_until_ready(generator_forward_ref(params, data, label))

    assert out.shape == (batch, 1, 28, 28), out.shape
    assert bool(jnp.all(jnp.isfinite(out)))
    assert bool(jnp.all(jnp.abs(out) <= 1.0 + 1e-6))          # tanh output range
    err = float(jnp.max(jnp.abs(out - ref)))
    assert err < 5e-2, err
    print("KERNEL_OK")
</pallas_src>

<mosaic_0001>
module attributes {stable_mosaic.version = 11 : i64} {
  func.func @generator_mlp_kernel(%arg0: memref<1xi32, #tpu.memory_space<smem>>, %arg1: memref<8x128xf32, #tpu.memory_space<vmem>>, %arg2: memref<128x128xbf16, #tpu.memory_space<vmem>>, %arg3: memref<128x256xbf16, #tpu.memory_space<vmem>>, %arg4: memref<256x512xbf16, #tpu.memory_space<vmem>>, %arg5: memref<512x1024xbf16, #tpu.memory_space<any>>, %arg6: memref<1024x896xbf16, #tpu.memory_space<any>>, %arg7: memref<8x1024xf32, #tpu.memory_space<vmem>>, %arg8: memref<8x896xf32, #tpu.memory_space<vmem>>, %arg9: memref<512x1024xbf16, #tpu.memory_space<vmem>>, %arg10: memref<1024x896xbf16, #tpu.memory_space<vmem>>, %arg11: memref<2x!tpu.dma_semaphore, #tpu.memory_space<semaphore_mem>>) attributes {dimension_semantics = [], scalar_prefetch = 0 : i64, scratch_operands = 3 : i64, tpu.core_type = #tpu.core_type<tc>} {
    %c0_i32 = arith.constant 0 : i32
    %0 = tpu.memref_slice %arg11[%c0_i32] : memref<2x!tpu.dma_semaphore, #tpu.memory_space<semaphore_mem>> -> memref<1x!tpu.dma_semaphore, #tpu.memory_space<semaphore_mem>>
    %1 = tpu.memref_squeeze %0 : memref<1x!tpu.dma_semaphore, #tpu.memory_space<semaphore_mem>> -> memref<!tpu.dma_semaphore, #tpu.memory_space<semaphore_mem>>
    tpu.enqueue_dma source(%arg5 : memref<512x1024xbf16, #tpu.memory_space<any>>) target(%arg9 : memref<512x1024xbf16, #tpu.memory_space<vmem>>) target_semaphore(%1 : memref<!tpu.dma_semaphore, #tpu.memory_space<semaphore_mem>>)
    %c1_i32 = arith.constant 1 : i32
    %2 = tpu.memref_slice %arg11[%c1_i32] : memref<2x!tpu.dma_semaphore, #tpu.memory_space<semaphore_mem>> -> memref<1x!tpu.dma_semaphore, #tpu.memory_space<semaphore_mem>>
    %3 = tpu.memref_squeeze %2 : memref<1x!tpu.dma_semaphore, #tpu.memory_space<semaphore_mem>> -> memref<!tpu.dma_semaphore, #tpu.memory_space<semaphore_mem>>
    tpu.enqueue_dma source(%arg6 : memref<1024x896xbf16, #tpu.memory_space<any>>) target(%arg10 : memref<1024x896xbf16, #tpu.memory_space<vmem>>) target_semaphore(%3 : memref<!tpu.dma_semaphore, #tpu.memory_space<semaphore_mem>>)
    %c0 = arith.constant 0 : index
    %4 = memref.load %arg0[%c0] : memref<1xi32, #tpu.memory_space<smem>>
    %5 = tpu.iota {dimensions = array<i32: 0>} : vector<8x1xi32>
    %6 = vector.broadcast %4 : i32 to vector<8x1xi32>
    %7 = arith.cmpi slt, %5, %6 : vector<8x1xi32>
    %8 = arith.extui %7 : vector<8x1xi1> to vector<8x1xi32>
    %9 = arith.sitofp %8 : vector<8x1xi32> to vector<8x1xf32>
    %10 = arith.sitofp %4 : i32 to f32
    %cst = arith.constant 1.000000e+00 : f32
    %11 = arith.divf %cst, %10 : f32
    %c0_0 = arith.constant 0 : index
    %c0_1 = arith.constant 0 : index
    %12 = vector.load %arg7[%c0_0, %c0_1] : memref<8x1024xf32, #tpu.memory_space<vmem>>, vector<1x128xf32>
    %13 = vector.shape_cast %12 : vector<1x128xf32> to vector<128xf32>
    %c1 = arith.constant 1 : index
    %c0_2 = arith.constant 0 : index
    %14 = vector.load %arg7[%c1, %c0_2] : memref<8x1024xf32, #tpu.memory_space<vmem>>, vector<1x256xf32>
    %15 = vector.shape_cast %14 : vector<1x256xf32> to vector<256xf32>
    %c2 = arith.constant 2 : index
    %c0_3 = arith.constant 0 : index
    %16 = vector.load %arg7[%c2, %c0_3] : memref<8x1024xf32, #tpu.memory_space<vmem>>, vector<1x256xf32>
    %17 = vector.shape_cast %16 : vector<1x256xf32> to vector<256xf32>
    %c3 = arith.constant 3 : index
    %c0_4 = arith.constant 0 : index
    %18 = vector.load %arg7[%c3, %c0_4] : memref<8x1024xf32, #tpu.memory_space<vmem>>, vector<1x512xf32>
    %19 = vector.shape_cast %18 : vector<1x512xf32> to vector<512xf32>
    %c4 = arith.constant 4 : index
    %c0_5 = arith.constant 0 : index
    %20 = vector.load %arg7[%c4, %c0_5] : memref<8x1024xf32, #tpu.memory_space<vmem>>, vector<1x512xf32>
    %21 = vector.shape_cast %20 : vector<1x512xf32> to vector<512xf32>
    %c5 = arith.constant 5 : index
    %c0_6 = arith.constant 0 : index
    %22 = vector.load %arg7[%c5, %c0_6] : memref<8x1024xf32, #tpu.memory_space<vmem>>, vector<1x1024xf32>
    %23 = vector.shape_cast %22 : vector<1x1024xf32> to vector<1024xf32>
    %c6 = arith.constant 6 : index
    %c0_7 = arith.constant 0 : index
    %24 = vector.load %arg7[%c6, %c0_7] : memref<8x1024xf32, #tpu.memory_space<vmem>>, vector<1x1024xf32>
    %25 = vector.shape_cast %24 : vector<1x1024xf32> to vector<1024xf32>
    %c7 = arith.constant 7 : index
    %c0_8 = arith.constant 0 : index
    %26 = vector.load %arg7[%c7, %c0_8] : memref<8x1024xf32, #tpu.memory_space<vmem>>, vector<1x896xf32>
    %27 = vector.shape_cast %26 : vector<1x896xf32> to vector<896xf32>
    %c0_9 = arith.constant 0 : index
    %c0_10 = arith.constant 0 : index
    %28 = vector.load %arg1[%c0_9, %c0_10] : memref<8x128xf32, #tpu.memory_space<vmem>>, vector<8x128xf32>
    %c0_11 = arith.constant 0 : index
    %c0_12 = arith.constant 0 : index
    %29 = vector.load %arg2[%c0_11, %c0_12] : memref<128x128xbf16, #tpu.memory_space<vmem>>, vector<128x128xbf16>
    %30 = arith.truncf %28 : vector<8x128xf32> to vector<8x128xbf16>
    %cst_13 = arith.constant dense<0.000000e+00> : vector<8x128xf32>
    %31 = tpu.matmul %30, %29, %cst_13 {dimension_numbers = #tpu.dot_dimension_numbers<[1], [0], [0], [1], [0, 0, 1, 1], [], []>} : vector<8x128xbf16>, vector<128x128xbf16>, vector<8x128xf32> -> vector<8x128xf32>
    %32 = vector.shape_cast %13 : vector<128xf32> to vector<1x128xf32>
    %33 = vector.broadcast %32 : vector<1x128xf32> to vector<8x128xf32>
    %34 = arith.addf %31, %33 : vector<8x128xf32>
    %cst_14 = arith.constant 0.000000e+00 : f32
    %35 = vector.broadcast %cst_14 : f32 to vector<8x128xf32>
    %36 = arith.cmpf ogt, %34, %35 : vector<8x128xf32>
    %cst_15 = arith.constant 2.000000e-01 : f32
    %37 = vector.broadcast %cst_15 : f32 to vector<8x128xf32>
    %38 = arith.mulf %37, %34 : vector<8x128xf32>
    %39 = arith.select %36, %34, %38 : vector<8x128xi1>, vector<8x128xf32>
    %c0_16 = arith.constant 0 : index
    %c0_17 = arith.constant 0 : index
    %40 = vector.load %arg3[%c0_16, %c0_17] : memref<128x256xbf16, #tpu.memory_space<vmem>>, vector<128x256xbf16>
    %41 = arith.truncf %39 : vector<8x128xf32> to vector<8x128xbf16>
    %cst_18 = arith.constant dense<0.000000e+00> : vector<8x256xf32>
    %42 = tpu.matmul %41, %40, %cst_18 {dimension_numbers = #tpu.dot_dimension_numbers<[1], [0], [0], [1], [0, 0, 1, 1], [], []>} : vector<8x128xbf16>, vector<128x256xbf16>, vector<8x256xf32> -> vector<8x256xf32>
    %43 = vector.broadcast %9 : vector<8x1xf32> to vector<8x256xf32>
    %44 = arith.mulf %42, %43 : vector<8x256xf32>
    %cst_19 = arith.constant dense<0.000000e+00> : vector<256xf32>
    %45 = vector.multi_reduction <add>, %44, %cst_19 [0] : vector<8x256xf32> to vector<256xf32>
    %46 = vector.shape_cast %45 : vector<256xf32> to vector<1x256xf32>
    %47 = arith.mulf %44, %42 : vector<8x256xf32>
    %cst_20 = arith.constant dense<0.000000e+00> : vector<256xf32>
    %48 = vector.multi_reduction <add>, %47, %cst_20 [0] : vector<8x256xf32> to vector<256xf32>
    %49 = vector.shape_cast %48 : vector<256xf32> to vector<1x256xf32>
    %50 = vector.broadcast %11 : f32 to vector<1x256xf32>
    %51 = arith.mulf %46, %50 : vector<1x256xf32>
    %52 = vector.broadcast %11 : f32 to vector<1x256xf32>
    %53 = arith.mulf %49, %52 : vector<1x256xf32>
    %54 = arith.mulf %51, %51 : vector<1x256xf32>
    %55 = arith.subf %53, %54 : vector<1x256xf32>
    %56 = vector.shape_cast %15 : vector<256xf32> to vector<1x256xf32>
    %cst_21 = arith.constant 9.99999974E-6 : f32
    %57 = vector.broadcast %cst_21 : f32 to vector<1x256xf32>
    %58 = arith.addf %55, %57 : vector<1x256xf32>
    %59 = math.rsqrt %58 : vector<1x256xf32>
    %60 = arith.mulf %56, %59 : vector<1x256xf32>
    %61 = vector.shape_cast %17 : vector<256xf32> to vector<1x256xf32>
    %62 = arith.mulf %51, %60 : vector<1x256xf32>
    %63 = arith.subf %61, %62 : vector<1x256xf32>
    %64 = vector.broadcast %60 : vector<1x256xf32> to vector<8x256xf32>
    %65 = arith.mulf %42, %64 : vector<8x256xf32>
    %66 = vector.broadcast %63 : vector<1x256xf32> to vector<8x256xf32>
    %67 = arith.addf %65, %66 : vector<8x256xf32>
    %cst_22 = arith.constant 0.000000e+00 : f32
    %68 = vector.broadcast %cst_22 : f32 to vector<8x256xf32>
    %69 = arith.cmpf ogt, %67, %68 : vector<8x256xf32>
    %cst_23 = arith.constant 2.000000e-01 : f32
    %70 = vector.broadcast %cst_23 : f32 to vector<8x256xf32>
    %71 = arith.mulf %70, %67 : vector<8x256xf32>
    %72 = arith.select %69, %67, %71 : vector<8x256xi1>, vector<8x256xf32>
    %c0_24 = arith.constant 0 : index
    %c0_25 = arith.constant 0 : index
    %73 = vector.load %arg4[%c0_24, %c0_25] : memref<256x512xbf16, #tpu.memory_space<vmem>>, vector<256x512xbf16>
    %74 = arith.truncf %72 : vector<8x256xf32> to vector<8x256xbf16>
    %cst_26 = arith.constant dense<0.000000e+00> : vector<8x512xf32>
    %75 = tpu.matmul %74, %73, %cst_26 {dimension_numbers = #tpu.dot_dimension_numbers<[1], [0], [0], [1], [0, 0, 1, 1], [], []>} : vector<8x256xbf16>, vector<256x512xbf16>, vector<8x512xf32> -> vector<8x512xf32>
    %76 = vector.broadcast %9 : vector<8x1xf32> to vector<8x512xf32>
    %77 = arith.mulf %75, %76 : vector<8x512xf32>
    %cst_27 = arith.constant dense<0.000000e+00> : vector<512xf32>
    %78 = vector.multi_reduction <add>, %77, %cst_27 [0] : vector<8x512xf32> to vector<512xf32>
    %79 = vector.shape_cast %78 : vector<512xf32> to vector<1x512xf32>
    %80 = arith.mulf %77, %75 : vector<8x512xf32>
    %cst_28 = arith.constant dense<0.000000e+00> : vector<512xf32>
    %81 = vector.multi_reduction <add>, %80, %cst_28 [0] : vector<8x512xf32> to vector<512xf32>
    %82 = vector.shape_cast %81 : vector<512xf32> to vector<1x512xf32>
    %83 = vector.broadcast %11 : f32 to vector<1x512xf32>
    %84 = arith.mulf %79, %83 : vector<1x512xf32>
    %85 = vector.broadcast %11 : f32 to vector<1x512xf32>
    %86 = arith.mulf %82, %85 : vector<1x512xf32>
    %87 = arith.mulf %84, %84 : vector<1x512xf32>
    %88 = arith.subf %86, %87 : vector<1x512xf32>
    %89 = vector.shape_cast %19 : vector<512xf32> to vector<1x512xf32>
    %cst_29 = arith.constant 9.99999974E-6 : f32
    %90 = vector.broadcast %cst_29 : f32 to vector<1x512xf32>
    %91 = arith.addf %88, %90 : vector<1x512xf32>
    %92 = math.rsqrt %91 : vector<1x512xf32>
    %93 = arith.mulf %89, %92 : vector<1x512xf32>
    %94 = vector.shape_cast %21 : vector<512xf32> to vector<1x512xf32>
    %95 = arith.mulf %84, %93 : vector<1x512xf32>
    %96 = arith.subf %94, %95 : vector<1x512xf32>
    %97 = vector.broadcast %93 : vector<1x512xf32> to vector<8x512xf32>
    %98 = arith.mulf %75, %97 : vector<8x512xf32>
    %99 = vector.broadcast %96 : vector<1x512xf32> to vector<8x512xf32>
    %100 = arith.addf %98, %99 : vector<8x512xf32>
    %cst_30 = arith.constant 0.000000e+00 : f32
    %101 = vector.broadcast %cst_30 : f32 to vector<8x512xf32>
    %102 = arith.cmpf ogt, %100, %101 : vector<8x512xf32>
    %cst_31 = arith.constant 2.000000e-01 : f32
    %103 = vector.broadcast %cst_31 : f32 to vector<8x512xf32>
    %104 = arith.mulf %103, %100 : vector<8x512xf32>
    %105 = arith.select %102, %100, %104 : vector<8x512xi1>, vector<8x512xf32>
    %c0_i32_32 = arith.constant 0 : i32
    %106 = tpu.memref_slice %arg11[%c0_i32_32] : memref<2x!tpu.dma_semaphore, #tpu.memory_space<semaphore_mem>> -> memref<1x!tpu.dma_semaphore, #tpu.memory_space<semaphore_mem>>
    %107 = tpu.memref_squeeze %106 : memref<1x!tpu.dma_semaphore, #tpu.memory_space<semaphore_mem>> -> memref<!tpu.dma_semaphore, #tpu.memory_space<semaphore_mem>>
    tpu.wait_dma2 semaphore(%107 : memref<!tpu.dma_semaphore, #tpu.memory_space<semaphore_mem>>) src(%arg5 : memref<512x1024xbf16, #tpu.memory_space<any>>) dst(%arg9 : memref<512x1024xbf16, #tpu.memory_space<vmem>>)
    %c0_33 = arith.constant 0 : index
    %c0_34 = arith.constant 0 : index
    %108 = vector.load %arg9[%c0_33, %c0_34] : memref<512x1024xbf16, #tpu.memory_space<vmem>>, vector<512x1024xbf16>
    %109 = arith.truncf %105 : vector<8x512xf32> to vector<8x512xbf16>
    %cst_35 = arith.constant dense<0.000000e+00> : vector<8x1024xf32>
    %110 = tpu.matmul %109, %108, %cst_35 {dimension_numbers = #tpu.dot_dimension_numbers<[1], [0], [0], [1], [0, 0, 1, 1], [], []>} : vector<8x512xbf16>, vector<512x1024xbf16>, vector<8x1024xf32> -> vector<8x1024xf32>
    %111 = vector.broadcast %9 : vector<8x1xf32> to vector<8x1024xf32>
    %112 = arith.mulf %110, %111 : vector<8x1024xf32>
    %cst_36 = arith.constant dense<0.000000e+00> : vector<1024xf32>
    %113 = vector.multi_reduction <add>, %112, %cst_36 [0] : vector<8x1024xf32> to vector<1024xf32>
    %114 = vector.shape_cast %113 : vector<1024xf32> to vector<1x1024xf32>
    %115 = arith.mulf %112, %110 : vector<8x1024xf32>
    %cst_37 = arith.constant dense<0.000000e+00> : vector<1024xf32>
    %116 = vector.multi_reduction <add>, %115, %cst_37 [0] : vector<8x1024xf32> to vector<1024xf32>
    %117 = vector.shape_cast %116 : vector<1024xf32> to vector<1x1024xf32>
    %118 = vector.broadcast %11 : f32 to vector<1x1024xf32>
    %119 = arith.mulf %114, %118 : vector<1x1024xf32>
    %120 = vector.broadcast %11 : f32 to vector<1x1024xf32>
    %121 = arith.mulf %117, %120 : vector<1x1024xf32>
    %122 = arith.mulf %119, %119 : vector<1x1024xf32>
    %123 = arith.subf %121, %122 : vector<1x1024xf32>
    %124 = vector.shape_cast %23 : vector<1024xf32> to vector<1x1024xf32>
    %cst_38 = arith.constant 9.99999974E-6 : f32
    %125 = vector.broadcast %cst_38 : f32 to vector<1x1024xf32>
    %126 = arith.addf %123, %125 : vector<1x1024xf32>
    %127 = math.rsqrt %126 : vector<1x1024xf32>
    %128 = arith.mulf %124, %127 : vector<1x1024xf32>
    %129 = vector.shape_cast %25 : vector<1024xf32> to vector<1x1024xf32>
    %130 = arith.mulf %119, %128 : vector<1x1024xf32>
    %131 = arith.subf %129, %130 : vector<1x1024xf32>
    %132 = vector.broadcast %128 : vector<1x1024xf32> to vector<8x1024xf32>
    %133 = arith.mulf %110, %132 : vector<8x1024xf32>
    %134 = vector.broadcast %131 : vector<1x1024xf32> to vector<8x1024xf32>
    %135 = arith.addf %133, %134 : vector<8x1024xf32>
    %cst_39 = arith.constant 0.000000e+00 : f32
    %136 = vector.broadcast %cst_39 : f32 to vector<8x1024xf32>
    %137 = arith.cmpf ogt, %135, %136 : vector<8x1024xf32>
    %cst_40 = arith.constant 2.000000e-01 : f32
    %138 = vector.broadcast %cst_40 : f32 to vector<8x1024xf32>
    %139 = arith.mulf %138, %135 : vector<8x1024xf32>
    %140 = arith.select %137, %135, %139 : vector<8x1024xi1>, vector<8x1024xf32>
    %c1_i32_41 = arith.constant 1 : i32
    %141 = tpu.memref_slice %arg11[%c1_i32_41] : memref<2x!tpu.dma_semaphore, #tpu.memory_space<semaphore_mem>> -> memref<1x!tpu.dma_semaphore, #tpu.memory_space<semaphore_mem>>
    %142 = tpu.memref_squeeze %141 : memref<1x!tpu.dma_semaphore, #tpu.memory_space<semaphore_mem>> -> memref<!tpu.dma_semaphore, #tpu.memory_space<semaphore_mem>>
    tpu.wait_dma2 semaphore(%142 : memref<!tpu.dma_semaphore, #tpu.memory_space<semaphore_mem>>) src(%arg6 : memref<1024x896xbf16, #tpu.memory_space<any>>) dst(%arg10 : memref<1024x896xbf16, #tpu.memory_space<vmem>>)
    %c0_42 = arith.constant 0 : index
    %c0_43 = arith.constant 0 : index
    %143 = vector.load %arg10[%c0_42, %c0_43] : memref<1024x896xbf16, #tpu.memory_space<vmem>>, vector<1024x896xbf16>
    %144 = arith.truncf %140 : vector<8x1024xf32> to vector<8x1024xbf16>
    %cst_44 = arith.constant dense<0.000000e+00> : vector<8x896xf32>
    %145 = tpu.matmul %144, %143, %cst_44 {dimension_numbers = #tpu.dot_dimension_numbers<[1], [0], [0], [1], [0, 0, 1, 1], [], []>} : vector<8x1024xbf16>, vector<1024x896xbf16>, vector<8x896xf32> -> vector<8x896xf32>
    %146 = vector.shape_cast %27 : vector<896xf32> to vector<1x896xf32>
    %147 = vector.broadcast %146 : vector<1x896xf32> to vector<8x896xf32>
    %148 = arith.addf %145, %147 : vector<8x896xf32>
    %149 = math.tanh %148 : vector<8x896xf32>
    %c0_45 = arith.constant 0 : index
    %c0_46 = arith.constant 0 : index
    %150 = vector.load %arg8[%c0_45, %c0_46] : memref<8x896xf32, #tpu.memory_space<vmem>>, vector<8x896xf32>
    tpu.vector_store %arg8[%c0_45, %c0_46], %149 {strides = array<i32>} : memref<8x896xf32, #tpu.memory_space<vmem>>, vector<8x896xf32>,
    return
  }
}

</mosaic_0001>

<llo_original>
// kernel: generator_forward.1
$region0: #{generator_forward.1}
  #allocation0 [shape = 'u32[]', space=smem, size = 0x4, offset = 0x4, fixed_abs, tag = 'smem constant byte address 0x4 - core index']
  #allocation1 [shape = 'u32[72,128]{1,0:T(1,128)}', space=vmem, size = 0x9000, scoped, tag = 'internal scratch']
  #allocation2 [shape = 'bf16[512,1024]{1,0:T(8,128)(2,1)}', space=vmem, size = 0x100000, scoped, tag = 'scratch operand']
  #allocation3 [shape = 'bf16[1024,896]{1,0:T(8,128)(2,1)}', space=vmem, size = 0x1c0000, scoped, tag = 'scratch operand']
  #allocation4 [shape = 's32[2]{0}', space=sflag, size = 0x8, scoped, tag = 'scratch operand']
  #allocation5 [shape = 's32[1]{0:T(128)S(6)}', space=smem, size = 0x200, scoped, tag = 'scoped memory for generator_forward.1']
  #allocation13 [shape = 's32[]', space=sflag, size = 0x4, offset = 0, fixed_abs, tag = 'sflag constant byte address 0x0 - dummy sync flag']
  #allocation14 [shape = 's32[]', space=sflag, size = 0x4, offset = 0, fixed_abs, tag = 'sflag constant byte address 0x0 - dummy sync flag']
  #allocation15 [shape = 'u32[]', space=smem, size = 0x4, offset = 0x44, fixed_abs, tag = 'smem constant byte address 0x44 - assertion arg 0']
  #allocation16 [shape = 'u32[]', space=smem, size = 0x4, offset = 0x48, fixed_abs, tag = 'smem constant byte address 0x48 - assertion arg 1']
  #allocation17 [shape = 's32[]', space=sflag, size = 0x4, offset = 0, fixed_abs, tag = 'sflag constant byte address 0x0 - dummy sync flag']
  #allocation18 [shape = 's32[]', space=sflag, size = 0x4, offset = 0, fixed_abs, tag = 'sflag constant byte address 0x0 - dummy sync flag']
  %s0 = inlined_call_operand.<no memory space> [shape: s32[1], index: 0, kind: input, shape index: {}]
  %s1 = inlined_call_operand.vmem [shape: f32[8,128], index: 1, kind: input, shape index: {}]
  %s2 = inlined_call_operand.hbm [shape: bf16[128,128], index: 2, kind: input, shape index: {}]
  %s3 = inlined_call_operand.hbm [shape: bf16[128,256], index: 3, kind: input, shape index: {}]
  %s4 = inlined_call_operand.hbm [shape: bf16[256,512], index: 4, kind: input, shape index: {}]
  %s5 = inlined_call_operand.hbm [shape: bf16[512,1024], index: 5, kind: input, shape index: {}]
  %s6 = inlined_call_operand.hbm [shape: bf16[1024,896], index: 6, kind: input, shape index: {}]
  %s7 = inlined_call_operand.hbm [shape: f32[8,1024], index: 7, kind: input, shape index: {}]
  %s8 = inlined_call_operand.vmem [shape: f32[8,896], index: 8, kind: output, shape index: {}]
  %s9 = sld [smem:[#allocation0]]
  $region58: #{generator_forward.1} parent=0
    _
  %s11 = ssub.s32 1, %s9
  %s12 = scalar_select 0, %s11, %s9
  %13 = sst [smem:[#allocation5]] %s0
  $region1: #{generator_forward.1} parent=0
    #allocation6 [shape = 'u8[32768]{0}', space=vmem, size = 0x8000, scoped, tag = 'input window, operand 2, single buffered']
    #allocation7 [shape = 's32[1]{0}', space=sflag, size = 0x4, scoped, tag = 'scoped memory for generator_forward.1']
    #allocation8 [shape = 'u8[65536]{0}', space=vmem, size = 0x10000, scoped, tag = 'input window, operand 3, single buffered']
    #allocation9 [shape = 's32[1]{0}', space=sflag, size = 0x4, scoped, tag = 'scoped memory for generator_forward.1']
    #allocation10 [shape = 'u8[262144]{0}', space=vmem, size = 0x40000, scoped, tag = 'input window, operand 4, single buffered']
    #allocation11 [shape = 'u8[32768]{0}', space=vmem, size = 0x8000, scoped, tag = 'input window, operand 7, single buffered']
    #allocation12 [shape = 's32[1]{0}', space=sflag, size = 0x4, scoped, tag = 'scoped memory for generator_forward.1']
    %14 = vsyncpa [#allocation7], 0
    %15 = vsyncpa [#allocation9], 0
    %16 = vsyncpa [#allocation12], 0
    // Predicated region
    $region2: #{generator_forward.1} parent=1 // pred_check
      _
    $region3: #{generator_forward.1} parent=1 // pred_check_branch
      %18 = sbr.rel (0) target = $region5
    $region4: #{generator_forward.1} parent=1 // pred_region
      _
    $region5: #{generator_forward.1} parent=1 // pred_fallthru
      _
    // Predicated region
    $region6: #{generator_forward.1} parent=1 // pred_check
      _
    $region7: #{generator_forward.1} parent=1 // pred_check_branch
      %20 = sbr.rel (0) target = $region9
    $region8: #{generator_forward.1} parent=1 // pred_region
      _
    $region9: #{generator_forward.1} parent=1 // pred_fallthru
      _
    // Predicated region
    $region10: #{generator_forward.1} parent=1 // pred_check
      _
    $region11: #{generator_forward.1} parent=1 // pred_check_branch
      %22 = sbr.rel (0) target = $region13
    $region12: #{generator_forward.1} parent=1 // pred_region
      %24 = vsyncadd [#allocation7], 0
      %s25 = sshll.u32 %s2, 4
      %s26 = int_to_ptr.hbm [resolvable:$true] %s25
      %s27 = sshll.u32 [#allocation6], 4
      %s28 = int_to_ptr.vmem [resolvable:$true] %s27
      %33 = dma.hbm_to_vmem [thread:$0]  %s26, 1024, %s28, [#allocation7], 64, 64, 4
    $region13: #{generator_forward.1} parent=1 // pred_fallthru
      _
    // Predicated region
    $region14: #{generator_forward.1} parent=1 // pred_check
      _
    $region15: #{generator_forward.1} parent=1 // pred_check_branch
      %35 = sbr.rel (0) target = $region17
    $region16: #{generator_forward.1} parent=1 // pred_region
      %37 = vsyncadd [#allocation9], 0
      %s38 = sshll.u32 %s3, 4
      %s39 = int_to_ptr.hbm [resolvable:$true] %s38
      %s40 = sshll.u32 [#allocation8], 4
      %s41 = int_to_ptr.vmem [resolvable:$true] %s40
      %46 = dma.hbm_to_vmem [thread:$0]  %s39, 2048, %s41, [#allocation9], 128, 128, 8
    $region17: #{generator_forward.1} parent=1 // pred_fallthru
      _
    // Predicated region
    $region18: #{generator_forward.1} parent=1 // pred_check
      _
    $region19: #{generator_forward.1} parent=1 // pred_check_branch
      %48 = sbr.rel (0) target = $region21
    $region20: #{generator_forward.1} parent=1 // pred_region
      %50 = vsyncadd [#allocation9], 0
      %s51 = sshll.u32 %s4, 4
      %s52 = int_to_ptr.hbm [resolvable:$true] %s51
      %s53 = sshll.u32 [#allocation10], 4
      %s54 = int_to_ptr.vmem [resolvable:$true] %s53
      %59 = dma.hbm_to_vmem [thread:$0]  %s52, 8192, %s54, [#allocation9], 256, 256, 16
    $region21: #{generator_forward.1} parent=1 // pred_fallthru
      _
    // Predicated region
    $region22: #{generator_forward.1} parent=1 // pred_check
      _
    $region23: #{generator_forward.1} parent=1 // pred_check_branch
      %61 = sbr.rel (0) target = $region25
    $region24: #{generator_forward.1} parent=1 // pred_region
      %63 = vsyncadd [#allocation12], 0
      %s65 = sshll.u32 %s7, 4
      %s66 = int_to_ptr.hbm [resolvable:$true] %s65
      %s67 = sshll.u32 [#allocation11], 4
      %s68 = int_to_ptr.vmem [resolvable:$true] %s67
      %70 = dma.hbm_to_vmem [thread:$0]  %s66, 1024, %s68, [#allocation12]
    $region25: #{generator_forward.1} parent=1 // pred_fallthru
      _
    // Predicated region
    $region26: #{generator_forward.1} parent=1 // pred_check
      _
    $region27: #{generator_forward.1} parent=1 // pred_check_branch
      %72 = sbr.rel (0) target = $region29
    $region28: #{generator_forward.1} parent=1 // pred_region
      %74 = dma.done [#allocation7], 1024
    $region29: #{generator_forward.1} parent=1 // pred_fallthru
      _
    // Predicated region
    $region30: #{generator_forward.1} parent=1 // pred_check
      _
    $region31: #{generator_forward.1} parent=1 // pred_check_branch
      %76 = sbr.rel (0) target = $region33
    $region32: #{generator_forward.1} parent=1 // pred_region
      %78 = dma.done [#allocation9], 2048
    $region33: #{generator_forward.1} parent=1 // pred_fallthru
      _
    // Predicated region
    $region34: #{generator_forward.1} parent=1 // pred_check
      _
    $region35: #{generator_forward.1} parent=1 // pred_check_branch
      %80 = sbr.rel (0) target = $region37
    $region36: #{generator_forward.1} parent=1 // pred_region
      %82 = dma.done [#allocation9], 8192
    $region37: #{generator_forward.1} parent=1 // pred_fallthru
      _
    // Predicated region
    $region38: #{generator_forward.1} parent=1 // pred_check
      _
    $region39: #{generator_forward.1} parent=1 // pred_check_branch
      %84 = sbr.rel (0) target = $region41
    $region40: #{generator_forward.1} parent=1 // pred_region
      %86 = dma.done [#allocation12], 1024
    $region41: #{generator_forward.1} parent=1 // pred_fallthru
      _
    // Predicated region
    $region42: #{generator_forward.1} parent=1 // pred_check
      _
    $region43: #{generator_forward.1} parent=1 // pred_check_branch
      %88 = sbr.rel target = $region45
    $region44: #{generator_forward.1} parent=1 // pred_region
      %89 = sst [smem:[#allocation15]] [#allocation14]
      %90 = sst [smem:[#allocation16]] [#allocation13]
    $region45: #{generator_forward.1} parent=1 // pred_fallthru
      _
    %92 = shalt.err (0)
    %s94 = sshll.u32 %s5, 4
    %s95 = int_to_ptr.hbm [resolvable:$true] %s94
    %s96 = sshll.u32 [#allocation2], 4
    %s97 = int_to_ptr.vmem [resolvable:$true] %s96
    %99 = dma.hbm_to_vmem [thread:$0]  %s95, 32768, %s97, [#allocation4]
    %s100 = scalar_lea.sflag [#allocation4], 1
    // Predicated region
    $region46: #{generator_forward.1} parent=1 // pred_check
      _
    $region47: #{generator_forward.1} parent=1 // pred_check_branch
      %102 = sbr.rel target = $region49
    $region48: #{generator_forward.1} parent=1 // pred_region
      %103 = sst [smem:[#allocation15]] [#allocation18]
      %104 = sst [smem:[#allocation16]] [#allocation17]
    $region49: #{generator_forward.1} parent=1 // pred_fallthru
      _
    %106 = shalt.err (0)
    %s108 = sshll.u32 %s6, 4
    %s109 = int_to_ptr.hbm [resolvable:$true] %s108
    %s110 = sshll.u32 [#allocation3], 4
    %s111 = int_to_ptr.vmem [resolvable:$true] %s110
    %113 = dma.hbm_to_vmem [thread:$0]  %s109, 57344, %s111, %s100
    %s114 = sld [smem:[#allocation5]]
    %v115 = vlaneseq
    %v116 = vshrl.u32 %v115, 7
    %v117 = vstv %s114
    %vm118 = vcmp.lt.s32.totalorder %v116, %v117
    %v119 = vsel %vm118, 1, 0
    %v120 = vcvt.s32.f32 %v119
    %s121 = scvt.s32.f32 %s114
    %v122 = vstv %s121
    %v123 = vrcp.pop %v122
    %v124 = vmul.f32 %v122, %v123
    %v125 = vsub.f32 1.0, %v124
    %v126 = vmul.f32 %v123, %v125
    %v127 = vadd.f32 %v123, %v126
    %vm128 = vweird.f32 %v122
    %vm129 = vweird.f32 %v123
    %vm130 = vmor %vm128, %vm129
    %v131 = vsel %vm130, %v123, %v127
    %v132 = vand.u32 2147483647, %v122
    %vm133 = vcmp.eq.f32.partialorder %v132, 8.507059e+37
    %v134 = vand.u32 %v122, 2147483648
    %v135 = vor.u32 1.1754944e-38, %v134
    %v136 = vsel %vm133, %v135, %v131
    %s137 = vtos %v136
    %v138 = vld [vmem:[#allocation11] ss:$0 sm:$0xff]
    %s139 = scalar_lea.vmem [#allocation11], 1
    %v140 = vld [vmem:[%s139] ss:$8 sm:$0x3]
    %s141 = scalar_lea.vmem [#allocation11], 2
    %v142 = vld [vmem:[%s141] ss:$8 sm:$0x3]
    %s143 = scalar_lea.vmem [#allocation11], 3
    %v144 = vld [vmem:[%s143] ss:$8 sm:$0xf]
    %s145 = scalar_lea.vmem [#allocation11], 4
    %v146 = vld [vmem:[%s145] ss:$8 sm:$0xf]
    %s147 = scalar_lea.vmem [#allocation11], 5
    %v148 = vld [vmem:[%s147] ss:$8 sm:$0xf]
    %v149 = vld [vmem:[%s147] ss:$8 sm:$0xf0]
    %v150 = vor.u32 %v148, %v149
    %s151 = scalar_lea.vmem [#allocation11], 6
    %v152 = vld [vmem:[%s151] ss:$8 sm:$0xf]
    %v153 = vld [vmem:[%s151] ss:$8 sm:$0xf0]
    %v154 = vor.u32 %v152, %v153
    %s155 = scalar_lea.vmem [#allocation11], 7
    %v156 = vld [vmem:[%s155] ss:$8 sm:$0xf]
    %v157 = vld [vmem:[%s155] ss:$8 sm:$0xf0]
    %v158 = vor.u32 %v156, %v157
    %v159 = vld [vmem:[%s1] sm:$0xff]
    %v160 = vld [vmem:[#allocation6] sm:$0xf]
    %v161 = vld [vmem:[#allocation6 + $0x4] sm:$0xf]
    %v162 = vld [vmem:[#allocation6 + $0x8] sm:$0xf]
    %v163 = vld [vmem:[#allocation6 + $0xc] sm:$0xf]
    %v164 = vld [vmem:[#allocation6 + $0x10] sm:$0xf]
    %v165 = vld [vmem:[#allocation6 + $0x14] sm:$0xf]
    %v166 = vld [vmem:[#allocation6 + $0x18] sm:$0xf]
    %v167 = vld [vmem:[#allocation6 + $0x1c] sm:$0xf]
    %v168 = vld [vmem:[#allocation6 + $0x20] sm:$0xf]
    %v169 = vld [vmem:[#allocation6 + $0x24] sm:$0xf]
    %v170 = vld [vmem:[#allocation6 + $0x28] sm:$0xf]
    %v171 = vld [vmem:[#allocation6 + $0x2c] sm:$0xf]
    %v172 = vld [vmem:[#allocation6 + $0x30] sm:$0xf]
    %v173 = vld [vmem:[#allocation6 + $0x34] sm:$0xf]
    %v174 = vld [vmem:[#allocation6 + $0x38] sm:$0xf]
    %v175 = vld [vmem:[#allocation6 + $0x3c] sm:$0xf]
    %v176 = vpack.c.bf16 %v159, %v159
    %v193 = vunpack.c.l.b16 %v160
    %v194 = vunpack.c.l.b16 %v161
    %v195 = vunpack.c.l.b16 %v162
    %v196 = vunpack.c.l.b16 %v163
    %v197 = vunpack.c.l.b16 %v164
    %v198 = vunpack.c.l.b16 %v165
    %v199 = vunpack.c.l.b16 %v166
    %v200 = vunpack.c.l.b16 %v167
    %v201 = vunpack.c.l.b16 %v168
    %v202 = vunpack.c.l.b16 %v169
    %v203 = vunpack.c.l.b16 %v170
    %v204 = vunpack.c.l.b16 %v171
    %v205 = vunpack.c.l.b16 %v172
    %v206 = vunpack.c.l.b16 %v173
    %v207 = vunpack.c.l.b16 %v174
    %v208 = vunpack.c.l.b16 %v175
    %v209 = vpack.c.b16 %v194, %v193
    %v210 = vpack.c.b16 %v196, %v195
    %v211 = vpack.c.b16 %v198, %v197
    %v212 = vpack.c.b16 %v200, %v199
    %v213 = vpack.c.b16 %v202, %v201
    %v214 = vpack.c.b16 %v204, %v203
    %v215 = vpack.c.b16 %v206, %v205
    %v216 = vpack.c.b16 %v208, %v207
    %225 = vmatpush.bf16.msra.mxu0 %v216
    %226 = vmatpush.bf16.msra.mxu0 %v215
    %227 = vmatpush.bf16.msra.mxu0 %v214
    %228 = vmatpush.bf16.msra.mxu0 %v213
    %229 = vmatpush.bf16.msra.mxu0 %v212
    %230 = vmatpush.bf16.msra.mxu0 %v211
    %231 = vmatpush.bf16.msra.mxu0 %v210
    %232 = vmatpush.bf16.msra.mxu0 %v209
    %233 = vmatmul.bf16.gmra.mxu0 %v176
    %v234 = vpop.f32.mrf.mxu0
    %v235 = vadd.f32 %v138, %v234
    %v236 = vpop.f32.mrf.mxu0
    %237 = vdwg.mxu0
    %vm238 = vcmp.gt.f32.partialorder %v235, 0.0
    %v239 = vmul.f32 %v235, 0.2
    %v240 = vsel %vm238, %v235, %v239
    %v241 = vld [vmem:[#allocation8] sm:$0xff]
    %v242 = vld [vmem:[#allocation8 + $0x8] sm:$0xff]
    %v243 = vld [vmem:[#allocation8 + $0x10] sm:$0xff]
    %v244 = vld [vmem:[#allocation8 + $0x18] sm:$0xff]
    %v245 = vld [vmem:[#allocation8 + $0x20] sm:$0xff]
    %v246 = vld [vmem:[#allocation8 + $0x28] sm:$0xff]
    %v247 = vld [vmem:[#allocation8 + $0x30] sm:$0xff]
    %v248 = vld [vmem:[#allocation8 + $0x38] sm:$0xff]
    %v249 = vld [vmem:[#allocation8 + $0x40] sm:$0xff]
    %v250 = vld [vmem:[#allocation8 + $0x48] sm:$0xff]
    %v251 = vld [vmem:[#allocation8 + $0x50] sm:$0xff]
    %v252 = vld [vmem:[#allocation8 + $0x58] sm:$0xff]
    %v253 = vld [vmem:[#allocation8 + $0x60] sm:$0xff]
    %v254 = vld [vmem:[#allocation8 + $0x68] sm:$0xff]
    %v255 = vld [vmem:[#allocation8 + $0x70] sm:$0xff]
    %v256 = vld [vmem:[#allocation8 + $0x78] sm:$0xff]
    %v257 = vpack.c.bf16 %v240, %v240
    %v274 = vunpack.c.l.b16 %v241
    %v275 = vunpack.c.h.b16 %v241
    %v276 = vunpack.c.l.b16 %v242
    %v277 = vunpack.c.h.b16 %v242
    %v278 = vunpack.c.l.b16 %v243
    %v279 = vunpack.c.h.b16 %v243
    %v280 = vunpack.c.l.b16 %v244
    %v281 = vunpack.c.h.b16 %v244
    %v282 = vunpack.c.l.b16 %v245
    %v283 = vunpack.c.h.b16 %v245
    %v284 = vunpack.c.l.b16 %v246
    %v285 = vunpack.c.h.b16 %v246
    %v286 = vunpack.c.l.b16 %v247
    %v287 = vunpack.c.h.b16 %v247
    %v288 = vunpack.c.l.b16 %v248
    %v289 = vunpack.c.h.b16 %v248
    %v290 = vunpack.c.l.b16 %v249
    %v291 = vunpack.c.h.b16 %v249
    %v292 = vunpack.c.l.b16 %v250
    %v293 = vunpack.c.h.b16 %v250
    %v294 = vunpack.c.l.b16 %v251
    %v295 = vunpack.c.h.b16 %v251
    %v296 = vunpack.c.l.b16 %v252
    %v297 = vunpack.c.h.b16 %v252
    %v298 = vunpack.c.l.b16 %v253
    %v299 = vunpack.c.h.b16 %v253
    %v300 = vunpack.c.l.b16 %v254
    %v301 = vunpack.c.h.b16 %v254
    %v302 = vunpack.c.l.b16 %v255
    %v303 = vunpack.c.h.b16 %v255
    %v304 = vunpack.c.l.b16 %v256
    %v305 = vunpack.c.h.b16 %v256
    %v306 = vpack.c.b16 %v276, %v274
    %v307 = vpack.c.b16 %v277, %v275
    %v308 = vpack.c.b16 %v280, %v278
    %v309 = vpack.c.b16 %v281, %v279
    %v310 = vpack.c.b16 %v284, %v282
    %v311 = vpack.c.b16 %v285, %v283
    %v312 = vpack.c.b16 %v288, %v286
    %v313 = vpack.c.b16 %v289, %v287
    %v314 = vpack.c.b16 %v292, %v290
    %v315 = vpack.c.b16 %v293, %v291
    %v316 = vpack.c.b16 %v296, %v294
    %v317 = vpack.c.b16 %v297, %v295
    %v318 = vpack.c.b16 %v300, %v298
    %v319 = vpack.c.b16 %v301, %v299
    %v320 = vpack.c.b16 %v304, %v302
    %v321 = vpack.c.b16 %v305, %v303
    %338 = vmatpush.bf16.msra.mxu0 %v320
    %339 = vmatpush.bf16.msra.mxu0 %v318
    %340 = vmatpush.bf16.msra.mxu0 %v316
    %341 = vmatpush.bf16.msra.mxu0 %v314
    %342 = vmatpush.bf16.msra.mxu0 %v312
    %343 = vmatpush.bf16.msra.mxu0 %v310
    %344 = vmatpush.bf16.msra.mxu0 %v308
    %345 = vmatpush.bf16.msra.mxu0 %v306
    %346 = vmatmul.bf16.gmra.mxu0 %v257
    %v347 = vpop.f32.mrf.mxu0
    %v348 = vadd.f32 0.0, %v347
    %v349 = vpop.f32.mrf.mxu0
    %350 = vdwg.mxu0
    %351 = vmatpush.bf16.msra.mxu0 %v321
    %352 = vmatpush.bf16.msra.mxu0 %v319
    %353 = vmatpush.bf16.msra.mxu0 %v317
    %354 = vmatpush.bf16.msra.mxu0 %v315
    %355 = vmatpush.bf16.msra.mxu0 %v313
    %356 = vmatpush.bf16.msra.mxu0 %v311
    %357 = vmatpush.bf16.msra.mxu0 %v309
    %358 = vmatpush.bf16.msra.mxu0 %v307
    %359 = vmatmul.bf16.gmra.mxu0 %v257
    %v360 = vpop.f32.mrf.mxu0
    %v361 = vadd.f32 0.0, %v360
    %v362 = vpop.f32.mrf.mxu0
    %363 = vdwg.mxu0
    %v364 = vmul.f32 %v348, %v120
    %v365 = vmul.f32 %v361, %v120
    %v366 = vrot.slane %v364, 4
    %v367 = vadd.f32 %v364, %v366
    %v368 = vrot.slane %v367, 2
    %v369 = vadd.f32 %v367, %v368
    %v370 = vrot.slane %v369, 1
    %v371 = vadd.f32 %v369, %v370
    %v372 = vrot.slane %v365, 4
    %v373 = vadd.f32 %v365, %v372
    %v374 = vrot.slane %v373, 2
    %v375 = vadd.f32 %v373, %v374
    %v376 = vrot.slane %v375, 1
    %v377 = vadd.f32 %v375, %v376
    %v378 = vmul.f32 %v364, %v348
    %v379 = vmul.f32 %v365, %v361
    %v380 = vrot.slane %v378, 4
    %v381 = vadd.f32 %v378, %v380
    %v382 = vrot.slane %v381, 2
    %v383 = vadd.f32 %v381, %v382
    %v384 = vrot.slane %v383, 1
    %v385 = vadd.f32 %v383, %v384
    %v386 = vrot.slane %v379, 4
    %v387 = vadd.f32 %v379, %v386
    %v388 = vrot.slane %v387, 2
    %v389 = vadd.f32 %v387, %v388
    %v390 = vrot.slane %v389, 1
    %v391 = vadd.f32 %v389, %v390
    %v392 = vstv %s137
    %v393 = vmul.f32 %v371, %v392
    %v394 = vmul.f32 %v377, %v392
    %v395 = vmul.f32 %v385, %v392
    %v396 = vmul.f32 %v391, %v392
    %v397 = vmul.f32 %v393, %v393
    %v398 = vmul.f32 %v394, %v394
    %v399 = vsub.f32 %v395, %v397
    %v400 = vsub.f32 %v396, %v398
    %v401 = vadd.f32 %v399, 1e-05
    %v402 = vadd.f32 %v400, 1e-05
    %v403 = vrsqrt.pop %v401
    %v404 = vmul.f32 %v403, %v401
    %v405 = vmul.f32 %v404, %v403
    %v406 = vmul.f32 0.5, %v405
    %v407 = vsub.f32 1.5, %v406
    %v408 = vmul.f32 %v403, %v407
    %vm409 = vweird.f32 %v401
    %vm410 = vweird.f32 %v403
    %vm411 = vmor %vm409, %vm410
    %v412 = vsel %vm411, %v403, %v408
    %v413 = vrsqrt.pop %v402
    %v414 = vmul.f32 %v413, %v402
    %v415 = vmul.f32 %v414, %v413
    %v416 = vmul.f32 0.5, %v415
    %v417 = vsub.f32 1.5, %v416
    %v418 = vmul.f32 %v413, %v417
    %vm419 = vweird.f32 %v402
    %vm420 = vweird.f32 %v413
    %vm421 = vmor %vm419, %vm420
    %v422 = vsel %vm421, %v413, %v418
    %v425 = vrot.slane %v422, 7
    %vm426 = vcmask 1040384
    %v427 = vsel %vm426, %v412, %v425
    %v429 = vmul.f32 %v140, %v427
    %v431 = vperm.slane %v429, 0
    %v432 = vperm.slane %v429, 1
    %v435 = vmul.f32 %v393, %v431
    %v436 = vmul.f32 %v394, %v432
    %v439 = vrot.slane %v436, 7
    %v440 = vsel %vm426, %v435, %v439
    %v442 = vsub.f32 %v142, %v440
    %v443 = vmul.f32 %v348, %v431
    %v444 = vmul.f32 %v361, %v432
    %v446 = vperm.slane %v442, 0
    %v447 = vperm.slane %v442, 1
    %v450 = vadd.f32 %v443, %v446
    %v451 = vadd.f32 %v444, %v447
    %vm452 = vcmp.gt.f32.partialorder %v450, 0.0
    %vm453 = vcmp.gt.f32.partialorder %v451, 0.0
    %v454 = vmul.f32 %v450, 0.2
    %v455 = vmul.f32 %v451, 0.2
    %v456 = vsel %vm452, %v450, %v454
    %v457 = vsel %vm453, %v451, %v455
    %v458 = vld [vmem:[#allocation10] sm:$0xff]
    %v459 = vld [vmem:[#allocation10 + $0x8] sm:$0xff]
    %v460 = vld [vmem:[#allocation10 + $0x10] sm:$0xff]
    %v461 = vld [vmem:[#allocation10 + $0x18] sm:$0xff]
    %v462 = vld [vmem:[#allocation10 + $0x20] sm:$0xff]
    %v463 = vld [vmem:[#allocation10 + $0x28] sm:$0xff]
    %v464 = vld [vmem:[#allocation10 + $0x30] sm:$0xff]
    %v465 = vld [vmem:[#allocation10 + $0x38] sm:$0xff]
    %v466 = vld [vmem:[#allocation10 + $0x40] sm:$0xff]
    %v467 = vld [vmem:[#allocation10 + $0x48] sm:$0xff]
    %v468 = vld [vmem:[#allocation10 + $0x50] sm:$0xff]
    %v469 = vld [vmem:[#allocation10 + $0x58] sm:$0xff]
    %v470 = vld [vmem:[#allocation10 + $0x60] sm:$0xff]
    %v471 = vld [vmem:[#allocation10 + $0x68] sm:$0xff]
    %v472 = vld [vmem:[#allocation10 + $0x70] sm:$0xff]
    %v473 = vld [vmem:[#allocation10 + $0x78] sm:$0xff]
    %v474 = vld [vmem:[#allocation10 + $0x80] sm:$0xff]
    %v475 = vld [vmem:[#allocation10 + $0x88] sm:$0xff]
    %v476 = vld [vmem:[#allocation10 + $0x90] sm:$0xff]
    %v477 = vld [vmem:[#allocation10 + $0x98] sm:$0xff]
    %v478 = vld [vmem:[#allocation10 + $0xa0] sm:$0xff]
    %v479 = vld [vmem:[#allocation10 + $0xa8] sm:$0xff]
    %v480 = vld [vmem:[#allocation10 + $0xb0] sm:$0xff]
    %v481 = vld [vmem:[#allocation10 + $0xb8] sm:$0xff]
    %v482 = vld [vmem:[#allocation10 + $0xc0] sm:$0xff]
    %v483 = vld [vmem:[#allocation10 + $0xc8] sm:$0xff]
    %v484 = vld [vmem:[#allocation10 + $0xd0] sm:$0xff]
    %v485 = vld [vmem:[#allocation10 + $0xd8] sm:$0xff]
    %v486 = vld [vmem:[#allocation10 + $0xe0] sm:$0xff]
    %v487 = vld [vmem:[#allocation10 + $0xe8] sm:$0xff]
    %v488 = vld [vmem:[#allocation10 + $0xf0] sm:$0xff]
    %v489 = vld [vmem:[#allocation10 + $0xf8] sm:$0xff]
    %v490 = vld [vmem:[#allocation10 + $0x100] sm:$0xff]
    %v491 = vld [vmem:[#allocation10 + $0x108] sm:$0xff]
    %v492 = vld [vmem:[#allocation10 + $0x110] sm:$0xff]
    %v493 = vld [vmem:[#allocation10 + $0x118] sm:$0xff]
    %v494 = vld [vmem:[#allocation10 + $0x120] sm:$0xff]
    %v495 = vld [vmem:[#allocation10 + $0x128] sm:$0xff]
    %v496 = vld [vmem:[#allocation10 + $0x130] sm:$0xff]
    %v497 = vld [vmem:[#allocation10 + $0x138] sm:$0xff]
    %v498 = vld [vmem:[#allocation10 + $0x140] sm:$0xff]
    %v499 = vld [vmem:[#allocation10 + $0x148] sm:$0xff]
    %v500 = vld [vmem:[#allocation10 + $0x150] sm:$0xff]
    %v501 = vld [vmem:[#allocation10 + $0x158] sm:$0xff]
    %v502 = vld [vmem:[#allocation10 + $0x160] sm:$0xff]
    %v503 = vld [vmem:[#allocation10 + $0x168] sm:$0xff]
    %v504 = vld [vmem:[#allocation10 + $0x170] sm:$0xff]
    %v505 = vld [vmem:[#allocation10 + $0x178] sm:$0xff]
    %v506 = vld [vmem:[#allocation10 + $0x180] sm:$0xff]
    %v507 = vld [vmem:[#allocation10 + $0x188] sm:$0xff]
    %v508 = vld [vmem:[#allocation10 + $0x190] sm:$0xff]
    %v509 = vld [vmem:[#allocation10 + $0x198] sm:$0xff]
    %v510 = vld [vmem:[#allocation10 + $0x1a0] sm:$0xff]
    %v511 = vld [vmem:[#allocation10 + $0x1a8] sm:$0xff]
    %v512 = vld [vmem:[#allocation10 + $0x1b0] sm:$0xff]
    %v513 = vld [vmem:[#allocation10 + $0x1b8] sm:$0xff]
    %v514 = vld [vmem:[#allocation10 + $0x1c0] sm:$0xff]
    %v515 = vld [vmem:[#allocation10 + $0x1c8] sm:$0xff]
    %v516 = vld [vmem:[#allocation10 + $0x1d0] sm:$0xff]
    %v517 = vld [vmem:[#allocation10 + $0x1d8] sm:$0xff]
    %v518 = vld [vmem:[#allocation10 + $0x1e0] sm:$0xff]
    %v519 = vld [vmem:[#allocation10 + $0x1e8] sm:$0xff]
    %v520 = vld [vmem:[#allocation10 + $0x1f0] sm:$0xff]
    %v521 = vld [vmem:[#allocation10 + $0x1f8] sm:$0xff]
    %v522 = vpack.c.bf16 %v456, %v456
    %v523 = vpack.c.bf16 %v457, %v457
    %v588 = vunpack.c.l.b16 %v458
    %v589 = vunpack.c.h.b16 %v458
    %v590 = vunpack.c.l.b16 %v459
    %v591 = vunpack.c.h.b16 %v459
    %v592 = vunpack.c.l.b16 %v460
    %v593 = vunpack.c.h.b16 %v460
    %v594 = vunpack.c.l.b16 %v461
    %v595 = vunpack.c.h.b16 %v461
    %v596 = vunpack.c.l.b16 %v462
    %v597 = vunpack.c.h.b16 %v462
    %v598 = vunpack.c.l.b16 %v463
    %v599 = vunpack.c.h.b16 %v463
    %v600 = vunpack.c.l.b16 %v464
    %v601 = vunpack.c.h.b16 %v464
    %v602 = vunpack.c.l.b16 %v465
    %v603 = vunpack.c.h.b16 %v465
    %v604 = vunpack.c.l.b16 %v466
    %v605 = vunpack.c.h.b16 %v466
    %v606 = vunpack.c.l.b16 %v467
    %v607 = vunpack.c.h.b16 %v467
    %v608 = vunpack.c.l.b16 %v468
    %v609 = vunpack.c.h.b16 %v468
    %v610 = vunpack.c.l.b16 %v469
    %v611 = vunpack.c.h.b16 %v469
    %v612 = vunpack.c.l.b16 %v470
    %v613 = vunpack.c.h.b16 %v470
    %v614 = vunpack.c.l.b16 %v471
    %v615 = vunpack.c.h.b16 %v471
    %v616 = vunpack.c.l.b16 %v472
    %v617 = vunpack.c.h.b16 %v472
    %v618 = vunpack.c.l.b16 %v473
    %v619 = vunpack.c.h.b16 %v473
    %v620 = vunpack.c.l.b16 %v474
    %v621 = vunpack.c.h.b16 %v474
    %v622 = vunpack.c.l.b16 %v475
    %v623 = vunpack.c.h.b16 %v475
    %v624 = vunpack.c.l.b16 %v476
    %v625 = vunpack.c.h.b16 %v476
    %v626 = vunpack.c.l.b16 %v477
    %v627 = vunpack.c.h.b16 %v477
    %v628 = vunpack.c.l.b16 %v478
    %v629 = vunpack.c.h.b16 %v478
    %v630 = vunpack.c.l.b16 %v479
    %v631 = vunpack.c.h.b16 %v479
    %v632 = vunpack.c.l.b16 %v480
    %v633 = vunpack.c.h.b16 %v480
    %v634 = vunpack.c.l.b16 %v481
    %v635 = vunpack.c.h.b16 %v481
    %v636 = vunpack.c.l.b16 %v482
    %v637 = vunpack.c.h.b16 %v482
    %v638 = vunpack.c.l.b16 %v483
    %v639 = vunpack.c.h.b16 %v483
    %v640 = vunpack.c.l.b16 %v484
    %v641 = vunpack.c.h.b16 %v484
    %v642 = vunpack.c.l.b16 %v485
    %v643 = vunpack.c.h.b16 %v485
    %v644 = vunpack.c.l.b16 %v486
    %v645 = vunpack.c.h.b16 %v486
    %v646 = vunpack.c.l.b16 %v487
    %v647 = vunpack.c.h.b16 %v487
    %v648 = vunpack.c.l.b16 %v488
    %v649 = vunpack.c.h.b16 %v488
    %v650 = vunpack.c.l.b16 %v489
    %v651 = vunpack.c.h.b16 %v489
    %v652 = vunpack.c.l.b16 %v490
    %v653 = vunpack.c.h.b16 %v490
    %v654 = vunpack.c.l.b16 %v491
    %v655 = vunpack.c.h.b16 %v491
    %v656 = vunpack.c.l.b16 %v492
    %v657 = vunpack.c.h.b16 %v492
    %v658 = vunpack.c.l.b16 %v493
    %v659 = vunpack.c.h.b16 %v493
    %v660 = vunpack.c.l.b16 %v494
    %v661 = vunpack.c.h.b16 %v494
    %v662 = vunpack.c.l.b16 %v495
    %v663 = vunpack.c.h.b16 %v495
    %v664 = vunpack.c.l.b16 %v496
    %v665 = vunpack.c.h.b16 %v496
    %v666 = vunpack.c.l.b16 %v497
    %v667 = vunpack.c.h.b16 %v497
    %v668 = vunpack.c.l.b16 %v498
    %v669 = vunpack.c.h.b16 %v498
    %v670 = vunpack.c.l.b16 %v499
    %v671 = vunpack.c.h.b16 %v499
    %v672 = vunpack.c.l.b16 %v500
    %v673 = vunpack.c.h.b16 %v500
    %v674 = vunpack.c.l.b16 %v501
    %v675 = vunpack.c.h.b16 %v501
    %v676 = vunpack.c.l.b16 %v502
    %v677 = vunpack.c.h.b16 %v502
    %v678 = vunpack.c.l.b16 %v503
    %v679 = vunpack.c.h.b16 %v503
    %v680 = vunpack.c.l.b16 %v504
    %v681 = vunpack.c.h.b16 %v504
    %v682 = vunpack.c.l.b16 %v505
    %v683 = vunpack.c.h.b16 %v505
    %v684 = vunpack.c.l.b16 %v506
    %v685 = vunpack.c.h.b16 %v506
    %v686 = vunpack.c.l.b16 %v507
    %v687 = vunpack.c.h.b16 %v507
    %v688 = vunpack.c.l.b16 %v508
    %v689 = vunpack.c.h.b16 %v508
    %v690 = vunpack.c.l.b16 %v509
    %v691 = vunpack.c.h.b16 %v509
    %v692 = vunpack.c.l.b16 %v510
    %v693 = vunpack.c.h.b16 %v510
    %v694 = vunpack.c.l.b16 %v511
    %v695 = vunpack.c.h.b16 %v511
    %v696 = vunpack.c.l.b16 %v512
    %v697 = vunpack.c.h.b16 %v512
    %v698 = vunpack.c.l.b16 %v513
    %v699 = vunpack.c.h.b16 %v513
    %v700 = vunpack.c.l.b16 %v514
    %v701 = vunpack.c.h.b16 %v514
    %v702 = vunpack.c.l.b16 %v515
    %v703 = vunpack.c.h.b16 %v515
    %v704 = vunpack.c.l.b16 %v516
    %v705 = vunpack.c.h.b16 %v516
    %v706 = vunpack.c.l.b16 %v517
    %v707 = vunpack.c.h.b16 %v517
    %v708 = vunpack.c.l.b16 %v518
    %v709 = vunpack.c.h.b16 %v518
    %v710 = vunpack.c.l.b16 %v519
    %v711 = vunpack.c.h.b16 %v519
    %v712 = vunpack.c.l.b16 %v520
    %v713 = vunpack.c.h.b16 %v520
    %v714 = vunpack.c.l.b16 %v521
    %v715 = vunpack.c.h.b16 %v521
    %v716 = vpack.c.b16 %v592, %v588
    %v717 = vpack.c.b16 %v593, %v589
    %v718 = vpack.c.b16 %v594, %v590
    %v719 = vpack.c.b16 %v595, %v591
    %v720 = vpack.c.b16 %v600, %v596
    %v721 = vpack.c.b16 %v601, %v597
    %v722 = vpack.c.b16 %v602, %v598
    %v723 = vpack.c.b16 %v603, %v599
    %v724 = vpack.c.b16 %v608, %v604
    %v725 = vpack.c.b16 %v609, %v605
    %v726 = vpack.c.b16 %v610, %v606
    %v727 = vpack.c.b16 %v611, %v607
    %v728 = vpack.c.b16 %v616, %v612
    %v729 = vpack.c.b16 %v617, %v613
    %v730 = vpack.c.b16 %v618, %v614
    %v731 = vpack.c.b16 %v619, %v615
    %v732 = vpack.c.b16 %v624, %v620
    %v733 = vpack.c.b16 %v625, %v621
    %v734 = vpack.c.b16 %v626, %v622
    %v735 = vpack.c.b16 %v627, %v623
    %v736 = vpack.c.b16 %v632, %v628
    %v737 = vpack.c.b16 %v633, %v629
    %v738 = vpack.c.b16 %v634, %v630
    %v739 = vpack.c.b16 %v635, %v631
    %v740 = vpack.c.b16 %v640, %v636
    %v741 = vpack.c.b16 %v641, %v637
    %v742 = vpack.c.b16 %v642, %v638
    %v743 = vpack.c.b16 %v643, %v639
    %v744 = vpack.c.b16 %v648, %v644
    %v745 = vpack.c.b16 %v649, %v645
    %v746 = vpack.c.b16 %v650, %v646
    %v747 = vpack.c.b16 %v651, %v647
    %v748 = vpack.c.b16 %v656, %v652
    %v749 = vpack.c.b16 %v657, %v653
    %v750 = vpack.c.b16 %v658, %v654
    %v751 = vpack.c.b16 %v659, %v655
    %v752 = vpack.c.b16 %v664, %v660
    %v753 = vpack.c.b16 %v665, %v661
    %v754 = vpack.c.b16 %v666, %v662
    %v755 = vpack.c.b16 %v667, %v663
    %v756 = vpack.c.b16 %v672, %v668
    %v757 = vpack.c.b16 %v673, %v669
    %v758 = vpack.c.b16 %v674, %v670
    %v759 = vpack.c.b16 %v675, %v671
    %v760 = vpack.c.b16 %v680, %v676
    %v761 = vpack.c.b16 %v681, %v677
    %v762 = vpack.c.b16 %v682, %v678
    %v763 = vpack.c.b16 %v683, %v679
    %v764 = vpack.c.b16 %v688, %v684
    %v765 = vpack.c.b16 %v689, %v685
    %v766 = vpack.c.b16 %v690, %v686
    %v767 = vpack.c.b16 %v691, %v687
    %v768 = vpack.c.b16 %v696, %v692
    %v769 = vpack.c.b16 %v697, %v693
    %v770 = vpack.c.b16 %v698, %v694
    %v771 = vpack.c.b16 %v699, %v695
    %v772 = vpack.c.b16 %v704, %v700
    %v773 = vpack.c.b16 %v705, %v701
    %v774 = vpack.c.b16 %v706, %v702
    %v775 = vpack.c.b16 %v707, %v703
    %v776 = vpack.c.b16 %v712, %v708
    %v777 = vpack.c.b16 %v713, %v709
    %v778 = vpack.c.b16 %v714, %v710
    %v779 = vpack.c.b16 %v715, %v711
    %844 = vmatpush.bf16.msra.mxu0 %v744
    %845 = vmatpush.bf16.msra.mxu0 %v740
    %846 = vmatpush.bf16.msra.mxu0 %v736
    %847 = vmatpush.bf16.msra.mxu0 %v732
    %848 = vmatpush.bf16.msra.mxu0 %v728
    %849 = vmatpush.bf16.msra.mxu0 %v724
    %850 = vmatpush.bf16.msra.mxu0 %v720
    %851 = vmatpush.bf16.msra.mxu0 %v716
    %852 = vmatmul.bf16.gmra.mxu0 %v522
    %v853 = vpop.f32.mrf.mxu0
    %v854 = vadd.f32 0.0, %v853
    %v855 = vpop.f32.mrf.mxu0
    %856 = vdwg.mxu0
    %857 = vmatpush.bf16.msra.mxu0 %v776
    %858 = vmatpush.bf16.msra.mxu0 %v772
    %859 = vmatpush.bf16.msra.mxu0 %v768
    %860 = vmatpush.bf16.msra.mxu0 %v764
    %861 = vmatpush.bf16.msra.mxu0 %v760
    %862 = vmatpush.bf16.msra.mxu0 %v756
    %863 = vmatpush.bf16.msra.mxu0 %v752
    %864 = vmatpush.bf16.msra.mxu0 %v748
    %865 = vmatmul.bf16.gmra.mxu0 %v523
    %v866 = vpop.f32.mrf.mxu0
    %v867 = vadd.f32 %v854, %v866
    %v868 = vpop.f32.mrf.mxu0
    %869 = vdwg.mxu0
    %870 = vmatpush.bf16.msra.mxu0 %v745
    %871 = vmatpush.bf16.msra.mxu0 %v741
    %872 = vmatpush.bf16.msra.mxu0 %v737
    %873 = vmatpush.bf16.msra.mxu0 %v733
    %874 = vmatpush.bf16.msra.mxu0 %v729
    %875 = vmatpush.bf16.msra.mxu0 %v725
    %876 = vmatpush.bf16.msra.mxu0 %v721
    %877 = vmatpush.bf16.msra.mxu0 %v717
    %878 = vmatmul.bf16.gmra.mxu0 %v522
    %v879 = vpop.f32.mrf.mxu0
    %v880 = vadd.f32 0.0, %v879
    %v881 = vpop.f32.mrf.mxu0
    %882 = vdwg.mxu0
    %883 = vmatpush.bf16.msra.mxu0 %v777
    %884 = vmatpush.bf16.msra.mxu0 %v773
    %885 = vmatpush.bf16.msra.mxu0 %v769
    %886 = vmatpush.bf16.msra.mxu0 %v765
    %887 = vmatpush.bf16.msra.mxu0 %v761
    %888 = vmatpush.bf16.msra.mxu0 %v757
    %889 = vmatpush.bf16.msra.mxu0 %v753
    %890 = vmatpush.bf16.msra.mxu0 %v749
    %891 = vmatmul.bf16.gmra.mxu0 %v523
    %v892 = vpop.f32.mrf.mxu0
    %v893 = vadd.f32 %v880, %v892
    %v894 = vpop.f32.mrf.mxu0
    %895 = vdwg.mxu0
    %896 = vmatpush.bf16.msra.mxu0 %v746
    %897 = vmatpush.bf16.msra.mxu0 %v742
    %898 = vmatpush.bf16.msra.mxu0 %v738
    %899 = vmatpush.bf16.msra.mxu0 %v734
    %900 = vmatpush.bf16.msra.mxu0 %v730
    %901 = vmatpush.bf16.msra.mxu0 %v726
    %902 = vmatpush.bf16.msra.mxu0 %v722
    %903 = vmatpush.bf16.msra.mxu0 %v718
    %904 = vmatmul.bf16.gmra.mxu0 %v522
    %v905 = vpop.f32.mrf.mxu0
    %v906 = vadd.f32 0.0, %v905
    %v907 = vpop.f32.mrf.mxu0
    %908 = vdwg.mxu0
    %909 = vmatpush.bf16.msra.mxu0 %v778
    %910 = vmatpush.bf16.msra.mxu0 %v774
    %911 = vmatpush.bf16.msra.mxu0 %v770
    %912 = vmatpush.bf16.msra.mxu0 %v766
    %913 = vmatpush.bf16.msra.mxu0 %v762
    %914 = vmatpush.bf16.msra.mxu0 %v758
    %915 = vmatpush.bf16.msra.mxu0 %v754
    %916 = vmatpush.bf16.msra.mxu0 %v750
    %917 = vmatmul.bf16.gmra.mxu0 %v523
    %v918 = vpop.f32.mrf.mxu0
    %v919 = vadd.f32 %v906, %v918
    %v920 = vpop.f32.mrf.mxu0
    %921 = vdwg.mxu0
    %922 = vmatpush.bf16.msra.mxu0 %v747
    %923 = vmatpush.bf16.msra.mxu0 %v743
    %924 = vmatpush.bf16.msra.mxu0 %v739
    %925 = vmatpush.bf16.msra.mxu0 %v735
    %926 = vmatpush.bf16.msra.mxu0 %v731
    %927 = vmatpush.bf16.msra.mxu0 %v727
    %928 = vmatpush.bf16.msra.mxu0 %v723
    %929 = vmatpush.bf16.msra.mxu0 %v719
    %930 = vmatmul.bf16.gmra.mxu0 %v522
    %v931 = vpop.f32.mrf.mxu0
    %v932 = vadd.f32 0.0, %v931
    %v933 = vpop.f32.mrf.mxu0
    %934 = vdwg.mxu0
    %935 = vmatpush.bf16.msra.mxu0 %v779
    %936 = vmatpush.bf16.msra.mxu0 %v775
    %937 = vmatpush.bf16.msra.mxu0 %v771
    %938 = vmatpush.bf16.msra.mxu0 %v767
    %939 = vmatpush.bf16.msra.mxu0 %v763
    %940 = vmatpush.bf16.msra.mxu0 %v759
    %941 = vmatpush.bf16.msra.mxu0 %v755
    %942 = vmatpush.bf16.msra.mxu0 %v751
    %943 = vmatmul.bf16.gmra.mxu0 %v523
    %v944 = vpop.f32.mrf.mxu0
    %v945 = vadd.f32 %v932, %v944
    %v946 = vpop.f32.mrf.mxu0
    %947 = vdwg.mxu0
    %v948 = vmul.f32 %v867, %v120
    %v949 = vmul.f32 %v893, %v120
    %v950 = vmul.f32 %v919, %v120
    %v951 = vmul.f32 %v945, %v120
    %v952 = vrot.slane %v948, 4
    %v953 = vadd.f32 %v948, %v952
    %v954 = vrot.slane %v953, 2
    %v955 = vadd.f32 %v953, %v954
    %v956 = vrot.slane %v955, 1
    %v957 = vadd.f32 %v955, %v956
    %v958 = vrot.slane %v949, 4
    %v959 = vadd.f32 %v949, %v958
    %v960 = vrot.slane %v959, 2
    %v961 = vadd.f32 %v959, %v960
    %v962 = vrot.slane %v961, 1
    %v963 = vadd.f32 %v961, %v962
    %v964 = vrot.slane %v950, 4
    %v965 = vadd.f32 %v950, %v964
    %v966 = vrot.slane %v965, 2
    %v967 = vadd.f32 %v965, %v966
    %v968 = vrot.slane %v967, 1
    %v969 = vadd.f32 %v967, %v968
    %v970 = vrot.slane %v951, 4
    %v971 = vadd.f32 %v951, %v970
    %v972 = vrot.slane %v971, 2
    %v973 = vadd.f32 %v971, %v972
    %v974 = vrot.slane %v973, 1
    %v975 = vadd.f32 %v973, %v974
    %v976 = vmul.f32 %v948, %v867
    %v977 = vmul.f32 %v949, %v893
    %v978 = vmul.f32 %v950, %v919
    %v979 = vmul.f32 %v951, %v945
    %v980 = vrot.slane %v976, 4
    %v981 = vadd.f32 %v976, %v980
    %v982 = vrot.slane %v981, 2
    %v983 = vadd.f32 %v981, %v982
    %v984 = vrot.slane %v983, 1
    %v985 = vadd.f32 %v983, %v984
    %v986 = vrot.slane %v977, 4
    %v987 = vadd.f32 %v977, %v986
    %v988 = vrot.slane %v987, 2
    %v989 = vadd.f32 %v987, %v988
    %v990 = vrot.slane %v989, 1
    %v991 = vadd.f32 %v989, %v990
    %v992 = vrot.slane %v978, 4
    %v993 = vadd.f32 %v978, %v992
    %v994 = vrot.slane %v993, 2
    %v995 = vadd.f32 %v993, %v994
    %v996 = vrot.slane %v995, 1
    %v997 = vadd.f32 %v995, %v996
    %v998 = vrot.slane %v979, 4
    %v999 = vadd.f32 %v979, %v998
    %v1000 = vrot.slane %v999, 2
    %v1001 = vadd.f32 %v999, %v1000
    %v1002 = vrot.slane %v1001, 1
    %v1003 = vadd.f32 %v1001, %v1002
    %v1004 = vmul.f32 %v957, %v392
    %v1005 = vmul.f32 %v963, %v392
    %v1006 = vmul.f32 %v969, %v392
    %v1007 = vmul.f32 %v975, %v392
    %v1008 = vmul.f32 %v985, %v392
    %v1009 = vmul.f32 %v991, %v392
    %v1010 = vmul.f32 %v997, %v392
    %v1011 = vmul.f32 %v1003, %v392
    %v1012 = vmul.f32 %v1004, %v1004
    %v1013 = vmul.f32 %v1005, %v1005
    %v1014 = vmul.f32 %v1006, %v1006
    %v1015 = vmul.f32 %v1007, %v1007
    %v1016 = vsub.f32 %v1008, %v1012
    %v1017 = vsub.f32 %v1009, %v1013
    %v1018 = vsub.f32 %v1010, %v1014
    %v1019 = vsub.f32 %v1011, %v1015
    %v1020 = vadd.f32 %v1016, 1e-05
    %v1021 = vadd.f32 %v1017, 1e-05
    %v1022 = vadd.f32 %v1018, 1e-05
    %v1023 = vadd.f32 %v1019, 1e-05
    %v1024 = vrsqrt.pop %v1020
    %v1025 = vmul.f32 %v1024, %v1020
    %v1026 = vmul.f32 %v1025, %v1024
    %v1027 = vmul.f32 0.5, %v1026
    %v1028 = vsub.f32 1.5, %v1027
    %v1029 = vmul.f32 %v1024, %v1028
    %vm1030 = vweird.f32 %v1020
    %vm1031 = vweird.f32 %v1024
    %vm1032 = vmor %vm1030, %vm1031
    %v1033 = vsel %vm1032, %v1024, %v1029
    %v1034 = vrsqrt.pop %v1021
    %v1035 = vmul.f32 %v1034, %v1021
    %v1036 = vmul.f32 %v1035, %v1034
    %v1037 = vmul.f32 0.5, %v1036
    %v1038 = vsub.f32 1.5, %v1037
    %v1039 = vmul.f32 %v1034, %v1038
    %vm1040 = vweird.f32 %v1021
    %vm1041 = vweird.f32 %v1034
    %vm1042 = vmor %vm1040, %vm1041
    %v1043 = vsel %vm1042, %v1034, %v1039
    %v1044 = vrsqrt.pop %v1022
    %v1045 = vmul.f32 %v1044, %v1022
    %v1046 = vmul.f32 %v1045, %v1044
    %v1047 = vmul.f32 0.5, %v1046
    %v1048 = vsub.f32 1.5, %v1047
    %v1049 = vmul.f32 %v1044, %v1048
    %vm1050 = vweird.f32 %v1022
    %vm1051 = vweird.f32 %v1044
    %vm1052 = vmor %vm1050, %vm1051
    %v1053 = vsel %vm1052, %v1044, %v1049
    %v1054 = vrsqrt.pop %v1023
    %v1055 = vmul.f32 %v1054, %v1023
    %v1056 = vmul.f32 %v1055, %v1054
    %v1057 = vmul.f32 0.5, %v1056
    %v1058 = vsub.f32 1.5, %v1057
    %v1059 = vmul.f32 %v1054, %v1058
    %vm1060 = vweird.f32 %v1023
    %vm1061 = vweird.f32 %v1054
    %vm1062 = vmor %vm1060, %vm1061
    %v1063 = vsel %vm1062, %v1054, %v1059
    %v1068 = vrot.slane %v1043, 7
    %v1069 = vrot.slane %v1053, 6
    %v1070 = vrot.slane %v1063, 5
    %v1071 = vsel %vm426, %v1033, %v1068
    %vm1072 = vcmask 1042434
    %v1073 = vsel %vm1072, %v1069, %v1070
    %vm1074 = vcmask 1041408
    %v1075 = vsel %vm1074, %v1071, %v1073
    %v1077 = vmul.f32 %v144, %v1075
    %v1079 = vperm.slane %v1077, 0
    %v1080 = vperm.slane %v1077, 1
    %v1081 = vperm.slane %v1077, 2
    %v1082 = vperm.slane %v1077, 3
    %v1087 = vmul.f32 %v1004, %v1079
    %v1088 = vmul.f32 %v1005, %v1080
    %v1089 = vmul.f32 %v1006, %v1081
    %v1090 = vmul.f32 %v1007, %v1082
    %v1095 = vrot.slane %v1088, 7
    %v1096 = vrot.slane %v1089, 6
    %v1097 = vrot.slane %v1090, 5
    %v1098 = vsel %vm426, %v1087, %v1095
    %v1099 = vsel %vm1072, %v1096, %v1097
    %v1100 = vsel %vm1074, %v1098, %v1099
    %v1102 = vsub.f32 %v146, %v1100
    %v1103 = vmul.f32 %v867, %v1079
    %v1104 = vmul.f32 %v893, %v1080
    %v1105 = vmul.f32 %v919, %v1081
    %v1106 = vmul.f32 %v945, %v1082
    %v1108 = vperm.slane %v1102, 0
    %v1109 = vperm.slane %v1102, 1
    %v1110 = vperm.slane %v1102, 2
    %v1111 = vperm.slane %v1102, 3
    %v1116 = vadd.f32 %v1103, %v1108
    %v1117 = vadd.f32 %v1104, %v1109
    %v1118 = vadd.f32 %v1105, %v1110
    %v1119 = vadd.f32 %v1106, %v1111
    %vm1120 = vcmp.gt.f32.partialorder %v1116, 0.0
    %vm1121 = vcmp.gt.f32.partialorder %v1117, 0.0
    %vm1122 = vcmp.gt.f32.partialorder %v1118, 0.0
    %vm1123 = vcmp.gt.f32.partialorder %v1119, 0.0
    %v1124 = vmul.f32 %v1116, 0.2
    %v1125 = vmul.f32 %v1117, 0.2
    %v1126 = vmul.f32 %v1118, 0.2
    %v1127 = vmul.f32 %v1119, 0.2
    %v1128 = vsel %vm1120, %v1116, %v1124
    %v1129 = vsel %vm1121, %v1117, %v1125
    %v1130 = vsel %vm1122, %v1118, %v1126
    %v1131 = vsel %vm1123, %v1119, %v1127
    %s1132 = smul.u32 4, 64
    %s1133 = smul.u32 %s1132, 8
    %s1134 = sshll.u32 %s1133, 4
    %1135 = dma.done [#allocation4], %s1134
    %v1136 = vld [vmem:[#allocation2] sm:$0xff]
    %v1137 = vld [vmem:[#allocation2 + $0x8] sm:$0xff]
    %v1138 = vld [vmem:[#allocation2 + $0x10] sm:$0xff]
    %v1139 = vld [vmem:[#allocation2 + $0x18] sm:$0xff]
    %v1140 = vld [vmem:[#allocation2 + $0x20] sm:$0xff]
    %v1141 = vld [vmem:[#allocation2 + $0x28] sm:$0xff]
    %v1142 = vld [vmem:[#allocation2 + $0x30] sm:$0xff]
    %v1143 = vld [vmem:[#allocation2 + $0x38] sm:$0xff]
    %v1144 = vld [vmem:[#allocation2 + $0x40] sm:$0xff]
    %v1145 = vld [vmem:[#allocation2 + $0x48] sm:$0xff]
    %v1146 = vld [vmem:[#allocation2 + $0x50] sm:$0xff]
    %v1147 = vld [vmem:[#allocation2 + $0x58] sm:$0xff]
    %v1148 = vld [vmem:[#allocation2 + $0x60] sm:$0xff]
    %v1149 = vld [vmem:[#allocation2 + $0x68] sm:$0xff]
    %v1150 = vld [vmem:[#allocation2 + $0x70] sm:$0xff]
    %v1151 = vld [vmem:[#allocation2 + $0x78] sm:$0xff]
    %v1152 = vld [vmem:[#allocation2 + $0x80] sm:$0xff]
    %v1153 = vld [vmem:[#allocation2 + $0x88] sm:$0xff]
    %v1154 = vld [vmem:[#allocation2 + $0x90] sm:$0xff]
    %v1155 = vld [vmem:[#allocation2 + $0x98] sm:$0xff]
    %v1156 = vld [vmem:[#allocation2 + $0xa0] sm:$0xff]
    %v1157 = vld [vmem:[#allocation2 + $0xa8] sm:$0xff]
    %v1158 = vld [vmem:[#allocation2 + $0xb0] sm:$0xff]
    %v1159 = vld [vmem:[#allocation2 + $0xb8] sm:$0xff]
    %v1160 = vld [vmem:[#allocation2 + $0xc0] sm:$0xff]
    %v1161 = vld [vmem:[#allocation2 + $0xc8] sm:$0xff]
    %v1162 = vld [vmem:[#allocation2 + $0xd0] sm:$0xff]
    %v1163 = vld [vmem:[#allocation2 + $0xd8] sm:$0xff]
    %v1164 = vld [vmem:[#allocation2 + $0xe0] sm:$0xff]
    %v1165 = vld [vmem:[#allocation2 + $0xe8] sm:$0xff]
    %v1166 = vld [vmem:[#allocation2 + $0xf0] sm:$0xff]
    %v1167 = vld [vmem:[#allocation2 + $0xf8] sm:$0xff]
    %v1168 = vld [vmem:[#allocation2 + $0x100] sm:$0xff]
    %v1169 = vld [vmem:[#allocation2 + $0x108] sm:$0xff]
    %v1170 = vld [vmem:[#allocation2 + $0x110] sm:$0xff]
    %v1171 = vld [vmem:[#allocation2 + $0x118] sm:$0xff]
    %v1172 = vld [vmem:[#allocation2 + $0x120] sm:$0xff]
    %v1173 = vld [vmem:[#allocation2 + $0x128] sm:$0xff]
    %v1174 = vld [vmem:[#allocation2 + $0x130] sm:$0xff]
    %v1175 = vld [vmem:[#allocation2 + $0x138] sm:$0xff]
    %v1176 = vld [vmem:[#allocation2 + $0x140] sm:$0xff]
    %v1177 = vld [vmem:[#allocation2 + $0x148] sm:$0xff]
    %v1178 = vld [vmem:[#allocation2 + $0x150] sm:$0xff]
    %v1179 = vld [vmem:[#allocation2 + $0x158] sm:$0xff]
    %v1180 = vld [vmem:[#allocation2 + $0x160] sm:$0xff]
    %v1181 = vld [vmem:[#allocation2 + $0x168] sm:$0xff]
    %v1182 = vld [vmem:[#allocation2 + $0x170] sm:$0xff]
    %v1183 = vld [vmem:[#allocation2 + $0x178] sm:$0xff]
    %v1184 = vld [vmem:[#allocation2 + $0x180] sm:$0xff]
    %v1185 = vld [vmem:[#allocation2 + $0x188] sm:$0xff]
    %v1186 = vld [vmem:[#allocation2 + $0x190] sm:$0xff]
    %v1187 = vld [vmem:[#allocation2 + $0x198] sm:$0xff]
    %v1188 = vld [vmem:[#allocation2 + $0x1a0] sm:$0xff]
    %v1189 = vld [vmem:[#allocation2 + $0x1a8] sm:$0xff]
    %v1190 = vld [vmem:[#allocation2 + $0x1b0] sm:$0xff]
    %v1191 = vld [vmem:[#allocation2 + $0x1b8] sm:$0xff]
    %v1192 = vld [vmem:[#allocation2 + $0x1c0] sm:$0xff]
    %v1193 = vld [vmem:[#allocation2 + $0x1c8] sm:$0xff]
    %v1194 = vld [vmem:[#allocation2 + $0x1d0] sm:$0xff]
    %v1195 = vld [vmem:[#allocation2 + $0x1d8] sm:$0xff]
    %v1196 = vld [vmem:[#allocation2 + $0x1e0] sm:$0xff]
    %v1197 = vld [vmem:[#allocation2 + $0x1e8] sm:$0xff]
    %v1198 = vld [vmem:[#allocation2 + $0x1f0] sm:$0xff]
    %v1199 = vld [vmem:[#allocation2 + $0x1f8] sm:$0xff]
    %v1200 = vld [vmem:[#allocation2 + $0x200] sm:$0xff]
    %v1201 = vld [vmem:[#allocation2 + $0x208] sm:$0xff]
    %v1202 = vld [vmem:[#allocation2 + $0x210] sm:$0xff]
    %v1203 = vld [vmem:[#allocation2 + $0x218] sm:$0xff]
    %v1204 = vld [vmem:[#allocation2 + $0x220] sm:$0xff]
    %v1205 = vld [vmem:[#allocation2 + $0x228] sm:$0xff]
    %v1206 = vld [vmem:[#allocation2 + $0x230] sm:$0xff]
    %v1207 = vld [vmem:[#allocation2 + $0x238] sm:$0xff]
    %v1208 = vld [vmem:[#allocation2 + $0x240] sm:$0xff]
    %v1209 = vld [vmem:[#allocation2 + $0x248] sm:$0xff]
    %v1210 = vld [vmem:[#allocation2 + $0x250] sm:$0xff]
    %v1211 = vld [vmem:[#allocation2 + $0x258] sm:$0xff]
    %v1212 = vld [vmem:[#allocation2 + $0x260] sm:$0xff]
    %v1213 = vld [vmem:[#allocation2 + $0x268] sm:$0xff]
    %v1214 = vld [vmem:[#allocation2 + $0x270] sm:$0xff]
    %v1215 = vld [vmem:[#allocation2 + $0x278] sm:$0xff]
    %v1216 = vld [vmem:[#allocation2 + $0x280] sm:$0xff]
    %v1217 = vld [vmem:[#allocation2 + $0x288] sm:$0xff]
    %v1218 = vld [vmem:[#allocation2 + $0x290] sm:$0xff]
    %v1219 = vld [vmem:[#allocation2 + $0x298] sm:$0xff]
    %v1220 = vld [vmem:[#allocation2 + $0x2a0] sm:$0xff]
    %v1221 = vld [vmem:[#allocation2 + $0x2a8] sm:$0xff]
    %v1222 = vld [vmem:[#allocation2 + $0x2b0] sm:$0xff]
    %v1223 = vld [vmem:[#allocation2 + $0x2b8] sm:$0xff]
    %v1224 = vld [vmem:[#allocation2 + $0x2c0] sm:$0xff]
    %v1225 = vld [vmem:[#allocation2 + $0x2c8] sm:$0xff]
    %v1226 = vld [vmem:[#allocation2 + $0x2d0] sm:$0xff]
    %v1227 = vld [vmem:[#allocation2 + $0x2d8] sm:$0xff]
    %v1228 = vld [vmem:[#allocation2 + $0x2e0] sm:$0xff]
    %v1229 = vld [vmem:[#allocation2 + $0x2e8] sm:$0xff]
    %v1230 = vld [vmem:[#allocation2 + $0x2f0] sm:$0xff]
    %v1231 = vld [vmem:[#allocation2 + $0x2f8] sm:$0xff]
    %v1232 = vld [vmem:[#allocation2 + $0x300] sm:$0xff]
    %v1233 = vld [vmem:[#allocation2 + $0x308] sm:$0xff]
    %v1234 = vld [vmem:[#allocation2 + $0x310] sm:$0xff]
    %v1235 = vld [vmem:[#allocation2 + $0x318] sm:$0xff]
    %v1236 = vld [vmem:[#allocation2 + $0x320] sm:$0xff]
    %v1237 = vld [vmem:[#allocation2 + $0x328] sm:$0xff]
    %v1238 = vld [vmem:[#allocation2 + $0x330] sm:$0xff]
    %v1239 = vld [vmem:[#allocation2 + $0x338] sm:$0xff]
    %v1240 = vld [vmem:[#allocation2 + $0x340] sm:$0xff]
    %v1241 = vld [vmem:[#allocation2 + $0x348] sm:$0xff]
    %v1242 = vld [vmem:[#allocation2 + $0x350] sm:$0xff]
    %v1243 = vld [vmem:[#allocation2 + $0x358] sm:$0xff]
    %v1244 = vld [vmem:[#allocation2 + $0x360] sm:$0xff]
    %v1245 = vld [vmem:[#allocation2 + $0x368] sm:$0xff]
    %v1246 = vld [vmem:[#allocation2 + $0x370] sm:$0xff]
    %v1247 = vld [vmem:[#allocation2 + $0x378] sm:$0xff]
    %v1248 = vld [vmem:[#allocation2 + $0x380] sm:$0xff]
    %v1249 = vld [vmem:[#allocation2 + $0x388] sm:$0xff]
    %v1250 = vld [vmem:[#allocation2 + $0x390] sm:$0xff]
    %v1251 = vld [vmem:[#allocation2 + $0x398] sm:$0xff]
    %v1252 = vld [vmem:[#allocation2 + $0x3a0] sm:$0xff]
    %v1253 = vld [vmem:[#allocation2 + $0x3a8] sm:$0xff]
    %v1254 = vld [vmem:[#allocation2 + $0x3b0] sm:$0xff]
    %v1255 = vld [vmem:[#allocation2 + $0x3b8] sm:$0xff]
    %v1256 = vld [vmem:[#allocation2 + $0x3c0] sm:$0xff]
    %v1257 = vld [vmem:[#allocation2 + $0x3c8] sm:$0xff]
    %v1258 = vld [vmem:[#allocation2 + $0x3d0] sm:$0xff]
    %v1259 = vld [vmem:[#allocation2 + $0x3d8] sm:$0xff]
    %v1260 = vld [vmem:[#allocation2 + $0x3e0] sm:$0xff]
    %v1261 = vld [vmem:[#allocation2 + $0x3e8] sm:$0xff]
    %v1262 = vld [vmem:[#allocation2 + $0x3f0] sm:$0xff]
    %v1263 = vld [vmem:[#allocation2 + $0x3f8] sm:$0xff]
    %v1264 = vld [vmem:[#allocation2 + $0x400] sm:$0xff]
    %v1265 = vld [vmem:[#allocation2 + $0x408] sm:$0xff]
    %v1266 = vld [vmem:[#allocation2 + $0x410] sm:$0xff]
    %v1267 = vld [vmem:[#allocation2 + $0x418] sm:$0xff]
    %v1268 = vld [vmem:[#allocation2 + $0x420] sm:$0xff]
    %v1269 = vld [vmem:[#allocation2 + $0x428] sm:$0xff]
    %v1270 = vld [vmem:[#allocation2 + $0x430] sm:$0xff]
    %v1271 = vld [vmem:[#allocation2 + $0x438] sm:$0xff]
    %v1272 = vld [vmem:[#allocation2 + $0x440] sm:$0xff]
    %v1273 = vld [vmem:[#allocation2 + $0x448] sm:$0xff]
    %v1274 = vld [vmem:[#allocation2 + $0x450] sm:$0xff]
    %v1275 = vld [vmem:[#allocation2 + $0x458] sm:$0xff]
    %v1276 = vld [vmem:[#allocation2 + $0x460] sm:$0xff]
    %v1277 = vld [vmem:[#allocation2 + $0x468] sm:$0xff]
    %v1278 = vld [vmem:[#allocation2 + $0x470] sm:$0xff]
    %v1279 = vld [vmem:[#allocation2 + $0x478] sm:$0xff]
    %v1280 = vld [vmem:[#allocation2 + $0x480] sm:$0xff]
    %v1281 = vld [vmem:[#allocation2 + $0x488] sm:$0xff]
    %v1282 = vld [vmem:[#allocation2 + $0x490] sm:$0xff]
    %v1283 = vld [vmem:[#allocation2 + $0x498] sm:$0xff]
    %v1284 = vld [vmem:[#allocation2 + $0x4a0] sm:$0xff]
    %v1285 = vld [vmem:[#allocation2 + $0x4a8] sm:$0xff]
    %v1286 = vld [vmem:[#allocation2 + $0x4b0] sm:$0xff]
    %v1287 = vld [vmem:[#allocation2 + $0x4b8] sm:$0xff]
    %v1288 = vld [vmem:[#allocation2 + $0x4c0] sm:$0xff]
    %v1289 = vld [vmem:[#allocation2 + $0x4c8] sm:$0xff]
    %v1290 = vld [vmem:[#allocation2 + $0x4d0] sm:$0xff]
    %v1291 = vld [vmem:[#allocation2 + $0x4d8] sm:$0xff]
    %v1292 = vld [vmem:[#allocation2 + $0x4e0] sm:$0xff]
    %v1293 = vld [vmem:[#allocation2 + $0x4e8] sm:$0xff]
    %v1294 = vld [vmem:[#allocation2 + $0x4f0] sm:$0xff]
    %v1295 = vld [vmem:[#allocation2 + $0x4f8] sm:$0xff]
    %v1296 = vld [vmem:[#allocation2 + $0x500] sm:$0xff]
    %v1297 = vld [vmem:[#allocation2 + $0x508] sm:$0xff]
    %v1298 = vld [vmem:[#allocation2 + $0x510] sm:$0xff]
    %v1299 = vld [vmem:[#allocation2 + $0x518] sm:$0xff]
    %v1300 = vld [vmem:[#allocation2 + $0x520] sm:$0xff]
    %v1301 = vld [vmem:[#allocation2 + $0x528] sm:$0xff]
    %v1302 = vld [vmem:[#allocation2 + $0x530] sm:$0xff]
    %v1303 = vld [vmem:[#allocation2 + $0x538] sm:$0xff]
    %v1304 = vld [vmem:[#allocation2 + $0x540] sm:$0xff]
    %v1305 = vld [vmem:[#allocation2 + $0x548] sm:$0xff]
    %v1306 = vld [vmem:[#allocation2 + $0x550] sm:$0xff]
    %v1307 = vld [vmem:[#allocation2 + $0x558] sm:$0xff]
    %v1308 = vld [vmem:[#allocation2 + $0x560] sm:$0xff]
    %v1309 = vld [vmem:[#allocation2 + $0x568] sm:$0xff]
    %v1310 = vld [vmem:[#allocation2 + $0x570] sm:$0xff]
    %v1311 = vld [vmem:[#allocation2 + $0x578] sm:$0xff]
    %v1312 = vld [vmem:[#allocation2 + $0x580] sm:$0xff]
    %v1313 = vld [vmem:[#allocation2 + $0x588] sm:$0xff]
    %v1314 = vld [vmem:[#allocation2 + $0x590] sm:$0xff]
    %v1315 = vld [vmem:[#allocation2 + $0x598] sm:$0xff]
    %v1316 = vld [vmem:[#allocation2 + $0x5a0] sm:$0xff]
    %v1317 = vld [vmem:[#allocation2 + $0x5a8] sm:$0xff]
    %v1318 = vld [vmem:[#allocation2 + $0x5b0] sm:$0xff]
    %v1319 = vld [vmem:[#allocation2 + $0x5b8] sm:$0xff]
    %v1320 = vld [vmem:[#allocation2 + $0x5c0] sm:$0xff]
    %v1321 = vld [vmem:[#allocation2 + $0x5c8] sm:$0xff]
    %v1322 = vld [vmem:[#allocation2 + $0x5d0] sm:$0xff]
    %v1323 = vld [vmem:[#allocation2 + $0x5d8] sm:$0xff]
    %v1324 = vld [vmem:[#allocation2 + $0x5e0] sm:$0xff]
    %v1325 = vld [vmem:[#allocation2 + $0x5e8] sm:$0xff]
    %v1326 = vld [vmem:[#allocation2 + $0x5f0] sm:$0xff]
    %v1327 = vld [vmem:[#allocation2 + $0x5f8] sm:$0xff]
    %v1328 = vld [vmem:[#allocation2 + $0x600] sm:$0xff]
    %v1329 = vld [vmem:[#allocation2 + $0x608] sm:$0xff]
    %v1330 = vld [vmem:[#allocation2 + $0x610] sm:$0xff]
    %v1331 = vld [vmem:[#allocation2 + $0x618] sm:$0xff]
    %v1332 = vld [vmem:[#allocation2 + $0x620] sm:$0xff]
    %v1333 = vld [vmem:[#allocation2 + $0x628] sm:$0xff]
    %v1334 = vld [vmem:[#allocation2 + $0x630] sm:$0xff]
    %v1335 = vld [vmem:[#allocation2 + $0x638] sm:$0xff]
    %v1336 = vld [vmem:[#allocation2 + $0x640] sm:$0xff]
    %v1337 = vld [vmem:[#allocation2 + $0x648] sm:$0xff]
    %v1338 = vld [vmem:[#allocation2 + $0x650] sm:$0xff]
    %v1339 = vld [vmem:[#allocation2 + $0x658] sm:$0xff]
    %v1340 = vld [vmem:[#allocation2 + $0x660] sm:$0xff]
    %v1341 = vld [vmem:[#allocation2 + $0x668] sm:$0xff]
    %v1342 = vld [vmem:[#allocation2 + $0x670] sm:$0xff]
    %v1343 = vld [vmem:[#allocation2 + $0x678] sm:$0xff]
    %v1344 = vld [vmem:[#allocation2 + $0x680] sm:$0xff]
    %v1345 = vld [vmem:[#allocation2 + $0x688] sm:$0xff]
    %v1346 = vld [vmem:[#allocation2 + $0x690] sm:$0xff]
    %v1347 = vld [vmem:[#allocation2 + $0x698] sm:$0xff]
    %v1348 = vld [vmem:[#allocation2 + $0x6a0] sm:$0xff]
    %v1349 = vld [vmem:[#allocation2 + $0x6a8] sm:$0xff]
    %v1350 = vld [vmem:[#allocation2 + $0x6b0] sm:$0xff]
    %v1351 = vld [vmem:[#allocation2 + $0x6b8] sm:$0xff]
    %v1352 = vld [vmem:[#allocation2 + $0x6c0] sm:$0xff]
    %v1353 = vld [vmem:[#allocation2 + $0x6c8] sm:$0xff]
    %v1354 = vld [vmem:[#allocation2 + $0x6d0] sm:$0xff]
    %v1355 = vld [vmem:[#allocation2 + $0x6d8] sm:$0xff]
    %v1356 = vld [vmem:[#allocation2 + $0x6e0] sm:$0xff]
    %v1357 = vld [vmem:[#allocation2 + $0x6e8] sm:$0xff]
    %v1358 = vld [vmem:[#allocation2 + $0x6f0] sm:$0xff]
    %v1359 = vld [vmem:[#allocation2 + $0x6f8] sm:$0xff]
    %v1360 = vld [vmem:[#allocation2 + $0x700] sm:$0xff]
    %v1361 = vld [vmem:[#allocation2 + $0x708] sm:$0xff]
    %v1362 = vld [vmem:[#allocation2 + $0x710] sm:$0xff]
    %v1363 = vld [vmem:[#allocation2 + $0x718] sm:$0xff]
    %v1364 = vld [vmem:[#allocation2 + $0x720] sm:$0xff]
    %v1365 = vld [vmem:[#allocation2 + $0x728] sm:$0xff]
    %v1366 = vld [vmem:[#allocation2 + $0x730] sm:$0xff]
    %v1367 = vld [vmem:[#allocation2 + $0x738] sm:$0xff]
    %v1368 = vld [vmem:[#allocation2 + $0x740] sm:$0xff]
    %v1369 = vld [vmem:[#allocation2 + $0x748] sm:$0xff]
    %v1370 = vld [vmem:[#allocation2 + $0x750] sm:$0xff]
    %v1371 = vld [vmem:[#allocation2 + $0x758] sm:$0xff]
    %v1372 = vld [vmem:[#allocation2 + $0x760] sm:$0xff]
    %v1373 = vld [vmem:[#allocation2 + $0x768] sm:$0xff]
    %v1374 = vld [vmem:[#allocation2 + $0x770] sm:$0xff]
    %v1375 = vld [vmem:[#allocation2 + $0x778] sm:$0xff]
    %v1376 = vld [vmem:[#allocation2 + $0x780] sm:$0xff]
    %v1377 = vld [vmem:[#allocation2 + $0x788] sm:$0xff]
    %v1378 = vld [vmem:[#allocation2 + $0x790] sm:$0xff]
    %v1379 = vld [vmem:[#allocation2 + $0x798] sm:$0xff]
    %v1380 = vld [vmem:[#allocation2 + $0x7a0] sm:$0xff]
    %v1381 = vld [vmem:[#allocation2 + $0x7a8] sm:$0xff]
    %v1382 = vld [vmem:[#allocation2 + $0x7b0] sm:$0xff]
    %v1383 = vld [vmem:[#allocation2 + $0x7b8] sm:$0xff]
    %v1384 = vld [vmem:[#allocation2 + $0x7c0] sm:$0xff]
    %v1385 = vld [vmem:[#allocation2 + $0x7c8] sm:$0xff]
    %v1386 = vld [vmem:[#allocation2 + $0x7d0] sm:$0xff]
    %v1387 = vld [vmem:[#allocation2 + $0x7d8] sm:$0xff]
    %v1388 = vld [vmem:[#allocation2 + $0x7e0] sm:$0xff]
    %v1389 = vld [vmem:[#allocation2 + $0x7e8] sm:$0xff]
    %v1390 = vld [vmem:[#allocation2 + $0x7f0] sm:$0xff]
    %v1391 = vld [vmem:[#allocation2 + $0x7f8] sm:$0xff]
    %v1392 = vpack.c.bf16 %v1128, %v1128
    %v1393 = vpack.c.bf16 %v1129, %v1129
    %v1394 = vpack.c.bf16 %v1130, %v1130
    %v1395 = vpack.c.bf16 %v1131, %v1131
    %v1652 = vunpack.c.l.b16 %v1136
    %v1653 = vunpack.c.h.b16 %v1136
    %v1654 = vunpack.c.l.b16 %v1137
    %v1655 = vunpack.c.h.b16 %v1137
    %v1656 = vunpack.c.l.b16 %v1138
    %v1657 = vunpack.c.h.b16 %v1138
    %v1658 = vunpack.c.l.b16 %v1139
    %v1659 = vunpack.c.h.b16 %v1139
    %v1660 = vunpack.c.l.b16 %v1140
    %v1661 = vunpack.c.h.b16 %v1140
    %v1662 = vunpack.c.l.b16 %v1141
    %v1663 = vunpack.c.h.b16 %v1141
    %v1664 = vunpack.c.l.b16 %v1142
    %v1665 = vunpack.c.h.b16 %v1142
    %v1666 = vunpack.c.l.b16 %v1143
    %v1667 = vunpack.c.h.b16 %v1143
    %v1668 = vunpack.c.l.b16 %v1144
    %v1669 = vunpack.c.h.b16 %v1144
    %v1670 = vunpack.c.l.b16 %v1145
    %v1671 = vunpack.c.h.b16 %v1145
    %v1672 = vunpack.c.l.b16 %v1146
    %v1673 = vunpack.c.h.b16 %v1146
    %v1674 = vunpack.c.l.b16 %v1147
    %v1675 = vunpack.c.h.b16 %v1147
    %v1676 = vunpack.c.l.b16 %v1148
    %v1677 = vunpack.c.h.b16 %v1148
    %v1678 = vunpack.c.l.b16 %v1149
    %v1679 = vunpack.c.h.b16 %v1149
    %v1680 = vunpack.c.l.b16 %v1150
    %v1681 = vunpack.c.h.b16 %v1150
    %v1682 = vunpack.c.l.b16 %v1151
    %v1683 = vunpack.c.h.b16 %v1151
    %v1684 = vunpack.c.l.b16 %v1152
    %v1685 = vunpack.c.h.b16 %v1152
    %v1686 = vunpack.c.l.b16 %v1153
    %v1687 = vunpack.c.h.b16 %v1153
    %v1688 = vunpack.c.l.b16 %v1154
    %v1689 = vunpack.c.h.b16 %v1154
    %v1690 = vunpack.c.l.b16 %v1155
    %v1691 = vunpack.c.h.b16 %v1155
    %v1692 = vunpack.c.l.b16 %v1156
    %v1693 = vunpack.c.h.b16 %v1156
    %v1694 = vunpack.c.l.b16 %v1157
    %v1695 = vunpack.c.h.b16 %v1157
    %v1696 = vunpack.c.l.b16 %v1158
    %v1697 = vunpack.c.h.b16 %v1158
    %v1698 = vunpack.c.l.b16 %v1159
    %v1699 = vunpack.c.h.b16 %v1159
    %v1700 = vunpack.c.l.b16 %v1160
    %v1701 = vunpack.c.h.b16 %v1160
    %v1702 = vunpack.c.l.b16 %v1161
    %v1703 = vunpack.c.h.b16 %v1161
    %v1704 = vunpack.c.l.b16 %v1162
    %v1705 = vunpack.c.h.b16 %v1162
    %v1706 = vunpack.c.l.b16 %v1163
    %v1707 = vunpack.c.h.b16 %v1163
    %v1708 = vunpack.c.l.b16 %v1164
    %v1709 = vunpack.c.h.b16 %v1164
    %v1710 = vunpack.c.l.b16 %v1165
    %v1711 = vunpack.c.h.b16 %v1165
    %v1712 = vunpack.c.l.b16 %v1166
    %v1713 = vunpack.c.h.b16 %v1166
    %v1714 = vunpack.c.l.b16 %v1167
    %v1715 = vunpack.c.h.b16 %v1167
    %v1716 = vunpack.c.l.b16 %v1168
    %v1717 = vunpack.c.h.b16 %v1168
    %v1718 = vunpack.c.l.b16 %v1169
    %v1719 = vunpack.c.h.b16 %v1169
    %v1720 = vunpack.c.l.b16 %v1170
    %v1721 = vunpack.c.h.b16 %v1170
    %v1722 = vunpack.c.l.b16 %v1171
    %v1723 = vunpack.c.h.b16 %v1171
    %v1724 = vunpack.c.l.b16 %v1172
    %v1725 = vunpack.c.h.b16 %v1172
    %v1726 = vunpack.c.l.b16 %v1173
    %v1727 = vunpack.c.h.b16 %v1173
    %v1728 = vunpack.c.l.b16 %v1174
    %v1729 = vunpack.c.h.b16 %v1174
    %v1730 = vunpack.c.l.b16 %v1175
    %v1731 = vunpack.c.h.b16 %v1175
    %v1732 = vunpack.c.l.b16 %v1176
    %v1733 = vunpack.c.h.b16 %v1176
    %v1734 = vunpack.c.l.b16 %v1177
    %v1735 = vunpack.c.h.b16 %v1177
    %v1736 = vunpack.c.l.b16 %v1178
    %v1737 = vunpack.c.h.b16 %v1178
    %v1738 = vunpack.c.l.b16 %v1179
    %v1739 = vunpack.c.h.b16 %v1179
    %v1740 = vunpack.c.l.b16 %v1180
    %v1741 = vunpack.c.h.b16 %v1180
    %v1742 = vunpack.c.l.b16 %v1181
    %v1743 = vunpack.c.h.b16 %v1181
    %v1744 = vunpack.c.l.b16 %v1182
    %v1745 = vunpack.c.h.b16 %v1182
    %v1746 = vunpack.c.l.b16 %v1183
    %v1747 = vunpack.c.h.b16 %v1183
    %v1748 = vunpack.c.l.b16 %v1184
    %v1749 = vunpack.c.h.b16 %v1184
    %v1750 = vunpack.c.l.b16 %v1185
    %v1751 = vunpack.c.h.b16 %v1185
    %v1752 = vunpack.c.l.b16 %v1186
    %v1753 = vunpack.c.h.b16 %v1186
    %v1754 = vunpack.c.l.b16 %v1187
    %v1755 = vunpack.c.h.b16 %v1187
    %v1756 = vunpack.c.l.b16 %v1188
    %v1757 = vunpack.c.h.b16 %v1188
    %v1758 = vunpack.c.l.b16 %v1189
    %v1759 = vunpack.c.h.b16 %v1189
    %v1760 = vunpack.c.l.b16 %v1190
    %v1761 = vunpack.c.h.b16 %v1190
    %v1762 = vunpack.c.l.b16 %v1191
    %v1763 = vunpack.c.h.b16 %v1191
    %v1764 = vunpack.c.l.b16 %v1192
    %v1765 = vunpack.c.h.b16 %v1192
    %v1766 = vunpack.c.l.b16 %v1193
    %v1767 = vunpack.c.h.b16 %v1193
    %v1768 = vunpack.c.l.b16 %v1194
    %v1769 = vunpack.c.h.b16 %v1194
    %v1770 = vunpack.c.l.b16 %v1195
    %v1771 = vunpack.c.h.b16 %v1195
    %v1772 = vunpack.c.l.b16 %v1196
    %v1773 = vunpack.c.h.b16 %v1196
    %v1774 = vunpack.c.l.b16 %v1197
    %v1775 = vunpack.c.h.b16 %v1197
    %v1776 = vunpack.c.l.b16 %v1198
    %v1777 = vunpack.c.h.b16 %v1198
    %v1778 = vunpack.c.l.b16 %v1199
    %v1779 = vunpack.c.h.b16 %v1199
    %v1780 = vunpack.c.l.b16 %v1200
    %v1781 = vunpack.c.h.b16 %v1200
    %v1782 = vunpack.c.l.b16 %v1201
    %v1783 = vunpack.c.h.b16 %v1201
    %v1784 = vunpack.c.l.b16 %v1202
    %v1785 = vunpack.c.h.b16 %v1202
    %v1786 = vunpack.c.l.b16 %v1203
    %v1787 = vunpack.c.h.b16 %v1203
    %v1788 = vunpack.c.l.b16 %v1204
    %v1789 = vunpack.c.h.b16 %v1204
    %v1790 = vunpack.c.l.b16 %v1205
    %v1791 = vunpack.c.h.b16 %v1205
    %v1792 = vunpack.c.l.b16 %v1206
    %v1793 = vunpack.c.h.b16 %v1206
    %v1794 = vunpack.c.l.b16 %v1207
    %v1795 = vunpack.c.h.b16 %v1207
    %v1796 = vunpack.c.l.b16 %v1208
    %v1797 = vunpack.c.h.b16 %v1208
    %v1798 = vunpack.c.l.b16 %v1209
    %v1799 = vunpack.c.h.b16 %v1209
    %v1800 = vunpack.c.l.b16 %v1210
    %v1801 = vunpack.c.h.b16 %v1210
    %v1802 = vunpack.c.l.b16 %v1211
    %v1803 = vunpack.c.h.b16 %v1211
    %v1804 = vunpack.c.l.b16 %v1212
    %v1805 = vunpack.c.h.b16 %v1212
    %v1806 = vunpack.c.l.b16 %v1213
    %v1807 = vunpack.c.h.b16 %v1213
    %v1808 = vunpack.c.l.b16 %v1214
    %v1809 = vunpack.c.h.b16 %v1214
    %v1810 = vunpack.c.l.b16 %v1215
    %v1811 = vunpack.c.h.b16 %v1215
    %v1812 = vunpack.c.l.b16 %v1216
    %v1813 = vunpack.c.h.b16 %v1216
    %v1814 = vunpack.c.l.b16 %v1217
    %v1815 = vunpack.c.h.b16 %v1217
    %v1816 = vunpack.c.l.b16 %v1218
    %v1817 = vunpack.c.h.b16 %v1218
    %v1818 = vunpack.c.l.b16 %v1219
    %v1819 = vunpack.c.h.b16 %v1219
    %v1820 = vunpack.c.l.b16 %v1220
    %v1821 = vunpack.c.h.b16 %v1220
    %v1822 = vunpack.c.l.b16 %v1221
    %v1823 = vunpack.c.h.b16 %v1221
    %v1824 = vunpack.c.l.b16 %v1222
    %v1825 = vunpack.c.h.b16 %v1222
    %v1826 = vunpack.c.l.b16 %v1223
    %v1827 = vunpack.c.h.b16 %v1223
    %v1828 = vunpack.c.l.b16 %v1224
    %v1829 = vunpack.c.h.b16 %v1224
    %v1830 = vunpack.c.l.b16 %v1225
    %v1831 = vunpack.c.h.b16 %v1225
    %v1832 = vunpack.c.l.b16 %v1226
    %v1833 = vunpack.c.h.b16 %v1226
    %v1834 = vunpack.c.l.b16 %v1227
    %v1835 = vunpack.c.h.b16 %v1227
    %v1836 = vunpack.c.l.b16 %v1228
    %v1837 = vunpack.c.h.b16 %v1228
    %v1838 = vunpack.c.l.b16 %v1229
    %v1839 = vunpack.c.h.b16 %v1229
    %v1840 = vunpack.c.l.b16 %v1230
    %v1841 = vunpack.c.h.b16 %v1230
    %v1842 = vunpack.c.l.b16 %v1231
    %v1843 = vunpack.c.h.b16 %v1231
    %v1844 = vunpack.c.l.b16 %v1232
    %v1845 = vunpack.c.h.b16 %v1232
    %v1846 = vunpack.c.l.b16 %v1233
    %v1847 = vunpack.c.h.b16 %v1233
    %v1848 = vunpack.c.l.b16 %v1234
    %v1849 = vunpack.c.h.b16 %v1234
    %v1850 = vunpack.c.l.b16 %v1235
    %v1851 = vunpack.c.h.b16 %v1235
    %v1852 = vunpack.c.l.b16 %v1236
    %v1853 = vunpack.c.h.b16 %v1236
    %v1854 = vunpack.c.l.b16 %v1237
    %v1855 = vunpack.c.h.b16 %v1237
    %v1856 = vunpack.c.l.b16 %v1238
    %v1857 = vunpack.c.h.b16 %v1238
    %v1858 = vunpack.c.l.b16 %v1239
    %v1859 = vunpack.c.h.b16 %v1239
    %v1860 = vunpack.c.l.b16 %v1240
    %v1861 = vunpack.c.h.b16 %v1240
    %v1862 = vunpack.c.l.b16 %v1241
    %v1863 = vunpack.c.h.b16 %v1241
    %v1864 = vunpack.c.l.b16 %v1242
    %v1865 = vunpack.c.h.b16 %v1242
    %v1866 = vunpack.c.l.b16 %v1243
    %v1867 = vunpack.c.h.b16 %v1243
    %v1868 = vunpack.c.l.b16 %v1244
    %v1869 = vunpack.c.h.b16 %v1244
    %v1870 = vunpack.c.l.b16 %v1245
    %v1871 = vunpack.c.h.b16 %v1245
    %v1872 = vunpack.c.l.b16 %v1246
    %v1873 = vunpack.c.h.b16 %v1246
    %v1874 = vunpack.c.l.b16 %v1247
    %v1875 = vunpack.c.h.b16 %v1247
    %v1876 = vunpack.c.l.b16 %v1248
    %v1877 = vunpack.c.h.b16 %v1248
    %v1878 = vunpack.c.l.b16 %v1249
    %v1879 = vunpack.c.h.b16 %v1249
    %v1880 = vunpack.c.l.b16 %v1250
    %v1881 = vunpack.c.h.b16 %v1250
    %v1882 = vunpack.c.l.b16 %v1251
    %v1883 = vunpack.c.h.b16 %v1251
    %v1884 = vunpack.c.l.b16 %v1252
    %v1885 = vunpack.c.h.b16 %v1252
    %v1886 = vunpack.c.l.b16 %v1253
    %v1887 = vunpack.c.h.b16 %v1253
    %v1888 = vunpack.c.l.b16 %v1254
    %v1889 = vunpack.c.h.b16 %v1254
    %v1890 = vunpack.c.l.b16 %v1255
    %v1891 = vunpack.c.h.b16 %v1255
    %v1892 = vunpack.c.l.b16 %v1256
    %v1893 = vunpack.c.h.b16 %v1256
    %v1894 = vunpack.c.l.b16 %v1257
    %v1895 = vunpack.c.h.b16 %v1257
    %v1896 = vunpack.c.l.b16 %v1258
    %v1897 = vunpack.c.h.b16 %v1258
    %v1898 = vunpack.c.l.b16 %v1259
    %v1899 = vunpack.c.h.b16 %v1259
    %v1900 = vunpack.c.l.b16 %v1260
    %v1901 = vunpack.c.h.b16 %v1260
    %v1902 = vunpack.c.l.b16 %v1261
    %v1903 = vunpack.c.h.b16 %v1261
    %v1904 = vunpack.c.l.b16 %v1262
    %v1905 = vunpack.c.h.b16 %v1262
    %v1906 = vunpack.c.l.b16 %v1263
    %v1907 = vunpack.c.h.b16 %v1263
    %v1908 = vunpack.c.l.b16 %v1264
    %v1909 = vunpack.c.h.b16 %v1264
    %v1910 = vunpack.c.l.b16 %v1265
    %v1911 = vunpack.c.h.b16 %v1265
    %v1912 = vunpack.c.l.b16 %v1266
    %v1913 = vunpack.c.h.b16 %v1266
    %v1914 = vunpack.c.l.b16 %v1267
    %v1915 = vunpack.c.h.b16 %v1267
    %v1916 = vunpack.c.l.b16 %v1268
    %v1917 = vunpack.c.h.b16 %v1268
    %v1918 = vunpack.c.l.b16 %v1269
    %v1919 = vunpack.c.h.b16 %v1269
    %v1920 = vunpack.c.l.b16 %v1270
    %v1921 = vunpack.c.h.b16 %v1270
    %v1922 = vunpack.c.l.b16 %v1271
    %v1923 = vunpack.c.h.b16 %v1271
    %v1924 = vunpack.c.l.b16 %v1272
    %v1925 = vunpack.c.h.b16 %v1272
    %v1926 = vunpack.c.l.b16 %v1273
    %v1927 = vunpack.c.h.b16 %v1273
    %v1928 = vunpack.c.l.b16 %v1274
    %v1929 = vunpack.c.h.b16 %v1274
    %v1930 = vunpack.c.l.b16 %v1275
    %v1931 = vunpack.c.h.b16 %v1275
    %v1932 = vunpack.c.l.b16 %v1276
    %v1933 = vunpack.c.h.b16 %v1276
    %v1934 = vunpack.c.l.b16 %v1277
    %v1935 = vunpack.c.h.b16 %v1277
    %v1936 = vunpack.c.l.b16 %v1278
    %v1937 = vunpack.c.h.b16 %v1278
    %v1938 = vunpack.c.l.b16 %v1279
    %v1939 = vunpack.c.h.b16 %v1279
    %v1940 = vunpack.c.l.b16 %v1280
    %v1941 = vunpack.c.h.b16 %v1280
    %v1942 = vunpack.c.l.b16 %v1281
    %v1943 = vunpack.c.h.b16 %v1281
    %v1944 = vunpack.c.l.b16 %v1282
    %v1945 = vunpack.c.h.b16 %v1282
    %v1946 = vunpack.c.l.b16 %v1283
    %v1947 = vunpack.c.h.b16 %v1283
    %v1948 = vunpack.c.l.b16 %v1284
    %v1949 = vunpack.c.h.b16 %v1284
    %v1950 = vunpack.c.l.b16 %v1285
    %v1951 = vunpack.c.h.b16 %v1285
    %v1952 = vunpack.c.l.b16 %v1286
    %v1953 = vunpack.c.h.b16 %v1286
    %v1954 = vunpack.c.l.b16 %v1287
    %v1955 = vunpack.c.h.b16 %v1287
    %v1956 = vunpack.c.l.b16 %v1288
    %v1957 = vunpack.c.h.b16 %v1288
    %v1958 = vunpack.c.l.b16 %v1289
    %v1959 = vunpack.c.h.b16 %v1289
    %v1960 = vunpack.c.l.b16 %v1290
    %v1961 = vunpack.c.h.b16 %v1290
    %v1962 = vunpack.c.l.b16 %v1291
    %v1963 = vunpack.c.h.b16 %v1291
    %v1964 = vunpack.c.l.b16 %v1292
    %v1965 = vunpack.c.h.b16 %v1292
    %v1966 = vunpack.c.l.b16 %v1293
    %v1967 = vunpack.c.h.b16 %v1293
    %v1968 = vunpack.c.l.b16 %v1294
    %v1969 = vunpack.c.h.b16 %v1294
    %v1970 = vunpack.c.l.b16 %v1295
    %v1971 = vunpack.c.h.b16 %v1295
    %v1972 = vunpack.c.l.b16 %v1296
    %v1973 = vunpack.c.h.b16 %v1296
    %v1974 = vunpack.c.l.b16 %v1297
    %v1975 = vunpack.c.h.b16 %v1297
    %v1976 = vunpack.c.l.b16 %v1298
    %v1977 = vunpack.c.h.b16 %v1298
    %v1978 = vunpack.c.l.b16 %v1299
    %v1979 = vunpack.c.h.b16 %v1299
    %v1980 = vunpack.c.l.b16 %v1300
    %v1981 = vunpack.c.h.b16 %v1300
    %v1982 = vunpack.c.l.b16 %v1301
    %v1983 = vunpack.c.h.b16 %v1301
    %v1984 = vunpack.c.l.b16 %v1302
    %v1985 = vunpack.c.h.b16 %v1302
    %v1986 = vunpack.c.l.b16 %v1303
    %v1987 = vunpack.c.h.b16 %v1303
    %v1988 = vunpack.c.l.b16 %v1304
    %v1989 = vunpack.c.h.b16 %v1304
    %v1990 = vunpack.c.l.b16 %v1305
    %v1991 = vunpack.c.h.b16 %v1305
    %v1992 = vunpack.c.l.b16 %v1306
    %v1993 = vunpack.c.h.b16 %v1306
    %v1994 = vunpack.c.l.b16 %v1307
    %v1995 = vunpack.c.h.b16 %v1307
    %v1996 = vunpack.c.l.b16 %v1308
    %v1997 = vunpack.c.h.b16 %v1308
    %v1998 = vunpack.c.l.b16 %v1309
    %v1999 = vunpack.c.h.b16 %v1309
    %v2000 = vunpack.c.l.b16 %v1310
    %v2001 = vunpack.c.h.b16 %v1310
    %v2002 = vunpack.c.l.b16 %v1311
    %v2003 = vunpack.c.h.b16 %v1311
    %v2004 = vunpack.c.l.b16 %v1312
    %v2005 = vunpack.c.h.b16 %v1312
    %v2006 = vunpack.c.l.b16 %v1313
    %v2007 = vunpack.c.h.b16 %v1313
    %v2008 = vunpack.c.l.b16 %v1314
    %v2009 = vunpack.c.h.b16 %v1314
    %v2010 = vunpack.c.l.b16 %v1315
    %v2011 = vunpack.c.h.b16 %v1315
    %v2012 = vunpack.c.l.b16 %v1316
    %v2013 = vunpack.c.h.b16 %v1316
    %v2014 = vunpack.c.l.b16 %v1317
    %v2015 = vunpack.c.h.b16 %v1317
    %v2016 = vunpack.c.l.b16 %v1318
    %v2017 = vunpack.c.h.b16 %v1318
    %v2018 = vunpack.c.l.b16 %v1319
    %v2019 = vunpack.c.h.b16 %v1319
    %v2020 = vunpack.c.l.b16 %v1320
    %v2021 = vunpack.c.h.b16 %v1320
    %v2022 = vunpack.c.l.b16 %v1321
    %v2023 = vunpack.c.h.b16 %v1321
    %v2024 = vunpack.c.l.b16 %v1322
    %v2025 = vunpack.c.h.b16 %v1322
    %v2026 = vunpack.c.l.b16 %v1323
    %v2027 = vunpack.c.h.b16 %v1323
    %v2028 = vunpack.c.l.b16 %v1324
    %v2029 = vunpack.c.h.b16 %v1324
    %v2030 = vunpack.c.l.b16 %v1325
    %v2031 = vunpack.c.h.b16 %v1325
    %v2032 = vunpack.c.l.b16 %v1326
    %v2033 = vunpack.c.h.b16 %v1326
    %v2034 = vunpack.c.l.b16 %v1327
    %v2035 = vunpack.c.h.b16 %v1327
    %v2036 = vunpack.c.l.b16 %v1328
    %v2037 = vunpack.c.h.b16 %v1328
    %v2038 = vunpack.c.l.b16 %v1329
    %v2039 = vunpack.c.h.b16 %v1329
    %v2040 = vunpack.c.l.b16 %v1330
    %v2041 = vunpack.c.h.b16 %v1330
    %v2042 = vunpack.c.l.b16 %v1331
    %v2043 = vunpack.c.h.b16 %v1331
    %v2044 = vunpack.c.l.b16 %v1332
    %v2045 = vunpack.c.h.b16 %v1332
    %v2046 = vunpack.c.l.b16 %v1333
    %v2047 = vunpack.c.h.b16 %v1333
    %v2048 = vunpack.c.l.b16 %v1334
    %v2049 = vunpack.c.h.b16 %v1334
    %v2050 = vunpack.c.l.b16 %v1335
    %v2051 = vunpack.c.h.b16 %v1335
    %v2052 = vunpack.c.l.b16 %v1336
    %v2053 = vunpack.c.h.b16 %v1336
    %v2054 = vunpack.c.l.b16 %v1337
    %v2055 = vunpack.c.h.b16 %v1337
    %v2056 = vunpack.c.l.b16 %v1338
    %v2057 = vunpack.c.h.b16 %v1338
    %v2058 = vunpack.c.l.b16 %v1339
    %v2059 = vunpack.c.h.b16 %v1339
    %v2060 = vunpack.c.l.b16 %v1340
    %v2061 = vunpack.c.h.b16 %v1340
    %v2062 = vunpack.c.l.b16 %v1341
    %v2063 = vunpack.c.h.b16 %v1341
    %v2064 = vunpack.c.l.b16 %v1342
    %v2065 = vunpack.c.h.b16 %v1342
    %v2066 = vunpack.c.l.b16 %v1343
    %v2067 = vunpack.c.h.b16 %v1343
    %v2068 = vunpack.c.l.b16 %v1344
    %v2069 = vunpack.c.h.b16 %v1344
    %v2070 = vunpack.c.l.b16 %v1345
    %v2071 = vunpack.c.h.b16 %v1345
    %v2072 = vunpack.c.l.b16 %v1346
    %v2073 = vunpack.c.h.b16 %v1346
    %v2074 = vunpack.c.l.b16 %v1347
    %v2075 = vunpack.c.h.b16 %v1347
    %v2076 = vunpack.c.l.b16 %v1348
    %v2077 = vunpack.c.h.b16 %v1348
    %v2078 = vunpack.c.l.b16 %v1349
    %v2079 = vunpack.c.h.b16 %v1349
    %v2080 = vunpack.c.l.b16 %v1350
    %v2081 = vunpack.c.h.b16 %v1350
    %v2082 = vunpack.c.l.b16 %v1351
    %v2083 = vunpack.c.h.b16 %v1351
    %v2084 = vunpack.c.l.b16 %v1352
    %v2085 = vunpack.c.h.b16 %v1352
    %v2086 = vunpack.c.l.b16 %v1353
    %v2087 = vunpack.c.h.b16 %v1353
    %v2088 = vunpack.c.l.b16 %v1354
    %v2089 = vunpack.c.h.b16 %v1354
    %v2090 = vunpack.c.l.b16 %v1355
    %v2091 = vunpack.c.h.b16 %v1355
    %v2092 = vunpack.c.l.b16 %v1356
    %v2093 = vunpack.c.h.b16 %v1356
    %v2094 = vunpack.c.l.b16 %v1357
    %v2095 = vunpack.c.h.b16 %v1357
    %v2096 = vunpack.c.l.b16 %v1358
    %v2097 = vunpack.c.h.b16 %v1358
    %v2098 = vunpack.c.l.b16 %v1359
    %v2099 = vunpack.c.h.b16 %v1359
    %v2100 = vunpack.c.l.b16 %v1360
    %v2101 = vunpack.c.h.b16 %v1360
    %v2102 = vunpack.c.l.b16 %v1361
    %v2103 = vunpack.c.h.b16 %v1361
    %v2104 = vunpack.c.l.b16 %v1362
    %v2105 = vunpack.c.h.b16 %v1362
    %v2106 = vunpack.c.l.b16 %v1363
    %v2107 = vunpack.c.h.b16 %v1363
    %v2108 = vunpack.c.l.b16 %v1364
    %v2109 = vunpack.c.h.b16 %v1364
    %v2110 = vunpack.c.l.b16 %v1365
    %v2111 = vunpack.c.h.b16 %v1365
    %v2112 = vunpack.c.l.b16 %v1366
    %v2113 = vunpack.c.h.b16 %v1366
    %v2114 = vunpack.c.l.b16 %v1367
    %v2115 = vunpack.c.h.b16 %v1367
    %v2116 = vunpack.c.l.b16 %v1368
    %v2117 = vunpack.c.h.b16 %v1368
    %v2118 = vunpack.c.l.b16 %v1369
    %v2119 = vunpack.c.h.b16 %v1369
    %v2120 = vunpack.c.l.b16 %v1370
    %v2121 = vunpack.c.h.b16 %v1370
    %v2122 = vunpack.c.l.b16 %v1371
    %v2123 = vunpack.c.h.b16 %v1371
    %v2124 = vunpack.c.l.b16 %v1372
    %v2125 = vunpack.c.h.b16 %v1372
    %v2126 = vunpack.c.l.b16 %v1373
    %v2127 = vunpack.c.h.b16 %v1373
    %v2128 = vunpack.c.l.b16 %v1374
    %v2129 = vunpack.c.h.b16 %v1374
    %v2130 = vunpack.c.l.b16 %v1375
    %v2131 = vunpack.c.h.b16 %v1375
    %v2132 = vunpack.c.l.b16 %v1376
    %v2133 = vunpack.c.h.b16 %v1376
    %v2134 = vunpack.c.l.b16 %v1377
    %v2135 = vunpack.c.h.b16 %v1377
    %v2136 = vunpack.c.l.b16 %v1378
    %v2137 = vunpack.c.h.b16 %v1378
    %v2138 = vunpack.c.l.b16 %v1379
    %v2139 = vunpack.c.h.b16 %v1379
    %v2140 = vunpack.c.l.b16 %v1380
    %v2141 = vunpack.c.h.b16 %v1380
    %v2142 = vunpack.c.l.b16 %v1381
    %v2143 = vunpack.c.h.b16 %v1381
    %v2144 = vunpack.c.l.b16 %v1382
    %v2145 = vunpack.c.h.b16 %v1382
    %v2146 = vunpack.c.l.b16 %v1383
    %v2147 = vunpack.c.h.b16 %v1383
    %v2148 = vunpack.c.l.b16 %v1384
    %v2149 = vunpack.c.h.b16 %v1384
    %v2150 = vunpack.c.l.b16 %v1385
    %v2151 = vunpack.c.h.b16 %v1385
    %v2152 = vunpack.c.l.b16 %v1386
    %v2153 = vunpack.c.h.b16 %v1386
    %v2154 = vunpack.c.l.b16 %v1387
    %v2155 = vunpack.c.h.b16 %v1387
    %v2156 = vunpack.c.l.b16 %v1388
    %v2157 = vunpack.c.h.b16 %v1388
    %v2158 = vunpack.c.l.b16 %v1389
    %v2159 = vunpack.c.h.b16 %v1389
    %v2160 = vunpack.c.l.b16 %v1390
    %v2161 = vunpack.c.h.b16 %v1390
    %v2162 = vunpack.c.l.b16 %v1391
    %v2163 = vunpack.c.h.b16 %v1391
    %v2164 = vpack.c.b16 %v1660, %v1652
    %v2165 = vpack.c.b16 %v1661, %v1653
    %v2166 = vpack.c.b16 %v1662, %v1654
    %v2167 = vpack.c.b16 %v1663, %v1655
    %v2168 = vpack.c.b16 %v1664, %v1656
    %v2169 = vpack.c.b16 %v1665, %v1657
    %v2170 = vpack.c.b16 %v1666, %v1658
    %v2171 = vpack.c.b16 %v1667, %v1659
    %v2172 = vpack.c.b16 %v1676, %v1668
    %v2173 = vpack.c.b16 %v1677, %v1669
    %v2174 = vpack.c.b16 %v1678, %v1670
    %v2175 = vpack.c.b16 %v1679, %v1671
    %v2176 = vpack.c.b16 %v1680, %v1672
    %v2177 = vpack.c.b16 %v1681, %v1673
    %v2178 = vpack.c.b16 %v1682, %v1674
    %v2179 = vpack.c.b16 %v1683, %v1675
    %v2180 = vpack.c.b16 %v1692, %v1684
    %v2181 = vpack.c.b16 %v1693, %v1685
    %v2182 = vpack.c.b16 %v1694, %v1686
    %v2183 = vpack.c.b16 %v1695, %v1687
    %v2184 = vpack.c.b16 %v1696, %v1688
    %v2185 = vpack.c.b16 %v1697, %v1689
    %v2186 = vpack.c.b16 %v1698, %v1690
    %v2187 = vpack.c.b16 %v1699, %v1691
    %v2188 = vpack.c.b16 %v1708, %v1700
    %v2189 = vpack.c.b16 %v1709, %v1701
    %v2190 = vpack.c.b16 %v1710, %v1702
    %v2191 = vpack.c.b16 %v1711, %v1703
    %v2192 = vpack.c.b16 %v1712, %v1704
    %v2193 = vpack.c.b16 %v1713, %v1705
    %v2194 = vpack.c.b16 %v1714, %v1706
    %v2195 = vpack.c.b16 %v1715, %v1707
    %v2196 = vpack.c.b16 %v1724, %v1716
    %v2197 = vpack.c.b16 %v1725, %v1717
    %v2198 = vpack.c.b16 %v1726, %v1718
    %v2199 = vpack.c.b16 %v1727, %v1719
    %v2200 = vpack.c.b16 %v1728, %v1720
    %v2201 = vpack.c.b16 %v1729, %v1721
    %v2202 = vpack.c.b16 %v1730, %v1722
    %v2203 = vpack.c.b16 %v1731, %v1723
    %v2204 = vpack.c.b16 %v1740, %v1732
    %v2205 = vpack.c.b16 %v1741, %v1733
    %v2206 = vpack.c.b16 %v1742, %v1734
    %v2207 = vpack.c.b16 %v1743, %v1735
    %v2208 = vpack.c.b16 %v1744, %v1736
    %v2209 = vpack.c.b16 %v1745, %v1737
    %v2210 = vpack.c.b16 %v1746, %v1738
    %v2211 = vpack.c.b16 %v1747, %v1739
    %v2212 = vpack.c.b16 %v1756, %v1748
    %v2213 = vpack.c.b16 %v1757, %v1749
    %v2214 = vpack.c.b16 %v1758, %v1750
    %v2215 = vpack.c.b16 %v1759, %v1751
    %v2216 = vpack.c.b16 %v1760, %v1752
    %v2217 = vpack.c.b16 %v1761, %v1753
    %v2218 = vpack.c.b16 %v1762, %v1754
    %v2219 = vpack.c.b16 %v1763, %v1755
    %v2220 = vpack.c.b16 %v1772, %v1764
    %v2221 = vpack.c.b16 %v1773, %v1765
    %v2222 = vpack.c.b16 %v1774, %v1766
    %v2223 = vpack.c.b16 %v1775, %v1767
    %v2224 = vpack.c.b16 %v1776, %v1768
    %v2225 = vpack.c.b16 %v1777, %v1769
    %v2226 = vpack.c.b16 %v1778, %v1770
    %v2227 = vpack.c.b16 %v1779, %v1771
    %v2228 = vpack.c.b16 %v1788, %v1780
    %v2229 = vpack.c.b16 %v1789, %v1781
    %v2230 = vpack.c.b16 %v1790, %v1782
    %v2231 = vpack.c.b16 %v1791, %v1783
    %v2232 = vpack.c.b16 %v1792, %v1784
    %v2233 = vpack.c.b16 %v1793, %v1785
    %v2234 = vpack.c.b16 %v1794, %v1786
    %v2235 = vpack.c.b16 %v1795, %v1787
    %v2236 = vpack.c.b16 %v1804, %v1796
    %v2237 = vpack.c.b16 %v1805, %v1797
    %v2238 = vpack.c.b16 %v1806, %v1798
    %v2239 = vpack.c.b16 %v1807, %v1799
    %v2240 = vpack.c.b16 %v1808, %v1800
    %v2241 = vpack.c.b16 %v1809, %v1801
    %v2242 = vpack.c.b16 %v1810, %v1802
    %v2243 = vpack.c.b16 %v1811, %v1803
    %v2244 = vpack.c.b16 %v1820, %v1812
    %v2245 = vpack.c.b16 %v1821, %v1813
    %v2246 = vpack.c.b16 %v1822, %v1814
    %v2247 = vpack.c.b16 %v1823, %v1815
    %v2248 = vpack.c.b16 %v1824, %v1816
    %v2249 = vpack.c.b16 %v1825, %v1817
    %v2250 = vpack.c.b16 %v1826, %v1818
    %v2251 = vpack.c.b16 %v1827, %v1819
    %v2252 = vpack.c.b16 %v1836, %v1828
    %v2253 = vpack.c.b16 %v1837, %v1829
    %v2254 = vpack.c.b16 %v1838, %v1830
    %v2255 = vpack.c.b16 %v1839, %v1831
    %v2256 = vpack.c.b16 %v1840, %v1832
    %v2257 = vpack.c.b16 %v1841, %v1833
    %v2258 = vpack.c.b16 %v1842, %v1834
    %v2259 = vpack.c.b16 %v1843, %v1835
    %v2260 = vpack.c.b16 %v1852, %v1844
    %v2261 = vpack.c.b16 %v1853, %v1845
    %v2262 = vpack.c.b16 %v1854, %v1846
    %v2263 = vpack.c.b16 %v1855, %v1847
    %v2264 = vpack.c.b16 %v1856, %v1848
    %v2265 = vpack.c.b16 %v1857, %v1849
    %v2266 = vpack.c.b16 %v1858, %v1850
    %v2267 = vpack.c.b16 %v1859, %v1851
    %v2268 = vpack.c.b16 %v1868, %v1860
    %v2269 = vpack.c.b16 %v1869, %v1861
    %v2270 = vpack.c.b16 %v1870, %v1862
    %v2271 = vpack.c.b16 %v1871, %v1863
    %v2272 = vpack.c.b16 %v1872, %v1864
    %v2273 = vpack.c.b16 %v1873, %v1865
    %v2274 = vpack.c.b16 %v1874, %v1866
    %v2275 = vpack.c.b16 %v1875, %v1867
    %v2276 = vpack.c.b16 %v1884, %v1876
    %v2277 = vpack.c.b16 %v1885, %v1877
    %v2278 = vpack.c.b16 %v1886, %v1878
    %v2279 = vpack.c.b16 %v1887, %v1879
    %v2280 = vpack.c.b16 %v1888, %v1880
    %v2281 = vpack.c.b16 %v1889, %v1881
    %v2282 = vpack.c.b16 %v1890, %v1882
    %v2283 = vpack.c.b16 %v1891, %v1883
    %v2284 = vpack.c.b16 %v1900, %v1892
    %v2285 = vpack.c.b16 %v1901, %v1893
    %v2286 = vpack.c.b16 %v1902, %v1894
    %v2287 = vpack.c.b16 %v1903, %v1895
    %v2288 = vpack.c.b16 %v1904, %v1896
    %v2289 = vpack.c.b16 %v1905, %v1897
    %v2290 = vpack.c.b16 %v1906, %v1898
    %v2291 = vpack.c.b16 %v1907, %v1899
    %v2292 = vpack.c.b16 %v1916, %v1908
    %v2293 = vpack.c.b16 %v1917, %v1909
    %v2294 = vpack.c.b16 %v1918, %v1910
    %v2295 = vpack.c.b16 %v1919, %v1911
    %v2296 = vpack.c.b16 %v1920, %v1912
    %v2297 = vpack.c.b16 %v1921, %v1913
    %v2298 = vpack.c.b16 %v1922, %v1914
    %v2299 = vpack.c.b16 %v1923, %v1915
    %v2300 = vpack.c.b16 %v1932, %v1924
    %v2301 = vpack.c.b16 %v1933, %v1925
    %v2302 = vpack.c.b16 %v1934, %v1926
    %v2303 = vpack.c.b16 %v1935, %v1927
    %v2304 = vpack.c.b16 %v1936, %v1928
    %v2305 = vpack.c.b16 %v1937, %v1929
    %v2306 = vpack.c.b16 %v1938, %v1930
    %v2307 = vpack.c.b16 %v1939, %v1931
    %v2308 = vpack.c.b16 %v1948, %v1940
    %v2309 = vpack.c.b16 %v1949, %v1941
    %v2310 = vpack.c.b16 %v1950, %v1942
    %v2311 = vpack.c.b16 %v1951, %v1943
    %v2312 = vpack.c.b16 %v1952, %v1944
    %v2313 = vpack.c.b16 %v1953, %v1945
    %v2314 = vpack.c.b16 %v1954, %v1946
    %v2315 = vpack.c.b16 %v1955, %v1947
    %v2316 = vpack.c.b16 %v1964, %v1956
    %v2317 = vpack.c.b16 %v1965, %v1957
    %v2318 = vpack.c.b16 %v1966, %v1958
    %v2319 = vpack.c.b16 %v1967, %v1959
    %v2320 = vpack.c.b16 %v1968, %v1960
    %v2321 = vpack.c.b16 %v1969, %v1961
    %v2322 = vpack.c.b16 %v1970, %v1962
    %v2323 = vpack.c.b16 %v1971, %v1963
    %v2324 = vpack.c.b16 %v1980, %v1972
    %v2325 = vpack.c.b16 %v1981, %v1973
    %v2326 = vpack.c.b16 %v1982, %v1974
    %v2327 = vpack.c.b16 %v1983, %v1975
    %v2328 = vpack.c.b16 %v1984, %v1976
    %v2329 = vpack.c.b16 %v1985, %v1977
    %v2330 = vpack.c.b16 %v1986, %v1978
    %v2331 = vpack.c.b16 %v1987, %v1979
    %v2332 = vpack.c.b16 %v1996, %v1988
    %v2333 = vpack.c.b16 %v1997, %v1989
    %v2334 = vpack.c.b16 %v1998, %v1990
    %v2335 = vpack.c.b16 %v1999, %v1991
    %v2336 = vpack.c.b16 %v2000, %v1992
    %v2337 = vpack.c.b16 %v2001, %v1993
    %v2338 = vpack.c.b16 %v2002, %v1994
    %v2339 = vpack.c.b16 %v2003, %v1995
    %v2340 = vpack.c.b16 %v2012, %v2004
    %v2341 = vpack.c.b16 %v2013, %v2005
    %v2342 = vpack.c.b16 %v2014, %v2006
    %v2343 = vpack.c.b16 %v2015, %v2007
    %v2344 = vpack.c.b16 %v2016, %v2008
    %v2345 = vpack.c.b16 %v2017, %v2009
    %v2346 = vpack.c.b16 %v2018, %v2010
    %v2347 = vpack.c.b16 %v2019, %v2011
    %v2348 = vpack.c.b16 %v2028, %v2020
    %v2349 = vpack.c.b16 %v2029, %v2021
    %v2350 = vpack.c.b16 %v2030, %v2022
    %v2351 = vpack.c.b16 %v2031, %v2023
    %v2352 = vpack.c.b16 %v2032, %v2024
    %v2353 = vpack.c.b16 %v2033, %v2025
    %v2354 = vpack.c.b16 %v2034, %v2026
    %v2355 = vpack.c.b16 %v2035, %v2027
    %v2356 = vpack.c.b16 %v2044, %v2036
    %v2357 = vpack.c.b16 %v2045, %v2037
    %v2358 = vpack.c.b16 %v2046, %v2038
    %v2359 = vpack.c.b16 %v2047, %v2039
    %v2360 = vpack.c.b16 %v2048, %v2040
    %v2361 = vpack.c.b16 %v2049, %v2041
    %v2362 = vpack.c.b16 %v2050, %v2042
    %v2363 = vpack.c.b16 %v2051, %v2043
    %v2364 = vpack.c.b16 %v2060, %v2052
    %v2365 = vpack.c.b16 %v2061, %v2053
    %v2366 = vpack.c.b16 %v2062, %v2054
    %v2367 = vpack.c.b16 %v2063, %v2055
    %v2368 = vpack.c.b16 %v2064, %v2056
    %v2369 = vpack.c.b16 %v2065, %v2057
    %v2370 = vpack.c.b16 %v2066, %v2058
    %v2371 = vpack.c.b16 %v2067, %v2059
    %v2372 = vpack.c.b16 %v2076, %v2068
    %v2373 = vpack.c.b16 %v2077, %v2069
    %v2374 = vpack.c.b16 %v2078, %v2070
    %v2375 = vpack.c.b16 %v2079, %v2071
    %v2376 = vpack.c.b16 %v2080, %v2072
    %v2377 = vpack.c.b16 %v2081, %v2073
    %v2378 = vpack.c.b16 %v2082, %v2074
    %v2379 = vpack.c.b16 %v2083, %v2075
    %v2380 = vpack.c.b16 %v2092, %v2084
    %v2381 = vpack.c.b16 %v2093, %v2085
    %v2382 = vpack.c.b16 %v2094, %v2086
    %v2383 = vpack.c.b16 %v2095, %v2087
    %v2384 = vpack.c.b16 %v2096, %v2088
    %v2385 = vpack.c.b16 %v2097, %v2089
    %v2386 = vpack.c.b16 %v2098, %v2090
    %v2387 = vpack.c.b16 %v2099, %v2091
    %v2388 = vpack.c.b16 %v2108, %v2100
    %v2389 = vpack.c.b16 %v2109, %v2101
    %v2390 = vpack.c.b16 %v2110, %v2102
    %v2391 = vpack.c.b16 %v2111, %v2103
    %v2392 = vpack.c.b16 %v2112, %v2104
    %v2393 = vpack.c.b16 %v2113, %v2105
    %v2394 = vpack.c.b16 %v2114, %v2106
    %v2395 = vpack.c.b16 %v2115, %v2107
    %v2396 = vpack.c.b16 %v2124, %v2116
    %v2397 = vpack.c.b16 %v2125, %v2117
    %v2398 = vpack.c.b16 %v2126, %v2118
    %v2399 = vpack.c.b16 %v2127, %v2119
    %v2400 = vpack.c.b16 %v2128, %v2120
    %v2401 = vpack.c.b16 %v2129, %v2121
    %v2402 = vpack.c.b16 %v2130, %v2122
    %v2403 = vpack.c.b16 %v2131, %v2123
    %v2404 = vpack.c.b16 %v2140, %v2132
    %v2405 = vpack.c.b16 %v2141, %v2133
    %v2406 = vpack.c.b16 %v2142, %v2134
    %v2407 = vpack.c.b16 %v2143, %v2135
    %v2408 = vpack.c.b16 %v2144, %v2136
    %v2409 = vpack.c.b16 %v2145, %v2137
    %v2410 = vpack.c.b16 %v2146, %v2138
    %v2411 = vpack.c.b16 %v2147, %v2139
    %v2412 = vpack.c.b16 %v2156, %v2148
    %v2413 = vpack.c.b16 %v2157, %v2149
    %v2414 = vpack.c.b16 %v2158, %v2150
    %v2415 = vpack.c.b16 %v2159, %v2151
    %v2416 = vpack.c.b16 %v2160, %v2152
    %v2417 = vpack.c.b16 %v2161, %v2153
    %v2418 = vpack.c.b16 %v2162, %v2154
    %v2419 = vpack.c.b16 %v2163, %v2155
    %2676 = vmatpush.bf16.msra.mxu0 %v2220
    %2677 = vmatpush.bf16.msra.mxu0 %v2212
    %2678 = vmatpush.bf16.msra.mxu0 %v2204
    %2679 = vmatpush.bf16.msra.mxu0 %v2196
    %2680 = vmatpush.bf16.msra.mxu0 %v2188
    %2681 = vmatpush.bf16.msra.mxu0 %v2180
    %2682 = vmatpush.bf16.msra.mxu0 %v2172
    %2683 = vmatpush.bf16.msra.mxu0 %v2164
    %2684 = vmatmul.bf16.gmra.mxu0 %v1392
    %v2685 = vpop.f32.mrf.mxu0
    %v2686 = vadd.f32 0.0, %v2685
    %v2687 = vpop.f32.mrf.mxu0
    %2688 = vdwg.mxu0
    %2689 = vmatpush.bf16.msra.mxu0 %v2284
    %2690 = vmatpush.bf16.msra.mxu0 %v2276
    %2691 = vmatpush.bf16.msra.mxu0 %v2268
    %2692 = vmatpush.bf16.msra.mxu0 %v2260
    %2693 = vmatpush.bf16.msra.mxu0 %v2252
    %2694 = vmatpush.bf16.msra.mxu0 %v2244
    %2695 = vmatpush.bf16.msra.mxu0 %v2236
    %2696 = vmatpush.bf16.msra.mxu0 %v2228
    %2697 = vmatmul.bf16.gmra.mxu0 %v1393
    %v2698 = vpop.f32.mrf.mxu0
    %v2699 = vadd.f32 %v2686, %v2698
    %v2700 = vpop.f32.mrf.mxu0
    %2701 = vdwg.mxu0
    %2702 = vmatpush.bf16.msra.mxu0 %v2348
    %2703 = vmatpush.bf16.msra.mxu0 %v2340
    %2704 = vmatpush.bf16.msra.mxu0 %v2332
    %2705 = vmatpush.bf16.msra.mxu0 %v2324
    %2706 = vmatpush.bf16.msra.mxu0 %v2316
    %2707 = vmatpush.bf16.msra.mxu0 %v2308
    %2708 = vmatpush.bf16.msra.mxu0 %v2300
    %2709 = vmatpush.bf16.msra.mxu0 %v2292
    %2710 = vmatmul.bf16.gmra.mxu0 %v1394
    %v2711 = vpop.f32.mrf.mxu0
    %v2712 = vadd.f32 %v2699, %v2711
    %v2713 = vpop.f32.mrf.mxu0
    %2714 = vdwg.mxu0
    %2715 = vmatpush.bf16.msra.mxu0 %v2412
    %2716 = vmatpush.bf16.msra.mxu0 %v2404
    %2717 = vmatpush.bf16.msra.mxu0 %v2396
    %2718 = vmatpush.bf16.msra.mxu0 %v2388
    %2719 = vmatpush.bf16.msra.mxu0 %v2380
    %2720 = vmatpush.bf16.msra.mxu0 %v2372
    %2721 = vmatpush.bf16.msra.mxu0 %v2364
    %2722 = vmatpush.bf16.msra.mxu0 %v2356
    %2723 = vmatmul.bf16.gmra.mxu0 %v1395
    %v2724 = vpop.f32.mrf.mxu0
    %v2725 = vadd.f32 %v2712, %v2724
    %v2726 = vpop.f32.mrf.mxu0
    %2727 = vdwg.mxu0
    %2728 = vmatpush.bf16.msra.mxu0 %v2221
    %2729 = vmatpush.bf16.msra.mxu0 %v2213
    %2730 = vmatpush.bf16.msra.mxu0 %v2205
    %2731 = vmatpush.bf16.msra.mxu0 %v2197
    %2732 = vmatpush.bf16.msra.mxu0 %v2189
    %2733 = vmatpush.bf16.msra.mxu0 %v2181
    %2734 = vmatpush.bf16.msra.mxu0 %v2173
    %2735 = vmatpush.bf16.msra.mxu0 %v2165
    %2736 = vmatmul.bf16.gmra.mxu0 %v1392
    %v2737 = vpop.f32.mrf.mxu0
    %v2738 = vadd.f32 0.0, %v2737
    %v2739 = vpop.f32.mrf.mxu0
    %2740 = vdwg.mxu0
    %2741 = vmatpush.bf16.msra.mxu0 %v2285
    %2742 = vmatpush.bf16.msra.mxu0 %v2277
    %2743 = vmatpush.bf16.msra.mxu0 %v2269
    %2744 = vmatpush.bf16.msra.mxu0 %v2261
    %2745 = vmatpush.bf16.msra.mxu0 %v2253
    %2746 = vmatpush.bf16.msra.mxu0 %v2245
    %2747 = vmatpush.bf16.msra.mxu0 %v2237
    %2748 = vmatpush.bf16.msra.mxu0 %v2229
    %2749 = vmatmul.bf16.gmra.mxu0 %v1393
    %v2750 = vpop.f32.mrf.mxu0
    %v2751 = vadd.f32 %v2738, %v2750
    %v2752 = vpop.f32.mrf.mxu0
    %2753 = vdwg.mxu0
    %2754 = vmatpush.bf16.msra.mxu0 %v2349
    %2755 = vmatpush.bf16.msra.mxu0 %v2341
    %2756 = vmatpush.bf16.msra.mxu0 %v2333
    %2757 = vmatpush.bf16.msra.mxu0 %v2325
    %2758 = vmatpush.bf16.msra.mxu0 %v2317
    %2759 = vmatpush.bf16.msra.mxu0 %v2309
    %2760 = vmatpush.bf16.msra.mxu0 %v2301
    %2761 = vmatpush.bf16.msra.mxu0 %v2293
    %2762 = vmatmul.bf16.gmra.mxu0 %v1394
    %v2763 = vpop.f32.mrf.mxu0
    %v2764 = vadd.f32 %v2751, %v2763
    %v2765 = vpop.f32.mrf.mxu0
    %2766 = vdwg.mxu0
    %2767 = vmatpush.bf16.msra.mxu0 %v2413
    %2768 = vmatpush.bf16.msra.mxu0 %v2405
    %2769 = vmatpush.bf16.msra.mxu0 %v2397
    %2770 = vmatpush.bf16.msra.mxu0 %v2389
    %2771 = vmatpush.bf16.msra.mxu0 %v2381
    %2772 = vmatpush.bf16.msra.mxu0 %v2373
    %2773 = vmatpush.bf16.msra.mxu0 %v2365
    %2774 = vmatpush.bf16.msra.mxu0 %v2357
    %2775 = vmatmul.bf16.gmra.mxu0 %v1395
    %v2776 = vpop.f32.mrf.mxu0
    %v2777 = vadd.f32 %v2764, %v2776
    %v2778 = vpop.f32.mrf.mxu0
    %2779 = vdwg.mxu0
    %2780 = vmatpush.bf16.msra.mxu0 %v2222
    %2781 = vmatpush.bf16.msra.mxu0 %v2214
    %2782 = vmatpush.bf16.msra.mxu0 %v2206
    %2783 = vmatpush.bf16.msra.mxu0 %v2198
    %2784 = vmatpush.bf16.msra.mxu0 %v2190
    %2785 = vmatpush.bf16.msra.mxu0 %v2182
    %2786 = vmatpush.bf16.msra.mxu0 %v2174
    %2787 = vmatpush.bf16.msra.mxu0 %v2166
    %2788 = vmatmul.bf16.gmra.mxu0 %v1392
    %v2789 = vpop.f32.mrf.mxu0
    %v2790 = vadd.f32 0.0, %v2789
    %v2791 = vpop.f32.mrf.mxu0
    %2792 = vdwg.mxu0
    %2793 = vmatpush.bf16.msra.mxu0 %v2286
    %2794 = vmatpush.bf16.msra.mxu0 %v2278
    %2795 = vmatpush.bf16.msra.mxu0 %v2270
    %2796 = vmatpush.bf16.msra.mxu0 %v2262
    %2797 = vmatpush.bf16.msra.mxu0 %v2254
    %2798 = vmatpush.bf16.msra.mxu0 %v2246
    %2799 = vmatpush.bf16.msra.mxu0 %v2238
    %2800 = vmatpush.bf16.msra.mxu0 %v2230
    %2801 = vmatmul.bf16.gmra.mxu0 %v1393
    %v2802 = vpop.f32.mrf.mxu0
    %v2803 = vadd.f32 %v2790, %v2802
    %v2804 = vpop.f32.mrf.mxu0
    %2805 = vdwg.mxu0
    %2806 = vmatpush.bf16.msra.mxu0 %v2350
    %2807 = vmatpush.bf16.msra.mxu0 %v2342
    %2808 = vmatpush.bf16.msra.mxu0 %v2334
    %2809 = vmatpush.bf16.msra.mxu0 %v2326
    %2810 = vmatpush.bf16.msra.mxu0 %v2318
    %2811 = vmatpush.bf16.msra.mxu0 %v2310
    %2812 = vmatpush.bf16.msra.mxu0 %v2302
    %2813 = vmatpush.bf16.msra.mxu0 %v2294
    %2814 = vmatmul.bf16.gmra.mxu0 %v1394
    %v2815 = vpop.f32.mrf.mxu0
    %v2816 = vadd.f32 %v2803, %v2815
    %v2817 = vpop.f32.mrf.mxu0
    %2818 = vdwg.mxu0
    %2819 = vmatpush.bf16.msra.mxu0 %v2414
    %2820 = vmatpush.bf16.msra.mxu0 %v2406
    %2821 = vmatpush.bf16.msra.mxu0 %v2398
    %2822 = vmatpush.bf16.msra.mxu0 %v2390
    %2823 = vmatpush.bf16.msra.mxu0 %v2382
    %2824 = vmatpush.bf16.msra.mxu0 %v2374
    %2825 = vmatpush.bf16.msra.mxu0 %v2366
    %2826 = vmatpush.bf16.msra.mxu0 %v2358
    %2827 = vmatmul.bf16.gmra.mxu0 %v1395
    %v2828 = vpop.f32.mrf.mxu0
    %v2829 = vadd.f32 %v2816, %v2828
    %v2830 = vpop.f32.mrf.mxu0
    %2831 = vdwg.mxu0
    %2832 = vmatpush.bf16.msra.mxu0 %v2223
    %2833 = vmatpush.bf16.msra.mxu0 %v2215
    %2834 = vmatpush.bf16.msra.mxu0 %v2207
    %2835 = vmatpush.bf16.msra.mxu0 %v2199
    %2836 = vmatpush.bf16.msra.mxu0 %v2191
    %2837 = vmatpush.bf16.msra.mxu0 %v2183
    %2838 = vmatpush.bf16.msra.mxu0 %v2175
    %2839 = vmatpush.bf16.msra.mxu0 %v2167
    %2840 = vmatmul.bf16.gmra.mxu0 %v1392
    %v2841 = vpop.f32.mrf.mxu0
    %v2842 = vadd.f32 0.0, %v2841
    %v2843 = vpop.f32.mrf.mxu0
    %2844 = vdwg.mxu0
    %2845 = vmatpush.bf16.msra.mxu0 %v2287
    %2846 = vmatpush.bf16.msra.mxu0 %v2279
    %2847 = vmatpush.bf16.msra.mxu0 %v2271
    %2848 = vmatpush.bf16.msra.mxu0 %v2263
    %2849 = vmatpush.bf16.msra.mxu0 %v2255
    %2850 = vmatpush.bf16.msra.mxu0 %v2247
    %2851 = vmatpush.bf16.msra.mxu0 %v2239
    %2852 = vmatpush.bf16.msra.mxu0 %v2231
    %2853 = vmatmul.bf16.gmra.mxu0 %v1393
    %v2854 = vpop.f32.mrf.mxu0
    %v2855 = vadd.f32 %v2842, %v2854
    %v2856 = vpop.f32.mrf.mxu0
    %2857 = vdwg.mxu0
    %2858 = vmatpush.bf16.msra.mxu0 %v2351
    %2859 = vmatpush.bf16.msra.mxu0 %v2343
    %2860 = vmatpush.bf16.msra.mxu0 %v2335
    %2861 = vmatpush.bf16.msra.mxu0 %v2327
    %2862 = vmatpush.bf16.msra.mxu0 %v2319
    %2863 = vmatpush.bf16.msra.mxu0 %v2311
    %2864 = vmatpush.bf16.msra.mxu0 %v2303
    %2865 = vmatpush.bf16.msra.mxu0 %v2295
    %2866 = vmatmul.bf16.gmra.mxu0 %v1394
    %v2867 = vpop.f32.mrf.mxu0
    %v2868 = vadd.f32 %v2855, %v2867
    %v2869 = vpop.f32.mrf.mxu0
    %2870 = vdwg.mxu0
    %2871 = vmatpush.bf16.msra.mxu0 %v2415
    %2872 = vmatpush.bf16.msra.mxu0 %v2407
    %2873 = vmatpush.bf16.msra.mxu0 %v2399
    %2874 = vmatpush.bf16.msra.mxu0 %v2391
    %2875 = vmatpush.bf16.msra.mxu0 %v2383
    %2876 = vmatpush.bf16.msra.mxu0 %v2375
    %2877 = vmatpush.bf16.msra.mxu0 %v2367
    %2878 = vmatpush.bf16.msra.mxu0 %v2359
    %2879 = vmatmul.bf16.gmra.mxu0 %v1395
    %v2880 = vpop.f32.mrf.mxu0
    %v2881 = vadd.f32 %v2868, %v2880
    %v2882 = vpop.f32.mrf.mxu0
    %2883 = vdwg.mxu0
    %2884 = vmatpush.bf16.msra.mxu0 %v2224
    %2885 = vmatpush.bf16.msra.mxu0 %v2216
    %2886 = vmatpush.bf16.msra.mxu0 %v2208
    %2887 = vmatpush.bf16.msra.mxu0 %v2200
    %2888 = vmatpush.bf16.msra.mxu0 %v2192
    %2889 = vmatpush.bf16.msra.mxu0 %v2184
    %2890 = vmatpush.bf16.msra.mxu0 %v2176
    %2891 = vmatpush.bf16.msra.mxu0 %v2168
    %2892 = vmatmul.bf16.gmra.mxu0 %v1392
    %v2893 = vpop.f32.mrf.mxu0
    %v2894 = vadd.f32 0.0, %v2893
    %v2895 = vpop.f32.mrf.mxu0
    %2896 = vdwg.mxu0
    %2897 = vmatpush.bf16.msra.mxu0 %v2288
    %2898 = vmatpush.bf16.msra.mxu0 %v2280
    %2899 = vmatpush.bf16.msra.mxu0 %v2272
    %2900 = vmatpush.bf16.msra.mxu0 %v2264
    %2901 = vmatpush.bf16.msra.mxu0 %v2256
    %2902 = vmatpush.bf16.msra.mxu0 %v2248
    %2903 = vmatpush.bf16.msra.mxu0 %v2240
    %2904 = vmatpush.bf16.msra.mxu0 %v2232
    %2905 = vmatmul.bf16.gmra.mxu0 %v1393
    %v2906 = vpop.f32.mrf.mxu0
    %v2907 = vadd.f32 %v2894, %v2906
    %v2908 = vpop.f32.mrf.mxu0
    %2909 = vdwg.mxu0
    %2910 = vmatpush.bf16.msra.mxu0 %v2352
    %2911 = vmatpush.bf16.msra.mxu0 %v2344
    %2912 = vmatpush.bf16.msra.mxu0 %v2336
    %2913 = vmatpush.bf16.msra.mxu0 %v2328
    %2914 = vmatpush.bf16.msra.mxu0 %v2320
    %2915 = vmatpush.bf16.msra.mxu0 %v2312
    %2916 = vmatpush.bf16.msra.mxu0 %v2304
    %2917 = vmatpush.bf16.msra.mxu0 %v2296
    %2918 = vmatmul.bf16.gmra.mxu0 %v1394
    %v2919 = vpop.f32.mrf.mxu0
    %v2920 = vadd.f32 %v2907, %v2919
    %v2921 = vpop.f32.mrf.mxu0
    %2922 = vdwg.mxu0
    %2923 = vmatpush.bf16.msra.mxu0 %v2416
    %2924 = vmatpush.bf16.msra.mxu0 %v2408
    %2925 = vmatpush.bf16.msra.mxu0 %v2400
    %2926 = vmatpush.bf16.msra.mxu0 %v2392
    %2927 = vmatpush.bf16.msra.mxu0 %v2384
    %2928 = vmatpush.bf16.msra.mxu0 %v2376
    %2929 = vmatpush.bf16.msra.mxu0 %v2368
    %2930 = vmatpush.bf16.msra.mxu0 %v2360
    %2931 = vmatmul.bf16.gmra.mxu0 %v1395
    %v2932 = vpop.f32.mrf.mxu0
    %v2933 = vadd.f32 %v2920, %v2932
    %v2934 = vpop.f32.mrf.mxu0
    %2935 = vdwg.mxu0
    %2936 = vmatpush.bf16.msra.mxu0 %v2225
    %2937 = vmatpush.bf16.msra.mxu0 %v2217
    %2938 = vmatpush.bf16.msra.mxu0 %v2209
    %2939 = vmatpush.bf16.msra.mxu0 %v2201
    %2940 = vmatpush.bf16.msra.mxu0 %v2193
    %2941 = vmatpush.bf16.msra.mxu0 %v2185
    %2942 = vmatpush.bf16.msra.mxu0 %v2177
    %2943 = vmatpush.bf16.msra.mxu0 %v2169
    %2944 = vmatmul.bf16.gmra.mxu0 %v1392
    %v2945 = vpop.f32.mrf.mxu0
    %v2946 = vadd.f32 0.0, %v2945
    %v2947 = vpop.f32.mrf.mxu0
    %2948 = vdwg.mxu0
    %2949 = vmatpush.bf16.msra.mxu0 %v2289
    %2950 = vmatpush.bf16.msra.mxu0 %v2281
    %2951 = vmatpush.bf16.msra.mxu0 %v2273
    %2952 = vmatpush.bf16.msra.mxu0 %v2265
    %2953 = vmatpush.bf16.msra.mxu0 %v2257
    %2954 = vmatpush.bf16.msra.mxu0 %v2249
    %2955 = vmatpush.bf16.msra.mxu0 %v2241
    %2956 = vmatpush.bf16.msra.mxu0 %v2233
    %2957 = vmatmul.bf16.gmra.mxu0 %v1393
    %v2958 = vpop.f32.mrf.mxu0
    %v2959 = vadd.f32 %v2946, %v2958
    %v2960 = vpop.f32.mrf.mxu0
    %2961 = vdwg.mxu0
    %2962 = vmatpush.bf16.msra.mxu0 %v2353
    %2963 = vmatpush.bf16.msra.mxu0 %v2345
    %2964 = vmatpush.bf16.msra.mxu0 %v2337
    %2965 = vmatpush.bf16.msra.mxu0 %v2329
    %2966 = vmatpush.bf16.msra.mxu0 %v2321
    %2967 = vmatpush.bf16.msra.mxu0 %v2313
    %2968 = vmatpush.bf16.msra.mxu0 %v2305
    %2969 = vmatpush.bf16.msra.mxu0 %v2297
    %2970 = vmatmul.bf16.gmra.mxu0 %v1394
    %v2971 = vpop.f32.mrf.mxu0
    %v2972 = vadd.f32 %v2959, %v2971
    %v2973 = vpop.f32.mrf.mxu0
    %2974 = vdwg.mxu0
    %2975 = vmatpush.bf16.msra.mxu0 %v2417
    %2976 = vmatpush.bf16.msra.mxu0 %v2409
    %2977 = vmatpush.bf16.msra.mxu0 %v2401
    %2978 = vmatpush.bf16.msra.mxu0 %v2393
    %2979 = vmatpush.bf16.msra.mxu0 %v2385
    %2980 = vmatpush.bf16.msra.mxu0 %v2377
    %2981 = vmatpush.bf16.msra.mxu0 %v2369
    %2982 = vmatpush.bf16.msra.mxu0 %v2361
    %2983 = vmatmul.bf16.gmra.mxu0 %v1395
    %v2984 = vpop.f32.mrf.mxu0
    %v2985 = vadd.f32 %v2972, %v2984
    %v2986 = vpop.f32.mrf.mxu0
    %2987 = vdwg.mxu0
    %2988 = vmatpush.bf16.msra.mxu0 %v2226
    %2989 = vmatpush.bf16.msra.mxu0 %v2218
    %2990 = vmatpush.bf16.msra.mxu0 %v2210
    %2991 = vmatpush.bf16.msra.mxu0 %v2202
    %2992 = vmatpush.bf16.msra.mxu0 %v2194
    %2993 = vmatpush.bf16.msra.mxu0 %v2186
    %2994 = vmatpush.bf16.msra.mxu0 %v2178
    %2995 = vmatpush.bf16.msra.mxu0 %v2170
    %2996 = vmatmul.bf16.gmra.mxu0 %v1392
    %v2997 = vpop.f32.mrf.mxu0
    %v2998 = vadd.f32 0.0, %v2997
    %v2999 = vpop.f32.mrf.mxu0
    %3000 = vdwg.mxu0
    %3001 = vmatpush.bf16.msra.mxu0 %v2290
    %3002 = vmatpush.bf16.msra.mxu0 %v2282
    %3003 = vmatpush.bf16.msra.mxu0 %v2274
    %3004 = vmatpush.bf16.msra.mxu0 %v2266
    %3005 = vmatpush.bf16.msra.mxu0 %v2258
    %3006 = vmatpush.bf16.msra.mxu0 %v2250
    %3007 = vmatpush.bf16.msra.mxu0 %v2242
    %3008 = vmatpush.bf16.msra.mxu0 %v2234
    %3009 = vmatmul.bf16.gmra.mxu0 %v1393
    %v3010 = vpop.f32.mrf.mxu0
    %v3011 = vadd.f32 %v2998, %v3010
    %v3012 = vpop.f32.mrf.mxu0
    %3013 = vdwg.mxu0
    %3014 = vmatpush.bf16.msra.mxu0 %v2354
    %3015 = vmatpush.bf16.msra.mxu0 %v2346
    %3016 = vmatpush.bf16.msra.mxu0 %v2338
    %3017 = vmatpush.bf16.msra.mxu0 %v2330
    %3018 = vmatpush.bf16.msra.mxu0 %v2322
    %3019 = vmatpush.bf16.msra.mxu0 %v2314
    %3020 = vmatpush.bf16.msra.mxu0 %v2306
    %3021 = vmatpush.bf16.msra.mxu0 %v2298
    %3022 = vmatmul.bf16.gmra.mxu0 %v1394
    %v3023 = vpop.f32.mrf.mxu0
    %v3024 = vadd.f32 %v3011, %v3023
    %v3025 = vpop.f32.mrf.mxu0
    %3026 = vdwg.mxu0
    %3027 = vmatpush.bf16.msra.mxu0 %v2418
    %3028 = vmatpush.bf16.msra.mxu0 %v2410
    %3029 = vmatpush.bf16.msra.mxu0 %v2402
    %3030 = vmatpush.bf16.msra.mxu0 %v2394
    %3031 = vmatpush.bf16.msra.mxu0 %v2386
    %3032 = vmatpush.bf16.msra.mxu0 %v2378
    %3033 = vmatpush.bf16.msra.mxu0 %v2370
    %3034 = vmatpush.bf16.msra.mxu0 %v2362
    %3035 = vmatmul.bf16.gmra.mxu0 %v1395
    %v3036 = vpop.f32.mrf.mxu0
    %v3037 = vadd.f32 %v3024, %v3036
    %v3038 = vpop.f32.mrf.mxu0
    %3039 = vdwg.mxu0
    %3040 = vmatpush.bf16.msra.mxu0 %v2227
    %3041 = vmatpush.bf16.msra.mxu0 %v2219
    %3042 = vmatpush.bf16.msra.mxu0 %v2211
    %3043 = vmatpush.bf16.msra.mxu0 %v2203
    %3044 = vmatpush.bf16.msra.mxu0 %v2195
    %3045 = vmatpush.bf16.msra.mxu0 %v2187
    %3046 = vmatpush.bf16.msra.mxu0 %v2179
    %3047 = vmatpush.bf16.msra.mxu0 %v2171
    %3048 = vmatmul.bf16.gmra.mxu0 %v1392
    %v3049 = vpop.f32.mrf.mxu0
    %v3050 = vadd.f32 0.0, %v3049
    %v3051 = vpop.f32.mrf.mxu0
    %3052 = vdwg.mxu0
    %3053 = vmatpush.bf16.msra.mxu0 %v2291
    %3054 = vmatpush.bf16.msra.mxu0 %v2283
    %3055 = vmatpush.bf16.msra.mxu0 %v2275
    %3056 = vmatpush.bf16.msra.mxu0 %v2267
    %3057 = vmatpush.bf16.msra.mxu0 %v2259
    %3058 = vmatpush.bf16.msra.mxu0 %v2251
    %3059 = vmatpush.bf16.msra.mxu0 %v2243
    %3060 = vmatpush.bf16.msra.mxu0 %v2235
    %3061 = vmatmul.bf16.gmra.mxu0 %v1393
    %v3062 = vpop.f32.mrf.mxu0
    %v3063 = vadd.f32 %v3050, %v3062
    %v3064 = vpop.f32.mrf.mxu0
    %3065 = vdwg.mxu0
    %3066 = vmatpush.bf16.msra.mxu0 %v2355
    %3067 = vmatpush.bf16.msra.mxu0 %v2347
    %3068 = vmatpush.bf16.msra.mxu0 %v2339
    %3069 = vmatpush.bf16.msra.mxu0 %v2331
    %3070 = vmatpush.bf16.msra.mxu0 %v2323
    %3071 = vmatpush.bf16.msra.mxu0 %v2315
    %3072 = vmatpush.bf16.msra.mxu0 %v2307
    %3073 = vmatpush.bf16.msra.mxu0 %v2299
    %3074 = vmatmul.bf16.gmra.mxu0 %v1394
    %v3075 = vpop.f32.mrf.mxu0
    %v3076 = vadd.f32 %v3063, %v3075
    %v3077 = vpop.f32.mrf.mxu0
    %3078 = vdwg.mxu0
    %3079 = vmatpush.bf16.msra.mxu0 %v2419
    %3080 = vmatpush.bf16.msra.mxu0 %v2411
    %3081 = vmatpush.bf16.msra.mxu0 %v2403
    %3082 = vmatpush.bf16.msra.mxu0 %v2395
    %3083 = vmatpush.bf16.msra.mxu0 %v2387
    %3084 = vmatpush.bf16.msra.mxu0 %v2379
    %3085 = vmatpush.bf16.msra.mxu0 %v2371
    %3086 = vmatpush.bf16.msra.mxu0 %v2363
    %3087 = vmatmul.bf16.gmra.mxu0 %v1395
    %v3088 = vpop.f32.mrf.mxu0
    %v3089 = vadd.f32 %v3076, %v3088
    %v3090 = vpop.f32.mrf.mxu0
    %3091 = vdwg.mxu0
    %v3092 = vmul.f32 %v2725, %v120
    %v3093 = vmul.f32 %v2777, %v120
    %v3094 = vmul.f32 %v2829, %v120
    %v3095 = vmul.f32 %v2881, %v120
    %v3096 = vmul.f32 %v2933, %v120
    %v3097 = vmul.f32 %v2985, %v120
    %v3098 = vmul.f32 %v3037, %v120
    %v3099 = vmul.f32 %v3089, %v120
    %v3100 = vrot.slane %v3092, 4
    %v3101 = vadd.f32 %v3092, %v3100
    %v3102 = vrot.slane %v3101, 2
    %v3103 = vadd.f32 %v3101, %v3102
    %v3104 = vrot.slane %v3103, 1
    %v3105 = vadd.f32 %v3103, %v3104
    %v3106 = vrot.slane %v3093, 4
    %v3107 = vadd.f32 %v3093, %v3106
    %v3108 = vrot.slane %v3107, 2
    %v3109 = vadd.f32 %v3107, %v3108
    %v3110 = vrot.slane %v3109, 1
    %v3111 = vadd.f32 %v3109, %v3110
    %v3112 = vrot.slane %v3094, 4
    %v3113 = vadd.f32 %v3094, %v3112
    %v3114 = vrot.slane %v3113, 2
    %v3115 = vadd.f32 %v3113, %v3114
    %v3116 = vrot.slane %v3115, 1
    %v3117 = vadd.f32 %v3115, %v3116
    %v3118 = vrot.slane %v3095, 4
    %v3119 = vadd.f32 %v3095, %v3118
    %v3120 = vrot.slane %v3119, 2
    %v3121 = vadd.f32 %v3119, %v3120
    %v3122 = vrot.slane %v3121, 1
    %v3123 = vadd.f32 %v3121, %v3122
    %v3124 = vrot.slane %v3096, 4
    %v3125 = vadd.f32 %v3096, %v3124
    %v3126 = vrot.slane %v3125, 2
    %v3127 = vadd.f32 %v3125, %v3126
    %v3128 = vrot.slane %v3127, 1
    %v3129 = vadd.f32 %v3127, %v3128
    %v3130 = vrot.slane %v3097, 4
    %v3131 = vadd.f32 %v3097, %v3130
    %v3132 = vrot.slane %v3131, 2
    %v3133 = vadd.f32 %v3131, %v3132
    %v3134 = vrot.slane %v3133, 1
    %v3135 = vadd.f32 %v3133, %v3134
    %v3136 = vrot.slane %v3098, 4
    %v3137 = vadd.f32 %v3098, %v3136
    %v3138 = vrot.slane %v3137, 2
    %v3139 = vadd.f32 %v3137, %v3138
    %v3140 = vrot.slane %v3139, 1
    %v3141 = vadd.f32 %v3139, %v3140
    %v3142 = vrot.slane %v3099, 4
    %v3143 = vadd.f32 %v3099, %v3142
    %v3144 = vrot.slane %v3143, 2
    %v3145 = vadd.f32 %v3143, %v3144
    %v3146 = vrot.slane %v3145, 1
    %v3147 = vadd.f32 %v3145, %v3146
    %v3148 = vmul.f32 %v3092, %v2725
    %v3149 = vmul.f32 %v3093, %v2777
    %v3150 = vmul.f32 %v3094, %v2829
    %v3151 = vmul.f32 %v3095, %v2881
    %v3152 = vmul.f32 %v3096, %v2933
    %v3153 = vmul.f32 %v3097, %v2985
    %v3154 = vmul.f32 %v3098, %v3037
    %v3155 = vmul.f32 %v3099, %v3089
    %v3156 = vrot.slane %v3148, 4
    %v3157 = vadd.f32 %v3148, %v3156
    %v3158 = vrot.slane %v3157, 2
    %v3159 = vadd.f32 %v3157, %v3158
    %v3160 = vrot.slane %v3159, 1
    %v3161 = vadd.f32 %v3159, %v3160
    %v3162 = vrot.slane %v3149, 4
    %v3163 = vadd.f32 %v3149, %v3162
    %v3164 = vrot.slane %v3163, 2
    %v3165 = vadd.f32 %v3163, %v3164
    %v3166 = vrot.slane %v3165, 1
    %v3167 = vadd.f32 %v3165, %v3166
    %v3168 = vrot.slane %v3150, 4
    %v3169 = vadd.f32 %v3150, %v3168
    %v3170 = vrot.slane %v3169, 2
    %v3171 = vadd.f32 %v3169, %v3170
    %v3172 = vrot.slane %v3171, 1
    %v3173 = vadd.f32 %v3171, %v3172
    %v3174 = vrot.slane %v3151, 4
    %v3175 = vadd.f32 %v3151, %v3174
    %v3176 = vrot.slane %v3175, 2
    %v3177 = vadd.f32 %v3175, %v3176
    %v3178 = vrot.slane %v3177, 1
    %v3179 = vadd.f32 %v3177, %v3178
    %v3180 = vrot.slane %v3152, 4
    %v3181 = vadd.f32 %v3152, %v3180
    %v3182 = vrot.slane %v3181, 2
    %v3183 = vadd.f32 %v3181, %v3182
    %v3184 = vrot.slane %v3183, 1
    %v3185 = vadd.f32 %v3183, %v3184
    %v3186 = vrot.slane %v3153, 4
    %v3187 = vadd.f32 %v3153, %v3186
    %v3188 = vrot.slane %v3187, 2
    %v3189 = vadd.f32 %v3187, %v3188
    %v3190 = vrot.slane %v3189, 1
    %v3191 = vadd.f32 %v3189, %v3190
    %v3192 = vrot.slane %v3154, 4
    %v3193 = vadd.f32 %v3154, %v3192
    %v3194 = vrot.slane %v3193, 2
    %v3195 = vadd.f32 %v3193, %v3194
    %v3196 = vrot.slane %v3195, 1
    %v3197 = vadd.f32 %v3195, %v3196
    %v3198 = vrot.slane %v3155, 4
    %v3199 = vadd.f32 %v3155, %v3198
    %v3200 = vrot.slane %v3199, 2
    %v3201 = vadd.f32 %v3199, %v3200
    %v3202 = vrot.slane %v3201, 1
    %v3203 = vadd.f32 %v3201, %v3202
    %v3204 = vmul.f32 %v3105, %v392
    %v3205 = vmul.f32 %v3111, %v392
    %v3206 = vmul.f32 %v3117, %v392
    %v3207 = vmul.f32 %v3123, %v392
    %v3208 = vmul.f32 %v3129, %v392
    %v3209 = vmul.f32 %v3135, %v392
    %v3210 = vmul.f32 %v3141, %v392
    %v3211 = vmul.f32 %v3147, %v392
    %v3212 = vmul.f32 %v3161, %v392
    %v3213 = vmul.f32 %v3167, %v392
    %v3214 = vmul.f32 %v3173, %v392
    %v3215 = vmul.f32 %v3179, %v392
    %v3216 = vmul.f32 %v3185, %v392
    %v3217 = vmul.f32 %v3191, %v392
    %v3218 = vmul.f32 %v3197, %v392
    %v3219 = vmul.f32 %v3203, %v392
    %v3220 = vmul.f32 %v3204, %v3204
    %v3221 = vmul.f32 %v3205, %v3205
    %v3222 = vmul.f32 %v3206, %v3206
    %v3223 = vmul.f32 %v3207, %v3207
    %v3224 = vmul.f32 %v3208, %v3208
    %v3225 = vmul.f32 %v3209, %v3209
    %v3226 = vmul.f32 %v3210, %v3210
    %v3227 = vmul.f32 %v3211, %v3211
    %v3228 = vsub.f32 %v3212, %v3220
    %v3229 = vsub.f32 %v3213, %v3221
    %v3230 = vsub.f32 %v3214, %v3222
    %v3231 = vsub.f32 %v3215, %v3223
    %v3232 = vsub.f32 %v3216, %v3224
    %v3233 = vsub.f32 %v3217, %v3225
    %v3234 = vsub.f32 %v3218, %v3226
    %v3235 = vsub.f32 %v3219, %v3227
    %v3236 = vadd.f32 %v3228, 1e-05
    %v3237 = vadd.f32 %v3229, 1e-05
    %v3238 = vadd.f32 %v3230, 1e-05
    %v3239 = vadd.f32 %v3231, 1e-05
    %v3240 = vadd.f32 %v3232, 1e-05
    %v3241 = vadd.f32 %v3233, 1e-05
    %v3242 = vadd.f32 %v3234, 1e-05
    %v3243 = vadd.f32 %v3235, 1e-05
    %v3244 = vrsqrt.pop %v3236
    %v3245 = vmul.f32 %v3244, %v3236
    %v3246 = vmul.f32 %v3245, %v3244
    %v3247 = vmul.f32 0.5, %v3246
    %v3248 = vsub.f32 1.5, %v3247
    %v3249 = vmul.f32 %v3244, %v3248
    %vm3250 = vweird.f32 %v3236
    %vm3251 = vweird.f32 %v3244
    %vm3252 = vmor %vm3250, %vm3251
    %v3253 = vsel %vm3252, %v3244, %v3249
    %v3254 = vrsqrt.pop %v3237
    %v3255 = vmul.f32 %v3254, %v3237
    %v3256 = vmul.f32 %v3255, %v3254
    %v3257 = vmul.f32 0.5, %v3256
    %v3258 = vsub.f32 1.5, %v3257
    %v3259 = vmul.f32 %v3254, %v3258
    %vm3260 = vweird.f32 %v3237
    %vm3261 = vweird.f32 %v3254
    %vm3262 = vmor %vm3260, %vm3261
    %v3263 = vsel %vm3262, %v3254, %v3259
    %v3264 = vrsqrt.pop %v3238
    %v3265 = vmul.f32 %v3264, %v3238
    %v3266 = vmul.f32 %v3265, %v3264
    %v3267 = vmul.f32 0.5, %v3266
    %v3268 = vsub.f32 1.5, %v3267
    %v3269 = vmul.f32 %v3264, %v3268
    %vm3270 = vweird.f32 %v3238
    %vm3271 = vweird.f32 %v3264
    %vm3272 = vmor %vm3270, %vm3271
    %v3273 = vsel %vm3272, %v3264, %v3269
    %v3274 = vrsqrt.pop %v3239
    %v3275 = vmul.f32 %v3274, %v3239
    %v3276 = vmul.f32 %v3275, %v3274
    %v3277 = vmul.f32 0.5, %v3276
    %v3278 = vsub.f32 1.5, %v3277
    %v3279 = vmul.f32 %v3274, %v3278
    %vm3280 = vweird.f32 %v3239
    %vm3281 = vweird.f32 %v3274
    %vm3282 = vmor %vm3280, %vm3281
    %v3283 = vsel %vm3282, %v3274, %v3279
    %v3284 = vrsqrt.pop %v3240
    %v3285 = vmul.f32 %v3284, %v3240
    %v3286 = vmul.f32 %v3285, %v3284
    %v3287 = vmul.f32 0.5, %v3286
    %v3288 = vsub.f32 1.5, %v3287
    %v3289 = vmul.f32 %v3284, %v3288
    %vm3290 = vweird.f32 %v3240
    %vm3291 = vweird.f32 %v3284
    %vm3292 = vmor %vm3290, %vm3291
    %v3293 = vsel %vm3292, %v3284, %v3289
    %v3294 = vrsqrt.pop %v3241
    %v3295 = vmul.f32 %v3294, %v3241
    %v3296 = vmul.f32 %v3295, %v3294
    %v3297 = vmul.f32 0.5, %v3296
    %v3298 = vsub.f32 1.5, %v3297
    %v3299 = vmul.f32 %v3294, %v3298
    %vm3300 = vweird.f32 %v3241
    %vm3301 = vweird.f32 %v3294
    %vm3302 = vmor %vm3300, %vm3301
    %v3303 = vsel %vm3302, %v3294, %v3299
    %v3304 = vrsqrt.pop %v3242
    %v3305 = vmul.f32 %v3304, %v3242
    %v3306 = vmul.f32 %v3305, %v3304
    %v3307 = vmul.f32 0.5, %v3306
    %v3308 = vsub.f32 1.5, %v3307
    %v3309 = vmul.f32 %v3304, %v3308
    %vm3310 = vweird.f32 %v3242
    %vm3311 = vweird.f32 %v3304
    %vm3312 = vmor %vm3310, %vm3311
    %v3313 = vsel %vm3312, %v3304, %v3309
    %v3314 = vrsqrt.pop %v3243
    %v3315 = vmul.f32 %v3314, %v3243
    %v3316 = vmul.f32 %v3315, %v3314
    %v3317 = vmul.f32 0.5, %v3316
    %v3318 = vsub.f32 1.5, %v3317
    %v3319 = vmul.f32 %v3314, %v3318
    %vm3320 = vweird.f32 %v3243
    %vm3321 = vweird.f32 %v3314
    %vm3322 = vmor %vm3320, %vm3321
    %v3323 = vsel %vm3322, %v3314, %v3319
    %v3332 = vrot.slane %v3263, 7
    %v3333 = vrot.slane %v3273, 6
    %v3334 = vrot.slane %v3283, 5
    %v3335 = vrot.slane %v3293, 4
    %v3336 = vrot.slane %v3303, 3
    %v3337 = vrot.slane %v3313, 2
    %v3338 = vrot.slane %v3323, 1
    %v3339 = vsel %vm426, %v3253, %v3332
    %v3340 = vsel %vm1072, %v3333, %v3334
    %v3341 = vsel %vm1074, %v3339, %v3340
    %vm3342 = vcmask 1044484
    %v3343 = vsel %vm3342, %v3335, %v3336
    %vm3344 = vcmask 1046534
    %v3345 = vsel %vm3344, %v3337, %v3338
    %vm3346 = vcmask 1045508
    %v3347 = vsel %vm3346, %v3343, %v3345
    %vm3348 = vcmask 1043456
    %v3349 = vsel %vm3348, %v3341, %v3347
    %v3351 = vmul.f32 %v150, %v3349
    %v3353 = vperm.slane %v3351, 0
    %v3354 = vperm.slane %v3351, 1
    %v3355 = vperm.slane %v3351, 2
    %v3356 = vperm.slane %v3351, 3
    %v3357 = vperm.slane %v3351, 4
    %v3358 = vperm.slane %v3351, 5
    %v3359 = vperm.slane %v3351, 6
    %v3360 = vperm.slane %v3351, 7
    %v3369 = vmul.f32 %v3204, %v3353
    %v3370 = vmul.f32 %v3205, %v3354
    %v3371 = vmul.f32 %v3206, %v3355
    %v3372 = vmul.f32 %v3207, %v3356
    %v3373 = vmul.f32 %v3208, %v3357
    %v3374 = vmul.f32 %v3209, %v3358
    %v3375 = vmul.f32 %v3210, %v3359
    %v3376 = vmul.f32 %v3211, %v3360
    %v3385 = vrot.slane %v3370, 7
    %v3386 = vrot.slane %v3371, 6
    %v3387 = vrot.slane %v3372, 5
    %v3388 = vrot.slane %v3373, 4
    %v3389 = vrot.slane %v3374, 3
    %v3390 = vrot.slane %v3375, 2
    %v3391 = vrot.slane %v3376, 1
    %v3392 = vsel %vm426, %v3369, %v3385
    %v3393 = vsel %vm1072, %v3386, %v3387
    %v3394 = vsel %vm1074, %v3392, %v3393
    %v3395 = vsel %vm3342, %v3388, %v3389
    %v3396 = vsel %vm3344, %v3390, %v3391
    %v3397 = vsel %vm3346, %v3395, %v3396
    %v3398 = vsel %vm3348, %v3394, %v3397
    %v3400 = vsub.f32 %v154, %v3398
    %v3401 = vmul.f32 %v2725, %v3353
    %v3402 = vmul.f32 %v2777, %v3354
    %v3403 = vmul.f32 %v2829, %v3355
    %v3404 = vmul.f32 %v2881, %v3356
    %v3405 = vmul.f32 %v2933, %v3357
    %v3406 = vmul.f32 %v2985, %v3358
    %v3407 = vmul.f32 %v3037, %v3359
    %v3408 = vmul.f32 %v3089, %v3360
    %v3410 = vperm.slane %v3400, 0
    %v3411 = vperm.slane %v3400, 1
    %v3412 = vperm.slane %v3400, 2
    %v3413 = vperm.slane %v3400, 3
    %v3414 = vperm.slane %v3400, 4
    %v3415 = vperm.slane %v3400, 5
    %v3416 = vperm.slane %v3400, 6
    %v3417 = vperm.slane %v3400, 7
    %v3426 = vadd.f32 %v3401, %v3410
    %v3427 = vadd.f32 %v3402, %v3411
    %v3428 = vadd.f32 %v3403, %v3412
    %v3429 = vadd.f32 %v3404, %v3413
    %v3430 = vadd.f32 %v3405, %v3414
    %v3431 = vadd.f32 %v3406, %v3415
    %v3432 = vadd.f32 %v3407, %v3416
    %v3433 = vadd.f32 %v3408, %v3417
    %vm3434 = vcmp.gt.f32.partialorder %v3426, 0.0
    %vm3435 = vcmp.gt.f32.partialorder %v3427, 0.0
    %vm3436 = vcmp.gt.f32.partialorder %v3428, 0.0
    %vm3437 = vcmp.gt.f32.partialorder %v3429, 0.0
    %vm3438 = vcmp.gt.f32.partialorder %v3430, 0.0
    %vm3439 = vcmp.gt.f32.partialorder %v3431, 0.0
    %vm3440 = vcmp.gt.f32.partialorder %v3432, 0.0
    %vm3441 = vcmp.gt.f32.partialorder %v3433, 0.0
    %v3442 = vmul.f32 %v3426, 0.2
    %v3443 = vmul.f32 %v3427, 0.2
    %v3444 = vmul.f32 %v3428, 0.2
    %v3445 = vmul.f32 %v3429, 0.2
    %v3446 = vmul.f32 %v3430, 0.2
    %v3447 = vmul.f32 %v3431, 0.2
    %v3448 = vmul.f32 %v3432, 0.2
    %v3449 = vmul.f32 %v3433, 0.2
    %v3450 = vsel %vm3434, %v3426, %v3442
    %v3451 = vsel %vm3435, %v3427, %v3443
    %v3452 = vsel %vm3436, %v3428, %v3444
    %v3453 = vsel %vm3437, %v3429, %v3445
    %v3454 = vsel %vm3438, %v3430, %v3446
    %v3455 = vsel %vm3439, %v3431, %v3447
    %v3456 = vsel %vm3440, %v3432, %v3448
    %v3457 = vsel %vm3441, %v3433, %v3449
    %s3458 = smul.u32 4, 128
    %s3459 = smul.u32 %s3458, 7
    %s3460 = sshll.u32 %s3459, 4
    %3461 = dma.done %s100, %s3460
    %v3462 = vld [vmem:[#allocation3] sm:$0xff]
    %v3463 = vld [vmem:[#allocation3 + $0x8] sm:$0xff]
    %v3464 = vld [vmem:[#allocation3 + $0x10] sm:$0xff]
    %v3465 = vld [vmem:[#allocation3 + $0x18] sm:$0xf]
    %v3466 = vld [vmem:[#allocation3 + $0x1c] sm:$0xff]
    %v3467 = vld [vmem:[#allocation3 + $0x24] sm:$0xff]
    %v3468 = vld [vmem:[#allocation3 + $0x2c] sm:$0xff]
    %v3469 = vld [vmem:[#allocation3 + $0x34] sm:$0xf]
    %v3470 = vld [vmem:[#allocation3 + $0x38] sm:$0xff]
    %v3471 = vld [vmem:[#allocation3 + $0x40] sm:$0xff]
    %v3472 = vld [vmem:[#allocation3 + $0x48] sm:$0xff]
    %v3473 = vld [vmem:[#allocation3 + $0x50] sm:$0xf]
    %v3474 = vld [vmem:[#allocation3 + $0x54] sm:$0xff]
    %v3475 = vld [vmem:[#allocation3 + $0x5c] sm:$0xff]
    %v3476 = vld [vmem:[#allocation3 + $0x64] sm:$0xff]
    %v3477 = vld [vmem:[#allocation3 + $0x6c] sm:$0xf]
    %v3478 = vld [vmem:[#allocation3 + $0x70] sm:$0xff]
    %v3479 = vld [vmem:[#allocation3 + $0x78] sm:$0xff]
    %v3480 = vld [vmem:[#allocation3 + $0x80] sm:$0xff]
    %v3481 = vld [vmem:[#allocation3 + $0x88] sm:$0xf]
    %v3482 = vld [vmem:[#allocation3 + $0x8c] sm:$0xff]
    %v3483 = vld [vmem:[#allocation3 + $0x94] sm:$0xff]
    %v3484 = vld [vmem:[#allocation3 + $0x9c] sm:$0xff]
    %v3485 = vld [vmem:[#allocation3 + $0xa4] sm:$0xf]
    %v3486 = vld [vmem:[#allocation3 + $0xa8] sm:$0xff]
    %v3487 = vld [vmem:[#allocation3 + $0xb0] sm:$0xff]
    %v3488 = vld [vmem:[#allocation3 + $0xb8] sm:$0xff]
    %v3489 = vld [vmem:[#allocation3 + $0xc0] sm:$0xf]
    %v3490 = vld [vmem:[#allocation3 + $0xc4] sm:$0xff]
    %v3491 = vld [vmem:[#allocation3 + $0xcc] sm:$0xff]
    %v3492 = vld [vmem:[#allocation3 + $0xd4] sm:$0xff]
    %v3493 = vld [vmem:[#allocation3 + $0xdc] sm:$0xf]
    %v3494 = vld [vmem:[#allocation3 + $0xe0] sm:$0xff]
    %v3495 = vld [vmem:[#allocation3 + $0xe8] sm:$0xff]
    %v3496 = vld [vmem:[#allocation3 + $0xf0] sm:$0xff]
    %v3497 = vld [vmem:[#allocation3 + $0xf8] sm:$0xf]
    %v3498 = vld [vmem:[#allocation3 + $0xfc] sm:$0xff]
    %v3499 = vld [vmem:[#allocation3 + $0x104] sm:$0xff]
    %v3500 = vld [vmem:[#allocation3 + $0x10c] sm:$0xff]
    %v3501 = vld [vmem:[#allocation3 + $0x114] sm:$0xf]
    %v3502 = vld [vmem:[#allocation3 + $0x118] sm:$0xff]
    %v3503 = vld [vmem:[#allocation3 + $0x120] sm:$0xff]
    %v3504 = vld [vmem:[#allocation3 + $0x128] sm:$0xff]
    %v3505 = vld [vmem:[#allocation3 + $0x130] sm:$0xf]
    %v3506 = vld [vmem:[#allocation3 + $0x134] sm:$0xff]
    %v3507 = vld [vmem:[#allocation3 + $0x13c] sm:$0xff]
    %v3508 = vld [vmem:[#allocation3 + $0x144] sm:$0xff]
    %v3509 = vld [vmem:[#allocation3 + $0x14c] sm:$0xf]
    %v3510 = vld [vmem:[#allocation3 + $0x150] sm:$0xff]
    %v3511 = vld [vmem:[#allocation3 + $0x158] sm:$0xff]
    %v3512 = vld [vmem:[#allocation3 + $0x160] sm:$0xff]
    %v3513 = vld [vmem:[#allocation3 + $0x168] sm:$0xf]
    %v3514 = vld [vmem:[#allocation3 + $0x16c] sm:$0xff]
    %v3515 = vld [vmem:[#allocation3 + $0x174] sm:$0xff]
    %v3516 = vld [vmem:[#allocation3 + $0x17c] sm:$0xff]
    %v3517 = vld [vmem:[#allocation3 + $0x184] sm:$0xf]
    %v3518 = vld [vmem:[#allocation3 + $0x188] sm:$0xff]
    %v3519 = vld [vmem:[#allocation3 + $0x190] sm:$0xff]
    %v3520 = vld [vmem:[#allocation3 + $0x198] sm:$0xff]
    %v3521 = vld [vmem:[#allocation3 + $0x1a0] sm:$0xf]
    %v3522 = vld [vmem:[#allocation3 + $0x1a4] sm:$0xff]
    %v3523 = vld [vmem:[#allocation3 + $0x1ac] sm:$0xff]
    %v3524 = vld [vmem:[#allocation3 + $0x1b4] sm:$0xff]
    %v3525 = vld [vmem:[#allocation3 + $0x1bc] sm:$0xf]
    %v3526 = vld [vmem:[#allocation3 + $0x1c0] sm:$0xff]
    %v3527 = vld [vmem:[#allocation3 + $0x1c8] sm:$0xff]
    %v3528 = vld [vmem:[#allocation3 + $0x1d0] sm:$0xff]
    %v3529 = vld [vmem:[#allocation3 + $0x1d8] sm:$0xf]
    %v3530 = vld [vmem:[#allocation3 + $0x1dc] sm:$0xff]
    %v3531 = vld [vmem:[#allocation3 + $0x1e4] sm:$0xff]
    %v3532 = vld [vmem:[#allocation3 + $0x1ec] sm:$0xff]
    %v3533 = vld [vmem:[#allocation3 + $0x1f4] sm:$0xf]
    %v3534 = vld [vmem:[#allocation3 + $0x1f8] sm:$0xff]
    %v3535 = vld [vmem:[#allocation3 + $0x200] sm:$0xff]
    %v3536 = vld [vmem:[#allocation3 + $0x208] sm:$0xff]
    %v3537 = vld [vmem:[#allocation3 + $0x210] sm:$0xf]
    %v3538 = vld [vmem:[#allocation3 + $0x214] sm:$0xff]
    %v3539 = vld [vmem:[#allocation3 + $0x21c] sm:$0xff]
    %v3540 = vld [vmem:[#allocation3 + $0x224] sm:$0xff]
    %v3541 = vld [vmem:[#allocation3 + $0x22c] sm:$0xf]
    %v3542 = vld [vmem:[#allocation3 + $0x230] sm:$0xff]
    %v3543 = vld [vmem:[#allocation3 + $0x238] sm:$0xff]
    %v3544 = vld [vmem:[#allocation3 + $0x240] sm:$0xff]
    %v3545 = vld [vmem:[#allocation3 + $0x248] sm:$0xf]
    %v3546 = vld [vmem:[#allocation3 + $0x24c] sm:$0xff]
    %v3547 = vld [vmem:[#allocation3 + $0x254] sm:$0xff]
    %v3548 = vld [vmem:[#allocation3 + $0x25c] sm:$0xff]
    %v3549 = vld [vmem:[#allocation3 + $0x264] sm:$0xf]
    %v3550 = vld [vmem:[#allocation3 + $0x268] sm:$0xff]
    %v3551 = vld [vmem:[#allocation3 + $0x270] sm:$0xff]
    %v3552 = vld [vmem:[#allocation3 + $0x278] sm:$0xff]
    %v3553 = vld [vmem:[#allocation3 + $0x280] sm:$0xf]
    %v3554 = vld [vmem:[#allocation3 + $0x284] sm:$0xff]
    %v3555 = vld [vmem:[#allocation3 + $0x28c] sm:$0xff]
    %v3556 = vld [vmem:[#allocation3 + $0x294] sm:$0xff]
    %v3557 = vld [vmem:[#allocation3 + $0x29c] sm:$0xf]
    %v3558 = vld [vmem:[#allocation3 + $0x2a0] sm:$0xff]
    %v3559 = vld [vmem:[#allocation3 + $0x2a8] sm:$0xff]
    %v3560 = vld [vmem:[#allocation3 + $0x2b0] sm:$0xff]
    %v3561 = vld [vmem:[#allocation3 + $0x2b8] sm:$0xf]
    %v3562 = vld [vmem:[#allocation3 + $0x2bc] sm:$0xff]
    %v3563 = vld [vmem:[#allocation3 + $0x2c4] sm:$0xff]
    %v3564 = vld [vmem:[#allocation3 + $0x2cc] sm:$0xff]
    %v3565 = vld [vmem:[#allocation3 + $0x2d4] sm:$0xf]
    %v3566 = vld [vmem:[#allocation3 + $0x2d8] sm:$0xff]
    %v3567 = vld [vmem:[#allocation3 + $0x2e0] sm:$0xff]
    %v3568 = vld [vmem:[#allocation3 + $0x2e8] sm:$0xff]
    %v3569 = vld [vmem:[#allocation3 + $0x2f0] sm:$0xf]
    %v3570 = vld [vmem:[#allocation3 + $0x2f4] sm:$0xff]
    %v3571 = vld [vmem:[#allocation3 + $0x2fc] sm:$0xff]
    %v3572 = vld [vmem:[#allocation3 + $0x304] sm:$0xff]
    %v3573 = vld [vmem:[#allocation3 + $0x30c] sm:$0xf]
    %v3574 = vld [vmem:[#allocation3 + $0x310] sm:$0xff]
    %v3575 = vld [vmem:[#allocation3 + $0x318] sm:$0xff]
    %v3576 = vld [vmem:[#allocation3 + $0x320] sm:$0xff]
    %v3577 = vld [vmem:[#allocation3 + $0x328] sm:$0xf]
    %v3578 = vld [vmem:[#allocation3 + $0x32c] sm:$0xff]
    %v3579 = vld [vmem:[#allocation3 + $0x334] sm:$0xff]
    %v3580 = vld [vmem:[#allocation3 + $0x33c] sm:$0xff]
    %v3581 = vld [vmem:[#allocation3 + $0x344] sm:$0xf]
    %v3582 = vld [vmem:[#allocation3 + $0x348] sm:$0xff]
    %v3583 = vld [vmem:[#allocation3 + $0x350] sm:$0xff]
    %v3584 = vld [vmem:[#allocation3 + $0x358] sm:$0xff]
    %v3585 = vld [vmem:[#allocation3 + $0x360] sm:$0xf]
    %v3586 = vld [vmem:[#allocation3 + $0x364] sm:$0xff]
    %v3587 = vld [vmem:[#allocation3 + $0x36c] sm:$0xff]
    %v3588 = vld [vmem:[#allocation3 + $0x374] sm:$0xff]
    %v3589 = vld [vmem:[#allocation3 + $0x37c] sm:$0xf]
    %v3590 = vld [vmem:[#allocation3 + $0x380] sm:$0xff]
    %v3591 = vld [vmem:[#allocation3 + $0x388] sm:$0xff]
    %v3592 = vld [vmem:[#allocation3 + $0x390] sm:$0xff]
    %v3593 = vld [vmem:[#allocation3 + $0x398] sm:$0xf]
    %v3594 = vld [vmem:[#allocation3 + $0x39c] sm:$0xff]
    %v3595 = vld [vmem:[#allocation3 + $0x3a4] sm:$0xff]
    %v3596 = vld [vmem:[#allocation3 + $0x3ac] sm:$0xff]
    %v3597 = vld [vmem:[#allocation3 + $0x3b4] sm:$0xf]
    %v3598 = vld [vmem:[#allocation3 + $0x3b8] sm:$0xff]
    %v3599 = vld [vmem:[#allocation3 + $0x3c0] sm:$0xff]
    %v3600 = vld [vmem:[#allocation3 + $0x3c8] sm:$0xff]
    %v3601 = vld [vmem:[#allocation3 + $0x3d0] sm:$0xf]
    %v3602 = vld [vmem:[#allocation3 + $0x3d4] sm:$0xff]
    %v3603 = vld [vmem:[#allocation3 + $0x3dc] sm:$0xff]
    %v3604 = vld [vmem:[#allocation3 + $0x3e4] sm:$0xff]
    %v3605 = vld [vmem:[#allocation3 + $0x3ec] sm:$0xf]
    %v3606 = vld [vmem:[#allocation3 + $0x3f0] sm:$0xff]
    %v3607 = vld [vmem:[#allocation3 + $0x3f8] sm:$0xff]
    %v3608 = vld [vmem:[#allocation3 + $0x400] sm:$0xff]
    %v3609 = vld [vmem:[#allocation3 + $0x408] sm:$0xf]
    %v3610 = vld [vmem:[#allocation3 + $0x40c] sm:$0xff]
    %v3611 = vld [vmem:[#allocation3 + $0x414] sm:$0xff]
    %v3612 = vld [vmem:[#allocation3 + $0x41c] sm:$0xff]
    %v3613 = vld [vmem:[#allocation3 + $0x424] sm:$0xf]
    %v3614 = vld [vmem:[#allocation3 + $0x428] sm:$0xff]
    %v3615 = vld [vmem:[#allocation3 + $0x430] sm:$0xff]
    %v3616 = vld [vmem:[#allocation3 + $0x438] sm:$0xff]
    %v3617 = vld [vmem:[#allocation3 + $0x440] sm:$0xf]
    %v3618 = vld [vmem:[#allocation3 + $0x444] sm:$0xff]
    %v3619 = vld [vmem:[#allocation3 + $0x44c] sm:$0xff]
    %v3620 = vld [vmem:[#allocation3 + $0x454] sm:$0xff]
    %v3621 = vld [vmem:[#allocation3 + $0x45c] sm:$0xf]
    %v3622 = vld [vmem:[#allocation3 + $0x460] sm:$0xff]
    %v3623 = vld [vmem:[#allocation3 + $0x468] sm:$0xff]
    %v3624 = vld [vmem:[#allocation3 + $0x470] sm:$0xff]
    %v3625 = vld [vmem:[#allocation3 + $0x478] sm:$0xf]
    %v3626 = vld [vmem:[#allocation3 + $0x47c] sm:$0xff]
    %v3627 = vld [vmem:[#allocation3 + $0x484] sm:$0xff]
    %v3628 = vld [vmem:[#allocation3 + $0x48c] sm:$0xff]
    %v3629 = vld [vmem:[#allocation3 + $0x494] sm:$0xf]
    %v3630 = vld [vmem:[#allocation3 + $0x498] sm:$0xff]
    %v3631 = vld [vmem:[#allocation3 + $0x4a0] sm:$0xff]
    %v3632 = vld [vmem:[#allocation3 + $0x4a8] sm:$0xff]
    %v3633 = vld [vmem:[#allocation3 + $0x4b0] sm:$0xf]
    %v3634 = vld [vmem:[#allocation3 + $0x4b4] sm:$0xff]
    %v3635 = vld [vmem:[#allocation3 + $0x4bc] sm:$0xff]
    %v3636 = vld [vmem:[#allocation3 + $0x4c4] sm:$0xff]
    %v3637 = vld [vmem:[#allocation3 + $0x4cc] sm:$0xf]
    %v3638 = vld [vmem:[#allocation3 + $0x4d0] sm:$0xff]
    %v3639 = vld [vmem:[#allocation3 + $0x4d8] sm:$0xff]
    %v3640 = vld [vmem:[#allocation3 + $0x4e0] sm:$0xff]
    %v3641 = vld [vmem:[#allocation3 + $0x4e8] sm:$0xf]
    %v3642 = vld [vmem:[#allocation3 + $0x4ec] sm:$0xff]
    %v3643 = vld [vmem:[#allocation3 + $0x4f4] sm:$0xff]
    %v3644 = vld [vmem:[#allocation3 + $0x4fc] sm:$0xff]
    %v3645 = vld [vmem:[#allocation3 + $0x504] sm:$0xf]
    %v3646 = vld [vmem:[#allocation3 + $0x508] sm:$0xff]
    %v3647 = vld [vmem:[#allocation3 + $0x510] sm:$0xff]
    %v3648 = vld [vmem:[#allocation3 + $0x518] sm:$0xff]
    %v3649 = vld [vmem:[#allocation3 + $0x520] sm:$0xf]
    %v3650 = vld [vmem:[#allocation3 + $0x524] sm:$0xff]
    %v3651 = vld [vmem:[#allocation3 + $0x52c] sm:$0xff]
    %v3652 = vld [vmem:[#allocation3 + $0x534] sm:$0xff]
    %v3653 = vld [vmem:[#allocation3 + $0x53c] sm:$0xf]
    %v3654 = vld [vmem:[#allocation3 + $0x540] sm:$0xff]
    %v3655 = vld [vmem:[#allocation3 + $0x548] sm:$0xff]
    %v3656 = vld [vmem:[#allocation3 + $0x550] sm:$0xff]
    %v3657 = vld [vmem:[#allocation3 + $0x558] sm:$0xf]
    %v3658 = vld [vmem:[#allocation3 + $0x55c] sm:$0xff]
    %v3659 = vld [vmem:[#allocation3 + $0x564] sm:$0xff]
    %v3660 = vld [vmem:[#allocation3 + $0x56c] sm:$0xff]
    %v3661 = vld [vmem:[#allocation3 + $0x574] sm:$0xf]
    %v3662 = vld [vmem:[#allocation3 + $0x578] sm:$0xff]
    %v3663 = vld [vmem:[#allocation3 + $0x580] sm:$0xff]
    %v3664 = vld [vmem:[#allocation3 + $0x588] sm:$0xff]
    %v3665 = vld [vmem:[#allocation3 + $0x590] sm:$0xf]
    %v3666 = vld [vmem:[#allocation3 + $0x594] sm:$0xff]
    %v3667 = vld [vmem:[#allocation3 + $0x59c] sm:$0xff]
    %v3668 = vld [vmem:[#allocation3 + $0x5a4] sm:$0xff]
    %v3669 = vld [vmem:[#allocation3 + $0x5ac] sm:$0xf]
    %v3670 = vld [vmem:[#allocation3 + $0x5b0] sm:$0xff]
    %v3671 = vld [vmem:[#allocation3 + $0x5b8] sm:$0xff]
    %v3672 = vld [vmem:[#allocation3 + $0x5c0] sm:$0xff]
    %v3673 = vld [vmem:[#allocation3 + $0x5c8] sm:$0xf]
    %v3674 = vld [vmem:[#allocation3 + $0x5cc] sm:$0xff]
    %v3675 = vld [vmem:[#allocation3 + $0x5d4] sm:$0xff]
    %v3676 = vld [vmem:[#allocation3 + $0x5dc] sm:$0xff]
    %v3677 = vld [vmem:[#allocation3 + $0x5e4] sm:$0xf]
    %v3678 = vld [vmem:[#allocation3 + $0x5e8] sm:$0xff]
    %v3679 = vld [vmem:[#allocation3 + $0x5f0] sm:$0xff]
    %v3680 = vld [vmem:[#allocation3 + $0x5f8] sm:$0xff]
    %v3681 = vld [vmem:[#allocation3 + $0x600] sm:$0xf]
    %v3682 = vld [vmem:[#allocation3 + $0x604] sm:$0xff]
    %v3683 = vld [vmem:[#allocation3 + $0x60c] sm:$0xff]
    %v3684 = vld [vmem:[#allocation3 + $0x614] sm:$0xff]
    %v3685 = vld [vmem:[#allocation3 + $0x61c] sm:$0xf]
    %v3686 = vld [vmem:[#allocation3 + $0x620] sm:$0xff]
    %v3687 = vld [vmem:[#allocation3 + $0x628] sm:$0xff]
    %v3688 = vld [vmem:[#allocation3 + $0x630] sm:$0xff]
    %v3689 = vld [vmem:[#allocation3 + $0x638] sm:$0xf]
    %v3690 = vld [vmem:[#allocation3 + $0x63c] sm:$0xff]
    %v3691 = vld [vmem:[#allocation3 + $0x644] sm:$0xff]
    %v3692 = vld [vmem:[#allocation3 + $0x64c] sm:$0xff]
    %v3693 = vld [vmem:[#allocation3 + $0x654] sm:$0xf]
    %v3694 = vld [vmem:[#allocation3 + $0x658] sm:$0xff]
    %v3695 = vld [vmem:[#allocation3 + $0x660] sm:$0xff]
    %v3696 = vld [vmem:[#allocation3 + $0x668] sm:$0xff]
    %v3697 = vld [vmem:[#allocation3 + $0x670] sm:$0xf]
    %v3698 = vld [vmem:[#allocation3 + $0x674] sm:$0xff]
    %v3699 = vld [vmem:[#allocation3 + $0x67c] sm:$0xff]
    %v3700 = vld [vmem:[#allocation3 + $0x684] sm:$0xff]
    %v3701 = vld [vmem:[#allocation3 + $0x68c] sm:$0xf]
    %v3702 = vld [vmem:[#allocation3 + $0x690] sm:$0xff]
    %v3703 = vld [vmem:[#allocation3 + $0x698] sm:$0xff]
    %v3704 = vld [vmem:[#allocation3 + $0x6a0] sm:$0xff]
    %v3705 = vld [vmem:[#allocation3 + $0x6a8] sm:$0xf]
    %v3706 = vld [vmem:[#allocation3 + $0x6ac] sm:$0xff]
    %v3707 = vld [vmem:[#allocation3 + $0x6b4] sm:$0xff]
    %v3708 = vld [vmem:[#allocation3 + $0x6bc] sm:$0xff]
    %v3709 = vld [vmem:[#allocation3 + $0x6c4] sm:$0xf]
    %v3710 = vld [vmem:[#allocation3 + $0x6c8] sm:$0xff]
    %v3711 = vld [vmem:[#allocation3 + $0x6d0] sm:$0xff]
    %v3712 = vld [vmem:[#allocation3 + $0x6d8] sm:$0xff]
    %v3713 = vld [vmem:[#allocation3 + $0x6e0] sm:$0xf]
    %v3714 = vld [vmem:[#allocation3 + $0x6e4] sm:$0xff]
    %v3715 = vld [vmem:[#allocation3 + $0x6ec] sm:$0xff]
    %v3716 = vld [vmem:[#allocation3 + $0x6f4] sm:$0xff]
    %v3717 = vld [vmem:[#allocation3 + $0x6fc] sm:$0xf]
    %v3718 = vld [vmem:[#allocation3 + $0x700] sm:$0xff]
    %v3719 = vld [vmem:[#allocation3 + $0x708] sm:$0xff]
    %v3720 = vld [vmem:[#allocation3 + $0x710] sm:$0xff]
    %v3721 = vld [vmem:[#allocation3 + $0x718] sm:$0xf]
    %v3722 = vld [vmem:[#allocation3 + $0x71c] sm:$0xff]
    %v3723 = vld [vmem:[#allocation3 + $0x724] sm:$0xff]
    %v3724 = vld [vmem:[#allocation3 + $0x72c] sm:$0xff]
    %v3725 = vld [vmem:[#allocation3 + $0x734] sm:$0xf]
    %v3726 = vld [vmem:[#allocation3 + $0x738] sm:$0xff]
    %v3727 = vld [vmem:[#allocation3 + $0x740] sm:$0xff]
    %v3728 = vld [vmem:[#allocation3 + $0x748] sm:$0xff]
    %v3729 = vld [vmem:[#allocation3 + $0x750] sm:$0xf]
    %v3730 = vld [vmem:[#allocation3 + $0x754] sm:$0xff]
    %v3731 = vld [vmem:[#allocation3 + $0x75c] sm:$0xff]
    %v3732 = vld [vmem:[#allocation3 + $0x764] sm:$0xff]
    %v3733 = vld [vmem:[#allocation3 + $0x76c] sm:$0xf]
    %v3734 = vld [vmem:[#allocation3 + $0x770] sm:$0xff]
    %v3735 = vld [vmem:[#allocation3 + $0x778] sm:$0xff]
    %v3736 = vld [vmem:[#allocation3 + $0x780] sm:$0xff]
    %v3737 = vld [vmem:[#allocation3 + $0x788] sm:$0xf]
    %v3738 = vld [vmem:[#allocation3 + $0x78c] sm:$0xff]
    %v3739 = vld [vmem:[#allocation3 + $0x794] sm:$0xff]
    %v3740 = vld [vmem:[#allocation3 + $0x79c] sm:$0xff]
    %v3741 = vld [vmem:[#allocation3 + $0x7a4] sm:$0xf]
    %v3742 = vld [vmem:[#allocation3 + $0x7a8] sm:$0xff]
    %v3743 = vld [vmem:[#allocation3 + $0x7b0] sm:$0xff]
    %v3744 = vld [vmem:[#allocation3 + $0x7b8] sm:$0xff]
    %v3745 = vld [vmem:[#allocation3 + $0x7c0] sm:$0xf]
    %v3746 = vld [vmem:[#allocation3 + $0x7c4] sm:$0xff]
    %v3747 = vld [vmem:[#allocation3 + $0x7cc] sm:$0xff]
    %v3748 = vld [vmem:[#allocation3 + $0x7d4] sm:$0xff]
    %v3749 = vld [vmem:[#allocation3 + $0x7dc] sm:$0xf]
    %v3750 = vld [vmem:[#allocation3 + $0x7e0] sm:$0xff]
    %v3751 = vld [vmem:[#allocation3 + $0x7e8] sm:$0xff]
    %v3752 = vld [vmem:[#allocation3 + $0x7f0] sm:$0xff]
    %v3753 = vld [vmem:[#allocation3 + $0x7f8] sm:$0xf]
    %v3754 = vld [vmem:[#allocation3 + $0x7fc] sm:$0xff]
    %v3755 = vld [vmem:[#allocation3 + $0x804] sm:$0xff]
    %v3756 = vld [vmem:[#allocation3 + $0x80c] sm:$0xff]
    %v3757 = vld [vmem:[#allocation3 + $0x814] sm:$0xf]
    %v3758 = vld [vmem:[#allocation3 + $0x818] sm:$0xff]
    %v3759 = vld [vmem:[#allocation3 + $0x820] sm:$0xff]
    %v3760 = vld [vmem:[#allocation3 + $0x828] sm:$0xff]
    %v3761 = vld [vmem:[#allocation3 + $0x830] sm:$0xf]
    %v3762 = vld [vmem:[#allocation3 + $0x834] sm:$0xff]
    %v3763 = vld [vmem:[#allocation3 + $0x83c] sm:$0xff]
    %v3764 = vld [vmem:[#allocation3 + $0x844] sm:$0xff]
    %v3765 = vld [vmem:[#allocation3 + $0x84c] sm:$0xf]
    %v3766 = vld [vmem:[#allocation3 + $0x850] sm:$0xff]
    %v3767 = vld [vmem:[#allocation3 + $0x858] sm:$0xff]
    %v3768 = vld [vmem:[#allocation3 + $0x860] sm:$0xff]
    %v3769 = vld [vmem:[#allocation3 + $0x868] sm:$0xf]
    %v3770 = vld [vmem:[#allocation3 + $0x86c] sm:$0xff]
    %v3771 = vld [vmem:[#allocation3 + $0x874] sm:$0xff]
    %v3772 = vld [vmem:[#allocation3 + $0x87c] sm:$0xff]
    %v3773 = vld [vmem:[#allocation3 + $0x884] sm:$0xf]
    %v3774 = vld [vmem:[#allocation3 + $0x888] sm:$0xff]
    %v3775 = vld [vmem:[#allocation3 + $0x890] sm:$0xff]
    %v3776 = vld [vmem:[#allocation3 + $0x898] sm:$0xff]
    %v3777 = vld [vmem:[#allocation3 + $0x8a0] sm:$0xf]
    %v3778 = vld [vmem:[#allocation3 + $0x8a4] sm:$0xff]
    %v3779 = vld [vmem:[#allocation3 + $0x8ac] sm:$0xff]
    %v3780 = vld [vmem:[#allocation3 + $0x8b4] sm:$0xff]
    %v3781 = vld [vmem:[#allocation3 + $0x8bc] sm:$0xf]
    %v3782 = vld [vmem:[#allocation3 + $0x8c0] sm:$0xff]
    %v3783 = vld [vmem:[#allocation3 + $0x8c8] sm:$0xff]
    %v3784 = vld [vmem:[#allocation3 + $0x8d0] sm:$0xff]
    %v3785 = vld [vmem:[#allocation3 + $0x8d8] sm:$0xf]
    %v3786 = vld [vmem:[#allocation3 + $0x8dc] sm:$0xff]
    %v3787 = vld [vmem:[#allocation3 + $0x8e4] sm:$0xff]
    %v3788 = vld [vmem:[#allocation3 + $0x8ec] sm:$0xff]
    %v3789 = vld [vmem:[#allocation3 + $0x8f4] sm:$0xf]
    %v3790 = vld [vmem:[#allocation3 + $0x8f8] sm:$0xff]
    %v3791 = vld [vmem:[#allocation3 + $0x900] sm:$0xff]
    %v3792 = vld [vmem:[#allocation3 + $0x908] sm:$0xff]
    %v3793 = vld [vmem:[#allocation3 + $0x910] sm:$0xf]
    %v3794 = vld [vmem:[#allocation3 + $0x914] sm:$0xff]
    %v3795 = vld [vmem:[#allocation3 + $0x91c] sm:$0xff]
    %v3796 = vld [vmem:[#allocation3 + $0x924] sm:$0xff]
    %v3797 = vld [vmem:[#allocation3 + $0x92c] sm:$0xf]
    %v3798 = vld [vmem:[#allocation3 + $0x930] sm:$0xff]
    %v3799 = vld [vmem:[#allocation3 + $0x938] sm:$0xff]
    %v3800 = vld [vmem:[#allocation3 + $0x940] sm:$0xff]
    %v3801 = vld [vmem:[#allocation3 + $0x948] sm:$0xf]
    %v3802 = vld [vmem:[#allocation3 + $0x94c] sm:$0xff]
    %v3803 = vld [vmem:[#allocation3 + $0x954] sm:$0xff]
    %v3804 = vld [vmem:[#allocation3 + $0x95c] sm:$0xff]
    %v3805 = vld [vmem:[#allocation3 + $0x964] sm:$0xf]
    %v3806 = vld [vmem:[#allocation3 + $0x968] sm:$0xff]
    %v3807 = vld [vmem:[#allocation3 + $0x970] sm:$0xff]
    %v3808 = vld [vmem:[#allocation3 + $0x978] sm:$0xff]
    %v3809 = vld [vmem:[#allocation3 + $0x980] sm:$0xf]
    %v3810 = vld [vmem:[#allocation3 + $0x984] sm:$0xff]
    %v3811 = vld [vmem:[#allocation3 + $0x98c] sm:$0xff]
    %v3812 = vld [vmem:[#allocation3 + $0x994] sm:$0xff]
    %v3813 = vld [vmem:[#allocation3 + $0x99c] sm:$0xf]
    %v3814 = vld [vmem:[#allocation3 + $0x9a0] sm:$0xff]
    %v3815 = vld [vmem:[#allocation3 + $0x9a8] sm:$0xff]
    %v3816 = vld [vmem:[#allocation3 + $0x9b0] sm:$0xff]
    %v3817 = vld [vmem:[#allocation3 + $0x9b8] sm:$0xf]
    %v3818 = vld [vmem:[#allocation3 + $0x9bc] sm:$0xff]
    %v3819 = vld [vmem:[#allocation3 + $0x9c4] sm:$0xff]
    %v3820 = vld [vmem:[#allocation3 + $0x9cc] sm:$0xff]
    %v3821 = vld [vmem:[#allocation3 + $0x9d4] sm:$0xf]
    %v3822 = vld [vmem:[#allocation3 + $0x9d8] sm:$0xff]
    %v3823 = vld [vmem:[#allocation3 + $0x9e0] sm:$0xff]
    %v3824 = vld [vmem:[#allocation3 + $0x9e8] sm:$0xff]
    %v3825 = vld [vmem:[#allocation3 + $0x9f0] sm:$0xf]
    %v3826 = vld [vmem:[#allocation3 + $0x9f4] sm:$0xff]
    %v3827 = vld [vmem:[#allocation3 + $0x9fc] sm:$0xff]
    %v3828 = vld [vmem:[#allocation3 + $0xa04] sm:$0xff]
    %v3829 = vld [vmem:[#allocation3 + $0xa0c] sm:$0xf]
    %v3830 = vld [vmem:[#allocation3 + $0xa10] sm:$0xff]
    %v3831 = vld [vmem:[#allocation3 + $0xa18] sm:$0xff]
    %v3832 = vld [vmem:[#allocation3 + $0xa20] sm:$0xff]
    %v3833 = vld [vmem:[#allocation3 + $0xa28] sm:$0xf]
    %v3834 = vld [vmem:[#allocation3 + $0xa2c] sm:$0xff]
    %v3835 = vld [vmem:[#allocation3 + $0xa34] sm:$0xff]
    %v3836 = vld [vmem:[#allocation3 + $0xa3c] sm:$0xff]
    %v3837 = vld [vmem:[#allocation3 + $0xa44] sm:$0xf]
    %v3838 = vld [vmem:[#allocation3 + $0xa48] sm:$0xff]
    %v3839 = vld [vmem:[#allocation3 + $0xa50] sm:$0xff]
    %v3840 = vld [vmem:[#allocation3 + $0xa58] sm:$0xff]
    %v3841 = vld [vmem:[#allocation3 + $0xa60] sm:$0xf]
    %v3842 = vld [vmem:[#allocation3 + $0xa64] sm:$0xff]
    %v3843 = vld [vmem:[#allocation3 + $0xa6c] sm:$0xff]
    %v3844 = vld [vmem:[#allocation3 + $0xa74] sm:$0xff]
    %v3845 = vld [vmem:[#allocation3 + $0xa7c] sm:$0xf]
    %v3846 = vld [vmem:[#allocation3 + $0xa80] sm:$0xff]
    %v3847 = vld [vmem:[#allocation3 + $0xa88] sm:$0xff]
    %v3848 = vld [vmem:[#allocation3 + $0xa90] sm:$0xff]
    %v3849 = vld [vmem:[#allocation3 + $0xa98] sm:$0xf]
    %v3850 = vld [vmem:[#allocation3 + $0xa9c] sm:$0xff]
    %v3851 = vld [vmem:[#allocation3 + $0xaa4] sm:$0xff]
    %v3852 = vld [vmem:[#allocation3 + $0xaac] sm:$0xff]
    %v3853 = vld [vmem:[#allocation3 + $0xab4] sm:$0xf]
    %v3854 = vld [vmem:[#allocation3 + $0xab8] sm:$0xff]
    %v3855 = vld [vmem:[#allocation3 + $0xac0] sm:$0xff]
    %v3856 = vld [vmem:[#allocation3 + $0xac8] sm:$0xff]
    %v3857 = vld [vmem:[#allocation3 + $0xad0] sm:$0xf]
    %v3858 = vld [vmem:[#allocation3 + $0xad4] sm:$0xff]
    %v3859 = vld [vmem:[#allocation3 + $0xadc] sm:$0xff]
    %v3860 = vld [vmem:[#allocation3 + $0xae4] sm:$0xff]
    %v3861 = vld [vmem:[#allocation3 + $0xaec] sm:$0xf]
    %v3862 = vld [vmem:[#allocation3 + $0xaf0] sm:$0xff]
    %v3863 = vld [vmem:[#allocation3 + $0xaf8] sm:$0xff]
    %v3864 = vld [vmem:[#allocation3 + $0xb00] sm:$0xff]
    %v3865 = vld [vmem:[#allocation3 + $0xb08] sm:$0xf]
    %v3866 = vld [vmem:[#allocation3 + $0xb0c] sm:$0xff]
    %v3867 = vld [vmem:[#allocation3 + $0xb14] sm:$0xff]
    %v3868 = vld [vmem:[#allocation3 + $0xb1c] sm:$0xff]
    %v3869 = vld [vmem:[#allocation3 + $0xb24] sm:$0xf]
    %v3870 = vld [vmem:[#allocation3 + $0xb28] sm:$0xff]
    %v3871 = vld [vmem:[#allocation3 + $0xb30] sm:$0xff]
    %v3872 = vld [vmem:[#allocation3 + $0xb38] sm:$0xff]
    %v3873 = vld [vmem:[#allocation3 + $0xb40] sm:$0xf]
    %v3874 = vld [vmem:[#allocation3 + $0xb44] sm:$0xff]
    %v3875 = vld [vmem:[#allocation3 + $0xb4c] sm:$0xff]
    %v3876 = vld [vmem:[#allocation3 + $0xb54] sm:$0xff]
    %v3877 = vld [vmem:[#allocation3 + $0xb5c] sm:$0xf]
    %v3878 = vld [vmem:[#allocation3 + $0xb60] sm:$0xff]
    %v3879 = vld [vmem:[#allocation3 + $0xb68] sm:$0xff]
    %v3880 = vld [vmem:[#allocation3 + $0xb70] sm:$0xff]
    %v3881 = vld [vmem:[#allocation3 + $0xb78] sm:$0xf]
    %v3882 = vld [vmem:[#allocation3 + $0xb7c] sm:$0xff]
    %v3883 = vld [vmem:[#allocation3 + $0xb84] sm:$0xff]
    %v3884 = vld [vmem:[#allocation3 + $0xb8c] sm:$0xff]
    %v3885 = vld [vmem:[#allocation3 + $0xb94] sm:$0xf]
    %v3886 = vld [vmem:[#allocation3 + $0xb98] sm:$0xff]
    %v3887 = vld [vmem:[#allocation3 + $0xba0] sm:$0xff]
    %v3888 = vld [vmem:[#allocation3 + $0xba8] sm:$0xff]
    %v3889 = vld [vmem:[#allocation3 + $0xbb0] sm:$0xf]
    %v3890 = vld [vmem:[#allocation3 + $0xbb4] sm:$0xff]
    %v3891 = vld [vmem:[#allocation3 + $0xbbc] sm:$0xff]
    %v3892 = vld [vmem:[#allocation3 + $0xbc4] sm:$0xff]
    %v3893 = vld [vmem:[#allocation3 + $0xbcc] sm:$0xf]
    %v3894 = vld [vmem:[#allocation3 + $0xbd0] sm:$0xff]
    %v3895 = vld [vmem:[#allocation3 + $0xbd8] sm:$0xff]
    %v3896 = vld [vmem:[#allocation3 + $0xbe0] sm:$0xff]
    %v3897 = vld [vmem:[#allocation3 + $0xbe8] sm:$0xf]
    %v3898 = vld [vmem:[#allocation3 + $0xbec] sm:$0xff]
    %v3899 = vld [vmem:[#allocation3 + $0xbf4] sm:$0xff]
    %v3900 = vld [vmem:[#allocation3 + $0xbfc] sm:$0xff]
    %v3901 = vld [vmem:[#allocation3 + $0xc04] sm:$0xf]
    %v3902 = vld [vmem:[#allocation3 + $0xc08] sm:$0xff]
    %v3903 = vld [vmem:[#allocation3 + $0xc10] sm:$0xff]
    %v3904 = vld [vmem:[#allocation3 + $0xc18] sm:$0xff]
    %v3905 = vld [vmem:[#allocation3 + $0xc20] sm:$0xf]
    %v3906 = vld [vmem:[#allocation3 + $0xc24] sm:$0xff]
    %v3907 = vld [vmem:[#allocation3 + $0xc2c] sm:$0xff]
    %v3908 = vld [vmem:[#allocation3 + $0xc34] sm:$0xff]
    %v3909 = vld [vmem:[#allocation3 + $0xc3c] sm:$0xf]
    %v3910 = vld [vmem:[#allocation3 + $0xc40] sm:$0xff]
    %v3911 = vld [vmem:[#allocation3 + $0xc48] sm:$0xff]
    %v3912 = vld [vmem:[#allocation3 + $0xc50] sm:$0xff]
    %v3913 = vld [vmem:[#allocation3 + $0xc58] sm:$0xf]
    %v3914 = vld [vmem:[#allocation3 + $0xc5c] sm:$0xff]
    %v3915 = vld [vmem:[#allocation3 + $0xc64] sm:$0xff]
    %v3916 = vld [vmem:[#allocation3 + $0xc6c] sm:$0xff]
    %v3917 = vld [vmem:[#allocation3 + $0xc74] sm:$0xf]
    %v3918 = vld [vmem:[#allocation3 + $0xc78] sm:$0xff]
    %v3919 = vld [vmem:[#allocation3 + $0xc80] sm:$0xff]
    %v3920 = vld [vmem:[#allocation3 + $0xc88] sm:$0xff]
    %v3921 = vld [vmem:[#allocation3 + $0xc90] sm:$0xf]
    %v3922 = vld [vmem:[#allocation3 + $0xc94] sm:$0xff]
    %v3923 = vld [vmem:[#allocation3 + $0xc9c] sm:$0xff]
    %v3924 = vld [vmem:[#allocation3 + $0xca4] sm:$0xff]
    %v3925 = vld [vmem:[#allocation3 + $0xcac] sm:$0xf]
    %v3926 = vld [vmem:[#allocation3 + $0xcb0] sm:$0xff]
    %v3927 = vld [vmem:[#allocation3 + $0xcb8] sm:$0xff]
    %v3928 = vld [vmem:[#allocation3 + $0xcc0] sm:$0xff]
    %v3929 = vld [vmem:[#allocation3 + $0xcc8] sm:$0xf]
    %v3930 = vld [vmem:[#allocation3 + $0xccc] sm:$0xff]
    %v3931 = vld [vmem:[#allocation3 + $0xcd4] sm:$0xff]
    %v3932 = vld [vmem:[#allocation3 + $0xcdc] sm:$0xff]
    %v3933 = vld [vmem:[#allocation3 + $0xce4] sm:$0xf]
    %v3934 = vld [vmem:[#allocation3 + $0xce8] sm:$0xff]
    %v3935 = vld [vmem:[#allocation3 + $0xcf0] sm:$0xff]
    %v3936 = vld [vmem:[#allocation3 + $0xcf8] sm:$0xff]
    %v3937 = vld [vmem:[#allocation3 + $0xd00] sm:$0xf]
    %v3938 = vld [vmem:[#allocation3 + $0xd04] sm:$0xff]
    %v3939 = vld [vmem:[#allocation3 + $0xd0c] sm:$0xff]
    %v3940 = vld [vmem:[#allocation3 + $0xd14] sm:$0xff]
    %v3941 = vld [vmem:[#allocation3 + $0xd1c] sm:$0xf]
    %v3942 = vld [vmem:[#allocation3 + $0xd20] sm:$0xff]
    %v3943 = vld [vmem:[#allocation3 + $0xd28] sm:$0xff]
    %v3944 = vld [vmem:[#allocation3 + $0xd30] sm:$0xff]
    %v3945 = vld [vmem:[#allocation3 + $0xd38] sm:$0xf]
    %v3946 = vld [vmem:[#allocation3 + $0xd3c] sm:$0xff]
    %v3947 = vld [vmem:[#allocation3 + $0xd44] sm:$0xff]
    %v3948 = vld [vmem:[#allocation3 + $0xd4c] sm:$0xff]
    %v3949 = vld [vmem:[#allocation3 + $0xd54] sm:$0xf]
    %v3950 = vld [vmem:[#allocation3 + $0xd58] sm:$0xff]
    %v3951 = vld [vmem:[#allocation3 + $0xd60] sm:$0xff]
    %v3952 = vld [vmem:[#allocation3 + $0xd68] sm:$0xff]
    %v3953 = vld [vmem:[#allocation3 + $0xd70] sm:$0xf]
    %v3954 = vld [vmem:[#allocation3 + $0xd74] sm:$0xff]
    %v3955 = vld [vmem:[#allocation3 + $0xd7c] sm:$0xff]
    %v3956 = vld [vmem:[#allocation3 + $0xd84] sm:$0xff]
    %v3957 = vld [vmem:[#allocation3 + $0xd8c] sm:$0xf]
    %v3958 = vld [vmem:[#allocation3 + $0xd90] sm:$0xff]
    %v3959 = vld [vmem:[#allocation3 + $0xd98] sm:$0xff]
    %v3960 = vld [vmem:[#allocation3 + $0xda0] sm:$0xff]
    %v3961 = vld [vmem:[#allocation3 + $0xda8] sm:$0xf]
    %v3962 = vld [vmem:[#allocation3 + $0xdac] sm:$0xff]
    %v3963 = vld [vmem:[#allocation3 + $0xdb4] sm:$0xff]
    %v3964 = vld [vmem:[#allocation3 + $0xdbc] sm:$0xff]
    %v3965 = vld [vmem:[#allocation3 + $0xdc4] sm:$0xf]
    %v3966 = vld [vmem:[#allocation3 + $0xdc8] sm:$0xff]
    %v3967 = vld [vmem:[#allocation3 + $0xdd0] sm:$0xff]
    %v3968 = vld [vmem:[#allocation3 + $0xdd8] sm:$0xff]
    %v3969 = vld [vmem:[#allocation3 + $0xde0] sm:$0xf]
    %v3970 = vld [vmem:[#allocation3 + $0xde4] sm:$0xff]
    %v3971 = vld [vmem:[#allocation3 + $0xdec] sm:$0xff]
    %v3972 = vld [vmem:[#allocation3 + $0xdf4] sm:$0xff]
    %v3973 = vld [vmem:[#allocation3 + $0xdfc] sm:$0xf]
    %v3974 = vpack.c.bf16 %v3450, %v3450
    %v3975 = vpack.c.bf16 %v3451, %v3451
    %v3976 = vpack.c.bf16 %v3452, %v3452
    %v3977 = vpack.c.bf16 %v3453, %v3453
    %v3978 = vpack.c.bf16 %v3454, %v3454
    %v3979 = vpack.c.bf16 %v3455, %v3455
    %v3980 = vpack.c.bf16 %v3456, %v3456
    %v3981 = vpack.c.bf16 %v3457, %v3457
    %v3983 = vperm.slane %v158, 0
    %v3984 = vperm.slane %v158, 1
    %v3985 = vperm.slane %v158, 2
    %v3986 = vperm.slane %v158, 3
    %v3987 = vperm.slane %v158, 4
    %v3988 = vperm.slane %v158, 5
    %v3989 = vperm.slane %v158, 6
    %v4509 = vunpack.c.l.b16 %v3462
    %v4510 = vunpack.c.h.b16 %v3462
    %v4511 = vunpack.c.l.b16 %v3463
    %v4512 = vunpack.c.h.b16 %v3463
    %v4513 = vunpack.c.l.b16 %v3464
    %v4514 = vunpack.c.h.b16 %v3464
    %v4515 = vunpack.c.l.b16 %v3465
    %v4516 = vunpack.c.l.b16 %v3466
    %v4517 = vunpack.c.h.b16 %v3466
    %v4518 = vunpack.c.l.b16 %v3467
    %v4519 = vunpack.c.h.b16 %v3467
    %v4520 = vunpack.c.l.b16 %v3468
    %v4521 = vunpack.c.h.b16 %v3468
    %v4522 = vunpack.c.l.b16 %v3469
    %v4523 = vunpack.c.l.b16 %v3470
    %v4524 = vunpack.c.h.b16 %v3470
    %v4525 = vunpack.c.l.b16 %v3471
    %v4526 = vunpack.c.h.b16 %v3471
    %v4527 = vunpack.c.l.b16 %v3472
    %v4528 = vunpack.c.h.b16 %v3472
    %v4529 = vunpack.c.l.b16 %v3473
    %v4530 = vunpack.c.l.b16 %v3474
    %v4531 = vunpack.c.h.b16 %v3474
    %v4532 = vunpack.c.l.b16 %v3475
    %v4533 = vunpack.c.h.b16 %v3475
    %v4534 = vunpack.c.l.b16 %v3476
    %v4535 = vunpack.c.h.b16 %v3476
    %v4536 = vunpack.c.l.b16 %v3477
    %v4537 = vunpack.c.l.b16 %v3478
    %v4538 = vunpack.c.h.b16 %v3478
    %v4539 = vunpack.c.l.b16 %v3479
    %v4540 = vunpack.c.h.b16 %v3479
    %v4541 = vunpack.c.l.b16 %v3480
    %v4542 = vunpack.c.h.b16 %v3480
    %v4543 = vunpack.c.l.b16 %v3481
    %v4544 = vunpack.c.l.b16 %v3482
    %v4545 = vunpack.c.h.b16 %v3482
    %v4546 = vunpack.c.l.b16 %v3483
    %v4547 = vunpack.c.h.b16 %v3483
    %v4548 = vunpack.c.l.b16 %v3484
    %v4549 = vunpack.c.h.b16 %v3484
    %v4550 = vunpack.c.l.b16 %v3485
    %v4551 = vunpack.c.l.b16 %v3486
    %v4552 = vunpack.c.h.b16 %v3486
    %v4553 = vunpack.c.l.b16 %v3487
    %v4554 = vunpack.c.h.b16 %v3487
    %v4555 = vunpack.c.l.b16 %v3488
    %v4556 = vunpack.c.h.b16 %v3488
    %v4557 = vunpack.c.l.b16 %v3489
    %v4558 = vunpack.c.l.b16 %v3490
    %v4559 = vunpack.c.h.b16 %v3490
    %v4560 = vunpack.c.l.b16 %v3491
    %v4561 = vunpack.c.h.b16 %v3491
    %v4562 = vunpack.c.l.b16 %v3492
    %v4563 = vunpack.c.h.b16 %v3492
    %v4564 = vunpack.c.l.b16 %v3493
    %v4565 = vunpack.c.l.b16 %v3494
    %v4566 = vunpack.c.h.b16 %v3494
    %v4567 = vunpack.c.l.b16 %v3495
    %v4568 = vunpack.c.h.b16 %v3495
    %v4569 = vunpack.c.l.b16 %v3496
    %v4570 = vunpack.c.h.b16 %v3496
    %v4571 = vunpack.c.l.b16 %v3497
    %v4572 = vunpack.c.l.b16 %v3498
    %v4573 = vunpack.c.h.b16 %v3498
    %v4574 = vunpack.c.l.b16 %v3499
    %v4575 = vunpack.c.h.b16 %v3499
    %v4576 = vunpack.c.l.b16 %v3500
    %v4577 = vunpack.c.h.b16 %v3500
    %v4578 = vunpack.c.l.b16 %v3501
    %v4579 = vunpack.c.l.b16 %v3502
    %v4580 = vunpack.c.h.b16 %v3502
    %v4581 = vunpack.c.l.b16 %v3503
    %v4582 = vunpack.c.h.b16 %v3503
    %v4583 = vunpack.c.l.b16 %v3504
    %v4584 = vunpack.c.h.b16 %v3504
    %v4585 = vunpack.c.l.b16 %v3505
    %v4586 = vunpack.c.l.b16 %v3506
    %v4587 = vunpack.c.h.b16 %v3506
    %v4588 = vunpack.c.l.b16 %v3507
    %v4589 = vunpack.c.h.b16 %v3507
    %v4590 = vunpack.c.l.b16 %v3508
    %v4591 = vunpack.c.h.b16 %v3508
    %v4592 = vunpack.c.l.b16 %v3509
    %v4593 = vunpack.c.l.b16 %v3510
    %v4594 = vunpack.c.h.b16 %v3510
    %v4595 = vunpack.c.l.b16 %v3511
    %v4596 = vunpack.c.h.b16 %v3511
    %v4597 = vunpack.c.l.b16 %v3512
    %v4598 = vunpack.c.h.b16 %v3512
    %v4599 = vunpack.c.l.b16 %v3513
    %v4600 = vunpack.c.l.b16 %v3514
    %v4601 = vunpack.c.h.b16 %v3514
    %v4602 = vunpack.c.l.b16 %v3515
    %v4603 = vunpack.c.h.b16 %v3515
    %v4604 = vunpack.c.l.b16 %v3516
    %v4605 = vunpack.c.h.b16 %v3516
    %v4606 = vunpack.c.l.b16 %v3517
    %v4607 = vunpack.c.l.b16 %v3518
    %v4608 = vunpack.c.h.b16 %v3518
    %v4609 = vunpack.c.l.b16 %v3519
    %v4610 = vunpack.c.h.b16 %v3519
    %v4611 = vunpack.c.l.b16 %v3520
    %v4612 = vunpack.c.h.b16 %v3520
    %v4613 = vunpack.c.l.b16 %v3521
    %v4614 = vunpack.c.l.b16 %v3522
    %v4615 = vunpack.c.h.b16 %v3522
    %v4616 = vunpack.c.l.b16 %v3523
    %v4617 = vunpack.c.h.b16 %v3523
    %v4618 = vunpack.c.l.b16 %v3524
    %v4619 = vunpack.c.h.b16 %v3524
    %v4620 = vunpack.c.l.b16 %v3525
    %v4621 = vunpack.c.l.b16 %v3526
    %v4622 = vunpack.c.h.b16 %v3526
    %v4623 = vunpack.c.l.b16 %v3527
    %v4624 = vunpack.c.h.b16 %v3527
    %v4625 = vunpack.c.l.b16 %v3528
    %v4626 = vunpack.c.h.b16 %v3528
    %v4627 = vunpack.c.l.b16 %v3529
    %v4628 = vunpack.c.l.b16 %v3530
    %v4629 = vunpack.c.h.b16 %v3530
    %v4630 = vunpack.c.l.b16 %v3531
    %v4631 = vunpack.c.h.b16 %v3531
    %v4632 = vunpack.c.l.b16 %v3532
    %v4633 = vunpack.c.h.b16 %v3532
    %v4634 = vunpack.c.l.b16 %v3533
    %v4635 = vunpack.c.l.b16 %v3534
    %v4636 = vunpack.c.h.b16 %v3534
    %v4637 = vunpack.c.l.b16 %v3535
    %v4638 = vunpack.c.h.b16 %v3535
    %v4639 = vunpack.c.l.b16 %v3536
    %v4640 = vunpack.c.h.b16 %v3536
    %v4641 = vunpack.c.l.b16 %v3537
    %v4642 = vunpack.c.l.b16 %v3538
    %v4643 = vunpack.c.h.b16 %v3538
    %v4644 = vunpack.c.l.b16 %v3539
    %v4645 = vunpack.c.h.b16 %v3539
    %v4646 = vunpack.c.l.b16 %v3540
    %v4647 = vunpack.c.h.b16 %v3540
    %v4648 = vunpack.c.l.b16 %v3541
    %v4649 = vunpack.c.l.b16 %v3542
    %v4650 = vunpack.c.h.b16 %v3542
    %v4651 = vunpack.c.l.b16 %v3543
    %v4652 = vunpack.c.h.b16 %v3543
    %v4653 = vunpack.c.l.b16 %v3544
    %v4654 = vunpack.c.h.b16 %v3544
    %v4655 = vunpack.c.l.b16 %v3545
    %v4656 = vunpack.c.l.b16 %v3546
    %v4657 = vunpack.c.h.b16 %v3546
    %v4658 = vunpack.c.l.b16 %v3547
    %v4659 = vunpack.c.h.b16 %v3547
    %v4660 = vunpack.c.l.b16 %v3548
    %v4661 = vunpack.c.h.b16 %v3548
    %v4662 = vunpack.c.l.b16 %v3549
    %v4663 = vunpack.c.l.b16 %v3550
    %v4664 = vunpack.c.h.b16 %v3550
    %v4665 = vunpack.c.l.b16 %v3551
    %v4666 = vunpack.c.h.b16 %v3551
    %v4667 = vunpack.c.l.b16 %v3552
    %v4668 = vunpack.c.h.b16 %v3552
    %v4669 = vunpack.c.l.b16 %v3553
    %v4670 = vunpack.c.l.b16 %v3554
    %v4671 = vunpack.c.h.b16 %v3554
    %v4672 = vunpack.c.l.b16 %v3555
    %v4673 = vunpack.c.h.b16 %v3555
    %v4674 = vunpack.c.l.b16 %v3556
    %v4675 = vunpack.c.h.b16 %v3556
    %v4676 = vunpack.c.l.b16 %v3557
    %v4677 = vunpack.c.l.b16 %v3558
    %v4678 = vunpack.c.h.b16 %v3558
    %v4679 = vunpack.c.l.b16 %v3559
    %v4680 = vunpack.c.h.b16 %v3559
    %v4681 = vunpack.c.l.b16 %v3560
    %v4682 = vunpack.c.h.b16 %v3560
    %v4683 = vunpack.c.l.b16 %v3561
    %v4684 = vunpack.c.l.b16 %v3562
    %v4685 = vunpack.c.h.b16 %v3562
    %v4686 = vunpack.c.l.b16 %v3563
    %v4687 = vunpack.c.h.b16 %v3563
    %v4688 = vunpack.c.l.b16 %v3564
    %v4689 = vunpack.c.h.b16 %v3564
    %v4690 = vunpack.c.l.b16 %v3565
    %v4691 = vunpack.c.l.b16 %v3566
    %v4692 = vunpack.c.h.b16 %v3566
    %v4693 = vunpack.c.l.b16 %v3567
    %v4694 = vunpack.c.h.b16 %v3567
    %v4695 = vunpack.c.l.b16 %v3568
    %v4696 = vunpack.c.h.b16 %v3568
    %v4697 = vunpack.c.l.b16 %v3569
    %v4698 = vunpack.c.l.b16 %v3570
    %v4699 = vunpack.c.h.b16 %v3570
    %v4700 = vunpack.c.l.b16 %v3571
    %v4701 = vunpack.c.h.b16 %v3571
    %v4702 = vunpack.c.l.b16 %v3572
    %v4703 = vunpack.c.h.b16 %v3572
    %v4704 = vunpack.c.l.b16 %v3573
    %v4705 = vunpack.c.l.b16 %v3574
    %v4706 = vunpack.c.h.b16 %v3574
    %v4707 = vunpack.c.l.b16 %v3575
    %v4708 = vunpack.c.h.b16 %v3575
    %v4709 = vunpack.c.l.b16 %v3576
    %v4710 = vunpack.c.h.b16 %v3576
    %v4711 = vunpack.c.l.b16 %v3577
    %v4712 = vunpack.c.l.b16 %v3578
    %v4713 = vunpack.c.h.b16 %v3578
    %v4714 = vunpack.c.l.b16 %v3579
    %v4715 = vunpack.c.h.b16 %v3579
    %v4716 = vunpack.c.l.b16 %v3580
    %v4717 = vunpack.c.h.b16 %v3580
    %v4718 = vunpack.c.l.b16 %v3581
    %v4719 = vunpack.c.l.b16 %v3582
    %v4720 = vunpack.c.h.b16 %v3582
    %v4721 = vunpack.c.l.b16 %v3583
    %v4722 = vunpack.c.h.b16 %v3583
    %v4723 = vunpack.c.l.b16 %v3584
    %v4724 = vunpack.c.h.b16 %v3584
    %v4725 = vunpack.c.l.b16 %v3585
    %v4726 = vunpack.c.l.b16 %v3586
    %v4727 = vunpack.c.h.b16 %v3586
    %v4728 = vunpack.c.l.b16 %v3587
    %v4729 = vunpack.c.h.b16 %v3587
    %v4730 = vunpack.c.l.b16 %v3588
    %v4731 = vunpack.c.h.b16 %v3588
    %v4732 = vunpack.c.l.b16 %v3589
    %v4733 = vunpack.c.l.b16 %v3590
    %v4734 = vunpack.c.h.b16 %v3590
    %v4735 = vunpack.c.l.b16 %v3591
    %v4736 = vunpack.c.h.b16 %v3591
    %v4737 = vunpack.c.l.b16 %v3592
    %v4738 = vunpack.c.h.b16 %v3592
    %v4739 = vunpack.c.l.b16 %v3593
    %v4740 = vunpack.c.l.b16 %v3594
    %v4741 = vunpack.c.h.b16 %v3594
    %v4742 = vunpack.c.l.b16 %v3595
    %v4743 = vunpack.c.h.b16 %v3595
    %v4744 = vunpack.c.l.b16 %v3596
    %v4745 = vunpack.c.h.b16 %v3596
    %v4746 = vunpack.c.l.b16 %v3597
    %v4747 = vunpack.c.l.b16 %v3598
    %v4748 = vunpack.c.h.b16 %v3598
    %v4749 = vunpack.c.l.b16 %v3599
    %v4750 = vunpack.c.h.b16 %v3599
    %v4751 = vunpack.c.l.b16 %v3600
    %v4752 = vunpack.c.h.b16 %v3600
    %v4753 = vunpack.c.l.b16 %v3601
    %v4754 = vunpack.c.l.b16 %v3602
    %v4755 = vunpack.c.h.b16 %v3602
    %v4756 = vunpack.c.l.b16 %v3603
    %v4757 = vunpack.c.h.b16 %v3603
    %v4758 = vunpack.c.l.b16 %v3604
    %v4759 = vunpack.c.h.b16 %v3604
    %v4760 = vunpack.c.l.b16 %v3605
    %v4761 = vunpack.c.l.b16 %v3606
    %v4762 = vunpack.c.h.b16 %v3606
    %v4763 = vunpack.c.l.b16 %v3607
    %v4764 = vunpack.c.h.b16 %v3607
    %v4765 = vunpack.c.l.b16 %v3608
    %v4766 = vunpack.c.h.b16 %v3608
    %v4767 = vunpack.c.l.b16 %v3609
    %v4768 = vunpack.c.l.b16 %v3610
    %v4769 = vunpack.c.h.b16 %v3610
    %v4770 = vunpack.c.l.b16 %v3611
    %v4771 = vunpack.c.h.b16 %v3611
    %v4772 = vunpack.c.l.b16 %v3612
    %v4773 = vunpack.c.h.b16 %v3612
    %v4774 = vunpack.c.l.b16 %v3613
    %v4775 = vunpack.c.l.b16 %v3614
    %v4776 = vunpack.c.h.b16 %v3614
    %v4777 = vunpack.c.l.b16 %v3615
    %v4778 = vunpack.c.h.b16 %v3615
    %v4779 = vunpack.c.l.b16 %v3616
    %v4780 = vunpack.c.h.b16 %v3616
    %v4781 = vunpack.c.l.b16 %v3617
    %v4782 = vunpack.c.l.b16 %v3618
    %v4783 = vunpack.c.h.b16 %v3618
    %v4784 = vunpack.c.l.b16 %v3619
    %v4785 = vunpack.c.h.b16 %v3619
    %v4786 = vunpack.c.l.b16 %v3620
    %v4787 = vunpack.c.h.b16 %v3620
    %v4788 = vunpack.c.l.b16 %v3621
    %v4789 = vunpack.c.l.b16 %v3622
    %v4790 = vunpack.c.h.b16 %v3622
    %v4791 = vunpack.c.l.b16 %v3623
    %v4792 = vunpack.c.h.b16 %v3623
    %v4793 = vunpack.c.l.b16 %v3624
    %v4794 = vunpack.c.h.b16 %v3624
    %v4795 = vunpack.c.l.b16 %v3625
    %v4796 = vunpack.c.l.b16 %v3626
    %v4797 = vunpack.c.h.b16 %v3626
    %v4798 = vunpack.c.l.b16 %v3627
    %v4799 = vunpack.c.h.b16 %v3627
    %v4800 = vunpack.c.l.b16 %v3628
    %v4801 = vunpack.c.h.b16 %v3628
    %v4802 = vunpack.c.l.b16 %v3629
    %v4803 = vunpack.c.l.b16 %v3630
    %v4804 = vunpack.c.h.b16 %v3630
    %v4805 = vunpack.c.l.b16 %v3631
    %v4806 = vunpack.c.h.b16 %v3631
    %v4807 = vunpack.c.l.b16 %v3632
    %v4808 = vunpack.c.h.b16 %v3632
    %v4809 = vunpack.c.l.b16 %v3633
    %v4810 = vunpack.c.l.b16 %v3634
    %v4811 = vunpack.c.h.b16 %v3634
    %v4812 = vunpack.c.l.b16 %v3635
    %v4813 = vunpack.c.h.b16 %v3635
    %v4814 = vunpack.c.l.b16 %v3636
    %v4815 = vunpack.c.h.b16 %v3636
    %v4816 = vunpack.c.l.b16 %v3637
    %v4817 = vunpack.c.l.b16 %v3638
    %v4818 = vunpack.c.h.b16 %v3638
    %v4819 = vunpack.c.l.b16 %v3639
    %v4820 = vunpack.c.h.b16 %v3639
    %v4821 = vunpack.c.l.b16 %v3640
    %v4822 = vunpack.c.h.b16 %v3640
    %v4823 = vunpack.c.l.b16 %v3641
    %v4824 = vunpack.c.l.b16 %v3642
    %v4825 = vunpack.c.h.b16 %v3642
    %v4826 = vunpack.c.l.b16 %v3643
    %v4827 = vunpack.c.h.b16 %v3643
    %v4828 = vunpack.c.l.b16 %v3644
    %v4829 = vunpack.c.h.b16 %v3644
    %v4830 = vunpack.c.l.b16 %v3645
    %v4831 = vunpack.c.l.b16 %v3646
    %v4832 = vunpack.c.h.b16 %v3646
    %v4833 = vunpack.c.l.b16 %v3647
    %v4834 = vunpack.c.h.b16 %v3647
    %v4835 = vunpack.c.l.b16 %v3648
    %v4836 = vunpack.c.h.b16 %v3648
    %v4837 = vunpack.c.l.b16 %v3649
    %v4838 = vunpack.c.l.b16 %v3650
    %v4839 = vunpack.c.h.b16 %v3650
    %v4840 = vunpack.c.l.b16 %v3651
    %v4841 = vunpack.c.h.b16 %v3651
    %v4842 = vunpack.c.l.b16 %v3652
    %v4843 = vunpack.c.h.b16 %v3652
    %v4844 = vunpack.c.l.b16 %v3653
    %v4845 = vunpack.c.l.b16 %v3654
    %v4846 = vunpack.c.h.b16 %v3654
    %v4847 = vunpack.c.l.b16 %v3655
    %v4848 = vunpack.c.h.b16 %v3655
    %v4849 = vunpack.c.l.b16 %v3656
    %v4850 = vunpack.c.h.b16 %v3656
    %v4851 = vunpack.c.l.b16 %v3657
    %v4852 = vunpack.c.l.b16 %v3658
    %v4853 = vunpack.c.h.b16 %v3658
    %v4854 = vunpack.c.l.b16 %v3659
    %v4855 = vunpack.c.h.b16 %v3659
    %v4856 = vunpack.c.l.b16 %v3660
    %v4857 = vunpack.c.h.b16 %v3660
    %v4858 = vunpack.c.l.b16 %v3661
    %v4859 = vunpack.c.l.b16 %v3662
    %v4860 = vunpack.c.h.b16 %v3662
    %v4861 = vunpack.c.l.b16 %v3663
    %v4862 = vunpack.c.h.b16 %v3663
    %v4863 = vunpack.c.l.b16 %v3664
    %v4864 = vunpack.c.h.b16 %v3664
    %v4865 = vunpack.c.l.b16 %v3665
    %v4866 = vunpack.c.l.b16 %v3666
    %v4867 = vunpack.c.h.b16 %v3666
    %v4868 = vunpack.c.l.b16 %v3667
    %v4869 = vunpack.c.h.b16 %v3667
    %v4870 = vunpack.c.l.b16 %v3668
    %v4871 = vunpack.c.h.b16 %v3668
    %v4872 = vunpack.c.l.b16 %v3669
    %v4873 = vunpack.c.l.b16 %v3670
    %v4874 = vunpack.c.h.b16 %v3670
    %v4875 = vunpack.c.l.b16 %v3671
    %v4876 = vunpack.c.h.b16 %v3671
    %v4877 = vunpack.c.l.b16 %v3672
    %v4878 = vunpack.c.h.b16 %v3672
    %v4879 = vunpack.c.l.b16 %v3673
    %v4880 = vunpack.c.l.b16 %v3674
    %v4881 = vunpack.c.h.b16 %v3674
    %v4882 = vunpack.c.l.b16 %v3675
    %v4883 = vunpack.c.h.b16 %v3675
    %v4884 = vunpack.c.l.b16 %v3676
    %v4885 = vunpack.c.h.b16 %v3676
    %v4886 = vunpack.c.l.b16 %v3677
    %v4887 = vunpack.c.l.b16 %v3678
    %v4888 = vunpack.c.h.b16 %v3678
    %v4889 = vunpack.c.l.b16 %v3679
    %v4890 = vunpack.c.h.b16 %v3679
    %v4891 = vunpack.c.l.b16 %v3680
    %v4892 = vunpack.c.h.b16 %v3680
    %v4893 = vunpack.c.l.b16 %v3681
    %v4894 = vunpack.c.l.b16 %v3682
    %v4895 = vunpack.c.h.b16 %v3682
    %v4896 = vunpack.c.l.b16 %v3683
    %v4897 = vunpack.c.h.b16 %v3683
    %v4898 = vunpack.c.l.b16 %v3684
    %v4899 = vunpack.c.h.b16 %v3684
    %v4900 = vunpack.c.l.b16 %v3685
    %v4901 = vunpack.c.l.b16 %v3686
    %v4902 = vunpack.c.h.b16 %v3686
    %v4903 = vunpack.c.l.b16 %v3687
    %v4904 = vunpack.c.h.b16 %v3687
    %v4905 = vunpack.c.l.b16 %v3688
    %v4906 = vunpack.c.h.b16 %v3688
    %v4907 = vunpack.c.l.b16 %v3689
    %v4908 = vunpack.c.l.b16 %v3690
    %v4909 = vunpack.c.h.b16 %v3690
    %v4910 = vunpack.c.l.b16 %v3691
    %v4911 = vunpack.c.h.b16 %v3691
    %v4912 = vunpack.c.l.b16 %v3692
    %v4913 = vunpack.c.h.b16 %v3692
    %v4914 = vunpack.c.l.b16 %v3693
    %v4915 = vunpack.c.l.b16 %v3694
    %v4916 = vunpack.c.h.b16 %v3694
    %v4917 = vunpack.c.l.b16 %v3695
    %v4918 = vunpack.c.h.b16 %v3695
    %v4919 = vunpack.c.l.b16 %v3696
    %v4920 = vunpack.c.h.b16 %v3696
    %v4921 = vunpack.c.l.b16 %v3697
    %v4922 = vunpack.c.l.b16 %v3698
    %v4923 = vunpack.c.h.b16 %v3698
    %v4924 = vunpack.c.l.b16 %v3699
    %v4925 = vunpack.c.h.b16 %v3699
    %v4926 = vunpack.c.l.b16 %v3700
    %v4927 = vunpack.c.h.b16 %v3700
    %v4928 = vunpack.c.l.b16 %v3701
    %v4929 = vunpack.c.l.b16 %v3702
    %v4930 = vunpack.c.h.b16 %v3702
    %v4931 = vunpack.c.l.b16 %v3703
    %v4932 = vunpack.c.h.b16 %v3703
    %v4933 = vunpack.c.l.b16 %v3704
    %v4934 = vunpack.c.h.b16 %v3704
    %v4935 = vunpack.c.l.b16 %v3705
    %v4936 = vunpack.c.l.b16 %v3706
    %v4937 = vunpack.c.h.b16 %v3706
    %v4938 = vunpack.c.l.b16 %v3707
    %v4939 = vunpack.c.h.b16 %v3707
    %v4940 = vunpack.c.l.b16 %v3708
    %v4941 = vunpack.c.h.b16 %v3708
    %v4942 = vunpack.c.l.b16 %v3709
    %v4943 = vunpack.c.l.b16 %v3710
    %v4944 = vunpack.c.h.b16 %v3710
    %v4945 = vunpack.c.l.b16 %v3711
    %v4946 = vunpack.c.h.b16 %v3711
    %v4947 = vunpack.c.l.b16 %v3712
    %v4948 = vunpack.c.h.b16 %v3712
    %v4949 = vunpack.c.l.b16 %v3713
    %v4950 = vunpack.c.l.b16 %v3714
    %v4951 = vunpack.c.h.b16 %v3714
    %v4952 = vunpack.c.l.b16 %v3715
    %v4953 = vunpack.c.h.b16 %v3715
    %v4954 = vunpack.c.l.b16 %v3716
    %v4955 = vunpack.c.h.b16 %v3716
    %v4956 = vunpack.c.l.b16 %v3717
    %v4957 = vunpack.c.l.b16 %v3718
    %v4958 = vunpack.c.h.b16 %v3718
    %v4959 = vunpack.c.l.b16 %v3719
    %v4960 = vunpack.c.h.b16 %v3719
    %v4961 = vunpack.c.l.b16 %v3720
    %v4962 = vunpack.c.h.b16 %v3720
    %v4963 = vunpack.c.l.b16 %v3721
    %v4964 = vunpack.c.l.b16 %v3722
    %v4965 = vunpack.c.h.b16 %v3722
    %v4966 = vunpack.c.l.b16 %v3723
    %v4967 = vunpack.c.h.b16 %v3723
    %v4968 = vunpack.c.l.b16 %v3724
    %v4969 = vunpack.c.h.b16 %v3724
    %v4970 = vunpack.c.l.b16 %v3725
    %v4971 = vunpack.c.l.b16 %v3726
    %v4972 = vunpack.c.h.b16 %v3726
    %v4973 = vunpack.c.l.b16 %v3727
    %v4974 = vunpack.c.h.b16 %v3727
    %v4975 = vunpack.c.l.b16 %v3728
    %v4976 = vunpack.c.h.b16 %v3728
    %v4977 = vunpack.c.l.b16 %v3729
    %v4978 = vunpack.c.l.b16 %v3730
    %v4979 = vunpack.c.h.b16 %v3730
    %v4980 = vunpack.c.l.b16 %v3731
    %v4981 = vunpack.c.h.b16 %v3731
    %v4982 = vunpack.c.l.b16 %v3732
    %v4983 = vunpack.c.h.b16 %v3732
    %v4984 = vunpack.c.l.b16 %v3733
    %v4985 = vunpack.c.l.b16 %v3734
    %v4986 = vunpack.c.h.b16 %v3734
    %v4987 = vunpack.c.l.b16 %v3735
    %v4988 = vunpack.c.h.b16 %v3735
    %v4989 = vunpack.c.l.b16 %v3736
    %v4990 = vunpack.c.h.b16 %v3736
    %v4991 = vunpack.c.l.b16 %v3737
    %v4992 = vunpack.c.l.b16 %v3738
    %v4993 = vunpack.c.h.b16 %v3738
    %v4994 = vunpack.c.l.b16 %v3739
    %v4995 = vunpack.c.h.b16 %v3739
    %v4996 = vunpack.c.l.b16 %v3740
    %v4997 = vunpack.c.h.b16 %v3740
    %v4998 = vunpack.c.l.b16 %v3741
    %v4999 = vunpack.c.l.b16 %v3742
    %v5000 = vunpack.c.h.b16 %v3742
    %v5001 = vunpack.c.l.b16 %v3743
    %v5002 = vunpack.c.h.b16 %v3743
    %v5003 = vunpack.c.l.b16 %v3744
    %v5004 = vunpack.c.h.b16 %v3744
    %v5005 = vunpack.c.l.b16 %v3745
    %v5006 = vunpack.c.l.b16 %v3746
    %v5007 = vunpack.c.h.b16 %v3746
    %v5008 = vunpack.c.l.b16 %v3747
    %v5009 = vunpack.c.h.b16 %v3747
    %v5010 = vunpack.c.l.b16 %v3748
    %v5011 = vunpack.c.h.b16 %v3748
    %v5012 = vunpack.c.l.b16 %v3749
    %v5013 = vunpack.c.l.b16 %v3750
    %v5014 = vunpack.c.h.b16 %v3750
    %v5015 = vunpack.c.l.b16 %v3751
    %v5016 = vunpack.c.h.b16 %v3751
    %v5017 = vunpack.c.l.b16 %v3752
    %v5018 = vunpack.c.h.b16 %v3752
    %v5019 = vunpack.c.l.b16 %v3753
    %v5020 = vunpack.c.l.b16 %v3754
    %v5021 = vunpack.c.h.b16 %v3754
    %v5022 = vunpack.c.l.b16 %v3755
    %v5023 = vunpack.c.h.b16 %v3755
    %v5024 = vunpack.c.l.b16 %v3756
    %v5025 = vunpack.c.h.b16 %v3756
    %v5026 = vunpack.c.l.b16 %v3757
    %v5027 = vunpack.c.l.b16 %v3758
    %v5028 = vunpack.c.h.b16 %v3758
    %v5029 = vunpack.c.l.b16 %v3759
    %v5030 = vunpack.c.h.b16 %v3759
    %v5031 = vunpack.c.l.b16 %v3760
    %v5032 = vunpack.c.h.b16 %v3760
    %v5033 = vunpack.c.l.b16 %v3761
    %v5034 = vunpack.c.l.b16 %v3762
    %v5035 = vunpack.c.h.b16 %v3762
    %v5036 = vunpack.c.l.b16 %v3763
    %v5037 = vunpack.c.h.b16 %v3763
    %v5038 = vunpack.c.l.b16 %v3764
    %v5039 = vunpack.c.h.b16 %v3764
    %v5040 = vunpack.c.l.b16 %v3765
    %v5041 = vunpack.c.l.b16 %v3766
    %v5042 = vunpack.c.h.b16 %v3766
    %v5043 = vunpack.c.l.b16 %v3767
    %v5044 = vunpack.c.h.b16 %v3767
    %v5045 = vunpack.c.l.b16 %v3768
    %v5046 = vunpack.c.h.b16 %v3768
    %v5047 = vunpack.c.l.b16 %v3769
    %v5048 = vunpack.c.l.b16 %v3770
    %v5049 = vunpack.c.h.b16 %v3770
    %v5050 = vunpack.c.l.b16 %v3771
    %v5051 = vunpack.c.h.b16 %v3771
    %v5052 = vunpack.c.l.b16 %v3772
    %v5053 = vunpack.c.h.b16 %v3772
    %v5054 = vunpack.c.l.b16 %v3773
    %v5055 = vunpack.c.l.b16 %v3774
    %v5056 = vunpack.c.h.b16 %v3774
    %v5057 = vunpack.c.l.b16 %v3775
    %v5058 = vunpack.c.h.b16 %v3775
    %v5059 = vunpack.c.l.b16 %v3776
    %v5060 = vunpack.c.h.b16 %v3776
    %v5061 = vunpack.c.l.b16 %v3777
    %v5062 = vunpack.c.l.b16 %v3778
    %v5063 = vunpack.c.h.b16 %v3778
    %v5064 = vunpack.c.l.b16 %v3779
    %v5065 = vunpack.c.h.b16 %v3779
    %v5066 = vunpack.c.l.b16 %v3780
    %v5067 = vunpack.c.h.b16 %v3780
    %v5068 = vunpack.c.l.b16 %v3781
    %v5069 = vunpack.c.l.b16 %v3782
    %v5070 = vunpack.c.h.b16 %v3782
    %v5071 = vunpack.c.l.b16 %v3783
    %v5072 = vunpack.c.h.b16 %v3783
    %v5073 = vunpack.c.l.b16 %v3784
    %v5074 = vunpack.c.h.b16 %v3784
    %v5075 = vunpack.c.l.b16 %v3785
    %v5076 = vunpack.c.l.b16 %v3786
    %v5077 = vunpack.c.h.b16 %v3786
    %v5078 = vunpack.c.l.b16 %v3787
    %v5079 = vunpack.c.h.b16 %v3787
    %v5080 = vunpack.c.l.b16 %v3788
    %v5081 = vunpack.c.h.b16 %v3788
    %v5082 = vunpack.c.l.b16 %v3789
    %v5083 = vunpack.c.l.b16 %v3790
    %v5084 = vunpack.c.h.b16 %v3790
    %v5085 = vunpack.c.l.b16 %v3791
    %v5086 = vunpack.c.h.b16 %v3791
    %v5087 = vunpack.c.l.b16 %v3792
    %v5088 = vunpack.c.h.b16 %v3792
    %v5089 = vunpack.c.l.b16 %v3793
    %v5090 = vunpack.c.l.b16 %v3794
    %v5091 = vunpack.c.h.b16 %v3794
    %v5092 = vunpack.c.l.b16 %v3795
    %v5093 = vunpack.c.h.b16 %v3795
    %v5094 = vunpack.c.l.b16 %v3796
    %v5095 = vunpack.c.h.b16 %v3796
    %v5096 = vunpack.c.l.b16 %v3797
    %v5097 = vunpack.c.l.b16 %v3798
    %v5098 = vunpack.c.h.b16 %v3798
    %v5099 = vunpack.c.l.b16 %v3799
    %v5100 = vunpack.c.h.b16 %v3799
    %v5101 = vunpack.c.l.b16 %v3800
    %v5102 = vunpack.c.h.b16 %v3800
    %v5103 = vunpack.c.l.b16 %v3801
    %v5104 = vunpack.c.l.b16 %v3802
    %v5105 = vunpack.c.h.b16 %v3802
    %v5106 = vunpack.c.l.b16 %v3803
    %v5107 = vunpack.c.h.b16 %v3803
    %v5108 = vunpack.c.l.b16 %v3804
    %v5109 = vunpack.c.h.b16 %v3804
    %v5110 = vunpack.c.l.b16 %v3805
    %v5111 = vunpack.c.l.b16 %v3806
    %v5112 = vunpack.c.h.b16 %v3806
    %v5113 = vunpack.c.l.b16 %v3807
    %v5114 = vunpack.c.h.b16 %v3807
    %v5115 = vunpack.c.l.b16 %v3808
    %v5116 = vunpack.c.h.b16 %v3808
    %v5117 = vunpack.c.l.b16 %v3809
    %v5118 = vunpack.c.l.b16 %v3810
    %v5119 = vunpack.c.h.b16 %v3810
    %v5120 = vunpack.c.l.b16 %v3811
    %v5121 = vunpack.c.h.b16 %v3811
    %v5122 = vunpack.c.l.b16 %v3812
    %v5123 = vunpack.c.h.b16 %v3812
    %v5124 = vunpack.c.l.b16 %v3813
    %v5125 = vunpack.c.l.b16 %v3814
    %v5126 = vunpack.c.h.b16 %v3814
    %v5127 = vunpack.c.l.b16 %v3815
    %v5128 = vunpack.c.h.b16 %v3815
    %v5129 = vunpack.c.l.b16 %v3816
    %v5130 = vunpack.c.h.b16 %v3816
    %v5131 = vunpack.c.l.b16 %v3817
    %v5132 = vunpack.c.l.b16 %v3818
    %v5133 = vunpack.c.h.b16 %v3818
    %v5134 = vunpack.c.l.b16 %v3819
    %v5135 = vunpack.c.h.b16 %v3819
    %v5136 = vunpack.c.l.b16 %v3820
    %v5137 = vunpack.c.h.b16 %v3820
    %v5138 = vunpack.c.l.b16 %v3821
    %v5139 = vunpack.c.l.b16 %v3822
    %v5140 = vunpack.c.h.b16 %v3822
    %v5141 = vunpack.c.l.b16 %v3823
    %v5142 = vunpack.c.h.b16 %v3823
    %v5143 = vunpack.c.l.b16 %v3824
    %v5144 = vunpack.c.h.b16 %v3824
    %v5145 = vunpack.c.l.b16 %v3825
    %v5146 = vunpack.c.l.b16 %v3826
    %v5147 = vunpack.c.h.b16 %v3826
    %v5148 = vunpack.c.l.b16 %v3827
    %v5149 = vunpack.c.h.b16 %v3827
    %v5150 = vunpack.c.l.b16 %v3828
    %v5151 = vunpack.c.h.b16 %v3828
    %v5152 = vunpack.c.l.b16 %v3829
    %v5153 = vunpack.c.l.b16 %v3830
    %v5154 = vunpack.c.h.b16 %v3830
    %v5155 = vunpack.c.l.b16 %v3831
    %v5156 = vunpack.c.h.b16 %v3831
    %v5157 = vunpack.c.l.b16 %v3832
    %v5158 = vunpack.c.h.b16 %v3832
    %v5159 = vunpack.c.l.b16 %v3833
    %v5160 = vunpack.c.l.b16 %v3834
    %v5161 = vunpack.c.h.b16 %v3834
    %v5162 = vunpack.c.l.b16 %v3835
    %v5163 = vunpack.c.h.b16 %v3835
    %v5164 = vunpack.c.l.b16 %v3836
    %v5165 = vunpack.c.h.b16 %v3836
    %v5166 = vunpack.c.l.b16 %v3837
    %v5167 = vunpack.c.l.b16 %v3838
    %v5168 = vunpack.c.h.b16 %v3838
    %v5169 = vunpack.c.l.b16 %v3839
    %v5170 = vunpack.c.h.b16 %v3839
    %v5171 = vunpack.c.l.b16 %v3840
    %v5172 = vunpack.c.h.b16 %v3840
    %v5173 = vunpack.c.l.b16 %v3841
    %v5174 = vunpack.c.l.b16 %v3842
    %v5175 = vunpack.c.h.b16 %v3842
    %v5176 = vunpack.c.l.b16 %v3843
    %v5177 = vunpack.c.h.b16 %v3843
    %v5178 = vunpack.c.l.b16 %v3844
    %v5179 = vunpack.c.h.b16 %v3844
    %v5180 = vunpack.c.l.b16 %v3845
    %v5181 = vunpack.c.l.b16 %v3846
    %v5182 = vunpack.c.h.b16 %v3846
    %v5183 = vunpack.c.l.b16 %v3847
    %v5184 = vunpack.c.h.b16 %v3847
    %v5185 = vunpack.c.l.b16 %v3848
    %v5186 = vunpack.c.h.b16 %v3848
    %v5187 = vunpack.c.l.b16 %v3849
    %v5188 = vunpack.c.l.b16 %v3850
    %v5189 = vunpack.c.h.b16 %v3850
    %v5190 = vunpack.c.l.b16 %v3851
    %v5191 = vunpack.c.h.b16 %v3851
    %v5192 = vunpack.c.l.b16 %v3852
    %v5193 = vunpack.c.h.b16 %v3852
    %v5194 = vunpack.c.l.b16 %v3853
    %v5195 = vunpack.c.l.b16 %v3854
    %v5196 = vunpack.c.h.b16 %v3854
    %v5197 = vunpack.c.l.b16 %v3855
    %v5198 = vunpack.c.h.b16 %v3855
    %v5199 = vunpack.c.l.b16 %v3856
    %v5200 = vunpack.c.h.b16 %v3856
    %v5201 = vunpack.c.l.b16 %v3857
    %v5202 = vunpack.c.l.b16 %v3858
    %v5203 = vunpack.c.h.b16 %v3858
    %v5204 = vunpack.c.l.b16 %v3859
    %v5205 = vunpack.c.h.b16 %v3859
    %v5206 = vunpack.c.l.b16 %v3860
    %v5207 = vunpack.c.h.b16 %v3860
    %v5208 = vunpack.c.l.b16 %v3861
    %v5209 = vunpack.c.l.b16 %v3862
    %v5210 = vunpack.c.h.b16 %v3862
    %v5211 = vunpack.c.l.b16 %v3863
    %v5212 = vunpack.c.h.b16 %v3863
    %v5213 = vunpack.c.l.b16 %v3864
    %v5214 = vunpack.c.h.b16 %v3864
    %v5215 = vunpack.c.l.b16 %v3865
    %v5216 = vunpack.c.l.b16 %v3866
    %v5217 = vunpack.c.h.b16 %v3866
    %v5218 = vunpack.c.l.b16 %v3867
    %v5219 = vunpack.c.h.b16 %v3867
    %v5220 = vunpack.c.l.b16 %v3868
    %v5221 = vunpack.c.h.b16 %v3868
    %v5222 = vunpack.c.l.b16 %v3869
    %v5223 = vunpack.c.l.b16 %v3870
    %v5224 = vunpack.c.h.b16 %v3870
    %v5225 = vunpack.c.l.b16 %v3871
    %v5226 = vunpack.c.h.b16 %v3871
    %v5227 = vunpack.c.l.b16 %v3872
    %v5228 = vunpack.c.h.b16 %v3872
    %v5229 = vunpack.c.l.b16 %v3873
    %v5230 = vunpack.c.l.b16 %v3874
    %v5231 = vunpack.c.h.b16 %v3874
    %v5232 = vunpack.c.l.b16 %v3875
    %v5233 = vunpack.c.h.b16 %v3875
    %v5234 = vunpack.c.l.b16 %v3876
    %v5235 = vunpack.c.h.b16 %v3876
    %v5236 = vunpack.c.l.b16 %v3877
    %v5237 = vunpack.c.l.b16 %v3878
    %v5238 = vunpack.c.h.b16 %v3878
    %v5239 = vunpack.c.l.b16 %v3879
    %v5240 = vunpack.c.h.b16 %v3879
    %v5241 = vunpack.c.l.b16 %v3880
    %v5242 = vunpack.c.h.b16 %v3880
    %v5243 = vunpack.c.l.b16 %v3881
    %v5244 = vunpack.c.l.b16 %v3882
    %v5245 = vunpack.c.h.b16 %v3882
    %v5246 = vunpack.c.l.b16 %v3883
    %v5247 = vunpack.c.h.b16 %v3883
    %v5248 = vunpack.c.l.b16 %v3884
    %v5249 = vunpack.c.h.b16 %v3884
    %v5250 = vunpack.c.l.b16 %v3885
    %v5251 = vunpack.c.l.b16 %v3886
    %v5252 = vunpack.c.h.b16 %v3886
    %v5253 = vunpack.c.l.b16 %v3887
    %v5254 = vunpack.c.h.b16 %v3887
    %v5255 = vunpack.c.l.b16 %v3888
    %v5256 = vunpack.c.h.b16 %v3888
    %v5257 = vunpack.c.l.b16 %v3889
    %v5258 = vunpack.c.l.b16 %v3890
    %v5259 = vunpack.c.h.b16 %v3890
    %v5260 = vunpack.c.l.b16 %v3891
    %v5261 = vunpack.c.h.b16 %v3891
    %v5262 = vunpack.c.l.b16 %v3892
    %v5263 = vunpack.c.h.b16 %v3892
    %v5264 = vunpack.c.l.b16 %v3893
    %v5265 = vunpack.c.l.b16 %v3894
    %v5266 = vunpack.c.h.b16 %v3894
    %v5267 = vunpack.c.l.b16 %v3895
    %v5268 = vunpack.c.h.b16 %v3895
    %v5269 = vunpack.c.l.b16 %v3896
    %v5270 = vunpack.c.h.b16 %v3896
    %v5271 = vunpack.c.l.b16 %v3897
    %v5272 = vunpack.c.l.b16 %v3898
    %v5273 = vunpack.c.h.b16 %v3898
    %v5274 = vunpack.c.l.b16 %v3899
    %v5275 = vunpack.c.h.b16 %v3899
    %v5276 = vunpack.c.l.b16 %v3900
    %v5277 = vunpack.c.h.b16 %v3900
    %v5278 = vunpack.c.l.b16 %v3901
    %v5279 = vunpack.c.l.b16 %v3902
    %v5280 = vunpack.c.h.b16 %v3902
    %v5281 = vunpack.c.l.b16 %v3903
    %v5282 = vunpack.c.h.b16 %v3903
    %v5283 = vunpack.c.l.b16 %v3904
    %v5284 = vunpack.c.h.b16 %v3904
    %v5285 = vunpack.c.l.b16 %v3905
    %v5286 = vunpack.c.l.b16 %v3906
    %v5287 = vunpack.c.h.b16 %v3906
    %v5288 = vunpack.c.l.b16 %v3907
    %v5289 = vunpack.c.h.b16 %v3907
    %v5290 = vunpack.c.l.b16 %v3908
    %v5291 = vunpack.c.h.b16 %v3908
    %v5292 = vunpack.c.l.b16 %v3909
    %v5293 = vunpack.c.l.b16 %v3910
    %v5294 = vunpack.c.h.b16 %v3910
    %v5295 = vunpack.c.l.b16 %v3911
    %v5296 = vunpack.c.h.b16 %v3911
    %v5297 = vunpack.c.l.b16 %v3912
    %v5298 = vunpack.c.h.b16 %v3912
    %v5299 = vunpack.c.l.b16 %v3913
    %v5300 = vunpack.c.l.b16 %v3914
    %v5301 = vunpack.c.h.b16 %v3914
    %v5302 = vunpack.c.l.b16 %v3915
    %v5303 = vunpack.c.h.b16 %v3915
    %v5304 = vunpack.c.l.b16 %v3916
    %v5305 = vunpack.c.h.b16 %v3916
    %v5306 = vunpack.c.l.b16 %v3917
    %v5307 = vunpack.c.l.b16 %v3918
    %v5308 = vunpack.c.h.b16 %v3918
    %v5309 = vunpack.c.l.b16 %v3919
    %v5310 = vunpack.c.h.b16 %v3919
    %v5311 = vunpack.c.l.b16 %v3920
    %v5312 = vunpack.c.h.b16 %v3920
    %v5313 = vunpack.c.l.b16 %v3921
    %v5314 = vunpack.c.l.b16 %v3922
    %v5315 = vunpack.c.h.b16 %v3922
    %v5316 = vunpack.c.l.b16 %v3923
    %v5317 = vunpack.c.h.b16 %v3923
    %v5318 = vunpack.c.l.b16 %v3924
    %v5319 = vunpack.c.h.b16 %v3924
    %v5320 = vunpack.c.l.b16 %v3925
    %v5321 = vunpack.c.l.b16 %v3926
    %v5322 = vunpack.c.h.b16 %v3926
    %v5323 = vunpack.c.l.b16 %v3927
    %v5324 = vunpack.c.h.b16 %v3927
    %v5325 = vunpack.c.l.b16 %v3928
    %v5326 = vunpack.c.h.b16 %v3928
    %v5327 = vunpack.c.l.b16 %v3929
    %v5328 = vunpack.c.l.b16 %v3930
    %v5329 = vunpack.c.h.b16 %v3930
    %v5330 = vunpack.c.l.b16 %v3931
    %v5331 = vunpack.c.h.b16 %v3931
    %v5332 = vunpack.c.l.b16 %v3932
    %v5333 = vunpack.c.h.b16 %v3932
    %v5334 = vunpack.c.l.b16 %v3933
    %v5335 = vunpack.c.l.b16 %v3934
    %v5336 = vunpack.c.h.b16 %v3934
    %v5337 = vunpack.c.l.b16 %v3935
    %v5338 = vunpack.c.h.b16 %v3935
    %v5339 = vunpack.c.l.b16 %v3936
    %v5340 = vunpack.c.h.b16 %v3936
    %v5341 = vunpack.c.l.b16 %v3937
    %v5342 = vunpack.c.l.b16 %v3938
    %v5343 = vunpack.c.h.b16 %v3938
    %v5344 = vunpack.c.l.b16 %v3939
    %v5345 = vunpack.c.h.b16 %v3939
    %v5346 = vunpack.c.l.b16 %v3940
    %v5347 = vunpack.c.h.b16 %v3940
    %v5348 = vunpack.c.l.b16 %v3941
    %v5349 = vunpack.c.l.b16 %v3942
    %v5350 = vunpack.c.h.b16 %v3942
    %v5351 = vunpack.c.l.b16 %v3943
    %v5352 = vunpack.c.h.b16 %v3943
    %v5353 = vunpack.c.l.b16 %v3944
    %v5354 = vunpack.c.h.b16 %v3944
    %v5355 = vunpack.c.l.b16 %v3945
    %v5356 = vunpack.c.l.b16 %v3946
    %v5357 = vunpack.c.h.b16 %v3946
    %v5358 = vunpack.c.l.b16 %v3947
    %v5359 = vunpack.c.h.b16 %v3947
    %v5360 = vunpack.c.l.b16 %v3948
    %v5361 = vunpack.c.h.b16 %v3948
    %v5362 = vunpack.c.l.b16 %v3949
    %v5363 = vunpack.c.l.b16 %v3950
    %v5364 = vunpack.c.h.b16 %v3950
    %v5365 = vunpack.c.l.b16 %v3951
    %v5366 = vunpack.c.h.b16 %v3951
    %v5367 = vunpack.c.l.b16 %v3952
    %v5368 = vunpack.c.h.b16 %v3952
    %v5369 = vunpack.c.l.b16 %v3953
    %v5370 = vunpack.c.l.b16 %v3954
    %v5371 = vunpack.c.h.b16 %v3954
    %v5372 = vunpack.c.l.b16 %v3955
    %v5373 = vunpack.c.h.b16 %v3955
    %v5374 = vunpack.c.l.b16 %v3956
    %v5375 = vunpack.c.h.b16 %v3956
    %v5376 = vunpack.c.l.b16 %v3957
    %v5377 = vunpack.c.l.b16 %v3958
    %v5378 = vunpack.c.h.b16 %v3958
    %v5379 = vunpack.c.l.b16 %v3959
    %v5380 = vunpack.c.h.b16 %v3959
    %v5381 = vunpack.c.l.b16 %v3960
    %v5382 = vunpack.c.h.b16 %v3960
    %v5383 = vunpack.c.l.b16 %v3961
    %v5384 = vunpack.c.l.b16 %v3962
    %v5385 = vunpack.c.h.b16 %v3962
    %v5386 = vunpack.c.l.b16 %v3963
    %v5387 = vunpack.c.h.b16 %v3963
    %v5388 = vunpack.c.l.b16 %v3964
    %v5389 = vunpack.c.h.b16 %v3964
    %v5390 = vunpack.c.l.b16 %v3965
    %v5391 = vunpack.c.l.b16 %v3966
    %v5392 = vunpack.c.h.b16 %v3966
    %v5393 = vunpack.c.l.b16 %v3967
    %v5394 = vunpack.c.h.b16 %v3967
    %v5395 = vunpack.c.l.b16 %v3968
    %v5396 = vunpack.c.h.b16 %v3968
    %v5397 = vunpack.c.l.b16 %v3969
    %v5398 = vunpack.c.l.b16 %v3970
    %v5399 = vunpack.c.h.b16 %v3970
    %v5400 = vunpack.c.l.b16 %v3971
    %v5401 = vunpack.c.h.b16 %v3971
    %v5402 = vunpack.c.l.b16 %v3972
    %v5403 = vunpack.c.h.b16 %v3972
    %v5404 = vunpack.c.l.b16 %v3973
    %v5405 = vpack.c.b16 %v4516, %v4509
    %v5406 = vpack.c.b16 %v4517, %v4510
    %v5407 = vpack.c.b16 %v4518, %v4511
    %v5408 = vpack.c.b16 %v4519, %v4512
    %v5409 = vpack.c.b16 %v4520, %v4513
    %v5410 = vpack.c.b16 %v4521, %v4514
    %v5411 = vpack.c.b16 %v4522, %v4515
    %v5412 = vpack.c.b16 %v4530, %v4523
    %v5413 = vpack.c.b16 %v4531, %v4524
    %v5414 = vpack.c.b16 %v4532, %v4525
    %v5415 = vpack.c.b16 %v4533, %v4526
    %v5416 = vpack.c.b16 %v4534, %v4527
    %v5417 = vpack.c.b16 %v4535, %v4528
    %v5418 = vpack.c.b16 %v4536, %v4529
    %v5419 = vpack.c.b16 %v4544, %v4537
    %v5420 = vpack.c.b16 %v4545, %v4538
    %v5421 = vpack.c.b16 %v4546, %v4539
    %v5422 = vpack.c.b16 %v4547, %v4540
    %v5423 = vpack.c.b16 %v4548, %v4541
    %v5424 = vpack.c.b16 %v4549, %v4542
    %v5425 = vpack.c.b16 %v4550, %v4543
    %v5426 = vpack.c.b16 %v4558, %v4551
    %v5427 = vpack.c.b16 %v4559, %v4552
    %v5428 = vpack.c.b16 %v4560, %v4553
    %v5429 = vpack.c.b16 %v4561, %v4554
    %v5430 = vpack.c.b16 %v4562, %v4555
    %v5431 = vpack.c.b16 %v4563, %v4556
    %v5432 = vpack.c.b16 %v4564, %v4557
    %v5433 = vpack.c.b16 %v4572, %v4565
    %v5434 = vpack.c.b16 %v4573, %v4566
    %v5435 = vpack.c.b16 %v4574, %v4567
    %v5436 = vpack.c.b16 %v4575, %v4568
    %v5437 = vpack.c.b16 %v4576, %v4569
    %v5438 = vpack.c.b16 %v4577, %v4570
    %v5439 = vpack.c.b16 %v4578, %v4571
    %v5440 = vpack.c.b16 %v4586, %v4579
    %v5441 = vpack.c.b16 %v4587, %v4580
    %v5442 = vpack.c.b16 %v4588, %v4581
    %v5443 = vpack.c.b16 %v4589, %v4582
    %v5444 = vpack.c.b16 %v4590, %v4583
    %v5445 = vpack.c.b16 %v4591, %v4584
    %v5446 = vpack.c.b16 %v4592, %v4585
    %v5447 = vpack.c.b16 %v4600, %v4593
    %v5448 = vpack.c.b16 %v4601, %v4594
    %v5449 = vpack.c.b16 %v4602, %v4595
    %v5450 = vpack.c.b16 %v4603, %v4596
    %v5451 = vpack.c.b16 %v4604, %v4597
    %v5452 = vpack.c.b16 %v4605, %v4598
    %v5453 = vpack.c.b16 %v4606, %v4599
    %v5454 = vpack.c.b16 %v4614, %v4607
    %v5455 = vpack.c.b16 %v4615, %v4608
    %v5456 = vpack.c.b16 %v4616, %v4609
    %v5457 = vpack.c.b16 %v4617, %v4610
    %v5458 = vpack.c.b16 %v4618, %v4611
    %v5459 = vpack.c.b16 %v4619, %v4612
    %v5460 = vpack.c.b16 %v4620, %v4613
    %v5461 = vpack.c.b16 %v4628, %v4621
    %v5462 = vpack.c.b16 %v4629, %v4622
    %v5463 = vpack.c.b16 %v4630, %v4623
    %v5464 = vpack.c.b16 %v4631, %v4624
    %v5465 = vpack.c.b16 %v4632, %v4625
    %v5466 = vpack.c.b16 %v4633, %v4626
    %v5467 = vpack.c.b16 %v4634, %v4627
    %v5468 = vpack.c.b16 %v4642, %v4635
    %v5469 = vpack.c.b16 %v4643, %v4636
    %v5470 = vpack.c.b16 %v4644, %v4637
    %v5471 = vpack.c.b16 %v4645, %v4638
    %v5472 = vpack.c.b16 %v4646, %v4639
    %v5473 = vpack.c.b16 %v4647, %v4640
    %v5474 = vpack.c.b16 %v4648, %v4641
    %v5475 = vpack.c.b16 %v4656, %v4649
    %v5476 = vpack.c.b16 %v4657, %v4650
    %v5477 = vpack.c.b16 %v4658, %v4651
    %v5478 = vpack.c.b16 %v4659, %v4652
    %v5479 = vpack.c.b16 %v4660, %v4653
    %v5480 = vpack.c.b16 %v4661, %v4654
    %v5481 = vpack.c.b16 %v4662, %v4655
    %v5482 = vpack.c.b16 %v4670, %v4663
    %v5483 = vpack.c.b16 %v4671, %v4664
    %v5484 = vpack.c.b16 %v4672, %v4665
    %v5485 = vpack.c.b16 %v4673, %v4666
    %v5486 = vpack.c.b16 %v4674, %v4667
    %v5487 = vpack.c.b16 %v4675, %v4668
    %v5488 = vpack.c.b16 %v4676, %v4669
    %v5489 = vpack.c.b16 %v4684, %v4677
    %v5490 = vpack.c.b16 %v4685, %v4678
    %v5491 = vpack.c.b16 %v4686, %v4679
    %v5492 = vpack.c.b16 %v4687, %v4680
    %v5493 = vpack.c.b16 %v4688, %v4681
    %v5494 = vpack.c.b16 %v4689, %v4682
    %v5495 = vpack.c.b16 %v4690, %v4683
    %v5496 = vpack.c.b16 %v4698, %v4691
    %v5497 = vpack.c.b16 %v4699, %v4692
    %v5498 = vpack.c.b16 %v4700, %v4693
    %v5499 = vpack.c.b16 %v4701, %v4694
    %v5500 = vpack.c.b16 %v4702, %v4695
    %v5501 = vpack.c.b16 %v4703, %v4696
    %v5502 = vpack.c.b16 %v4704, %v4697
    %v5503 = vpack.c.b16 %v4712, %v4705
    %v5504 = vpack.c.b16 %v4713, %v4706
    %v5505 = vpack.c.b16 %v4714, %v4707
    %v5506 = vpack.c.b16 %v4715, %v4708
    %v5507 = vpack.c.b16 %v4716, %v4709
    %v5508 = vpack.c.b16 %v4717, %v4710
    %v5509 = vpack.c.b16 %v4718, %v4711
    %v5510 = vpack.c.b16 %v4726, %v4719
    %v5511 = vpack.c.b16 %v4727, %v4720
    %v5512 = vpack.c.b16 %v4728, %v4721
    %v5513 = vpack.c.b16 %v4729, %v4722
    %v5514 = vpack.c.b16 %v4730, %v4723
    %v5515 = vpack.c.b16 %v4731, %v4724
    %v5516 = vpack.c.b16 %v4732, %v4725
    %v5517 = vpack.c.b16 %v4740, %v4733
    %v5518 = vpack.c.b16 %v4741, %v4734
    %v5519 = vpack.c.b16 %v4742, %v4735
    %v5520 = vpack.c.b16 %v4743, %v4736
    %v5521 = vpack.c.b16 %v4744, %v4737
    %v5522 = vpack.c.b16 %v4745, %v4738
    %v5523 = vpack.c.b16 %v4746, %v4739
    %v5524 = vpack.c.b16 %v4754, %v4747
    %v5525 = vpack.c.b16 %v4755, %v4748
    %v5526 = vpack.c.b16 %v4756, %v4749
    %v5527 = vpack.c.b16 %v4757, %v4750
    %v5528 = vpack.c.b16 %v4758, %v4751
    %v5529 = vpack.c.b16 %v4759, %v4752
    %v5530 = vpack.c.b16 %v4760, %v4753
    %v5531 = vpack.c.b16 %v4768, %v4761
    %v5532 = vpack.c.b16 %v4769, %v4762
    %v5533 = vpack.c.b16 %v4770, %v4763
    %v5534 = vpack.c.b16 %v4771, %v4764
    %v5535 = vpack.c.b16 %v4772, %v4765
    %v5536 = vpack.c.b16 %v4773, %v4766
    %v5537 = vpack.c.b16 %v4774, %v4767
    %v5538 = vpack.c.b16 %v4782, %v4775
    %v5539 = vpack.c.b16 %v4783, %v4776
    %v5540 = vpack.c.b16 %v4784, %v4777
    %v5541 = vpack.c.b16 %v4785, %v4778
    %v5542 = vpack.c.b16 %v4786, %v4779
    %v5543 = vpack.c.b16 %v4787, %v4780
    %v5544 = vpack.c.b16 %v4788, %v4781
    %v5545 = vpack.c.b16 %v4796, %v4789
    %v5546 = vpack.c.b16 %v4797, %v4790
    %v5547 = vpack.c.b16 %v4798, %v4791
    %v5548 = vpack.c.b16 %v4799, %v4792
    %v5549 = vpack.c.b16 %v4800, %v4793
    %v5550 = vpack.c.b16 %v4801, %v4794
    %v5551 = vpack.c.b16 %v4802, %v4795
    %v5552 = vpack.c.b16 %v4810, %v4803
    %v5553 = vpack.c.b16 %v4811, %v4804
    %v5554 = vpack.c.b16 %v4812, %v4805
    %v5555 = vpack.c.b16 %v4813, %v4806
    %v5556 = vpack.c.b16 %v4814, %v4807
    %v5557 = vpack.c.b16 %v4815, %v4808
    %v5558 = vpack.c.b16 %v4816, %v4809
    %v5559 = vpack.c.b16 %v4824, %v4817
    %v5560 = vpack.c.b16 %v4825, %v4818
    %v5561 = vpack.c.b16 %v4826, %v4819
    %v5562 = vpack.c.b16 %v4827, %v4820
    %v5563 = vpack.c.b16 %v4828, %v4821
    %v5564 = vpack.c.b16 %v4829, %v4822
    %v5565 = vpack.c.b16 %v4830, %v4823
    %v5566 = vpack.c.b16 %v4838, %v4831
    %v5567 = vpack.c.b16 %v4839, %v4832
    %v5568 = vpack.c.b16 %v4840, %v4833
    %v5569 = vpack.c.b16 %v4841, %v4834
    %v5570 = vpack.c.b16 %v4842, %v4835
    %v5571 = vpack.c.b16 %v4843, %v4836
    %v5572 = vpack.c.b16 %v4844, %v4837
    %v5573 = vpack.c.b16 %v4852, %v4845
    %v5574 = vpack.c.b16 %v4853, %v4846
    %v5575 = vpack.c.b16 %v4854, %v4847
    %v5576 = vpack.c.b16 %v4855, %v4848
    %v5577 = vpack.c.b16 %v4856, %v4849
    %v5578 = vpack.c.b16 %v4857, %v4850
    %v5579 = vpack.c.b16 %v4858, %v4851
    %v5580 = vpack.c.b16 %v4866, %v4859
    %v5581 = vpack.c.b16 %v4867, %v4860
    %v5582 = vpack.c.b16 %v4868, %v4861
    %v5583 = vpack.c.b16 %v4869, %v4862
    %v5584 = vpack.c.b16 %v4870, %v4863
    %v5585 = vpack.c.b16 %v4871, %v4864
    %v5586 = vpack.c.b16 %v4872, %v4865
    %v5587 = vpack.c.b16 %v4880, %v4873
    %v5588 = vpack.c.b16 %v4881, %v4874
    %v5589 = vpack.c.b16 %v4882, %v4875
    %v5590 = vpack.c.b16 %v4883, %v4876
    %v5591 = vpack.c.b16 %v4884, %v4877
    %v5592 = vpack.c.b16 %v4885, %v4878
    %v5593 = vpack.c.b16 %v4886, %v4879
    %v5594 = vpack.c.b16 %v4894, %v4887
    %v5595 = vpack.c.b16 %v4895, %v4888
    %v5596 = vpack.c.b16 %v4896, %v4889
    %v5597 = vpack.c.b16 %v4897, %v4890
    %v5598 = vpack.c.b16 %v4898, %v4891
    %v5599 = vpack.c.b16 %v4899, %v4892
    %v5600 = vpack.c.b16 %v4900, %v4893
    %v5601 = vpack.c.b16 %v4908, %v4901
    %v5602 = vpack.c.b16 %v4909, %v4902
    %v5603 = vpack.c.b16 %v4910, %v4903
    %v5604 = vpack.c.b16 %v4911, %v4904
    %v5605 = vpack.c.b16 %v4912, %v4905
    %v5606 = vpack.c.b16 %v4913, %v4906
    %v5607 = vpack.c.b16 %v4914, %v4907
    %v5608 = vpack.c.b16 %v4922, %v4915
    %v5609 = vpack.c.b16 %v4923, %v4916
    %v5610 = vpack.c.b16 %v4924, %v4917
    %v5611 = vpack.c.b16 %v4925, %v4918
    %v5612 = vpack.c.b16 %v4926, %v4919
    %v5613 = vpack.c.b16 %v4927, %v4920
    %v5614 = vpack.c.b16 %v4928, %v4921
    %v5615 = vpack.c.b16 %v4936, %v4929
    %v5616 = vpack.c.b16 %v4937, %v4930
    %v5617 = vpack.c.b16 %v4938, %v4931
    %v5618 = vpack.c.b16 %v4939, %v4932
    %v5619 = vpack.c.b16 %v4940, %v4933
    %v5620 = vpack.c.b16 %v4941, %v4934
    %v5621 = vpack.c.b16 %v4942, %v4935
    %v5622 = vpack.c.b16 %v4950, %v4943
    %v5623 = vpack.c.b16 %v4951, %v4944
    %v5624 = vpack.c.b16 %v4952, %v4945
    %v5625 = vpack.c.b16 %v4953, %v4946
    %v5626 = vpack.c.b16 %v4954, %v4947
    %v5627 = vpack.c.b16 %v4955, %v4948
    %v5628 = vpack.c.b16 %v4956, %v4949
    %v5629 = vpack.c.b16 %v4964, %v4957
    %v5630 = vpack.c.b16 %v4965, %v4958
    %v5631 = vpack.c.b16 %v4966, %v4959
    %v5632 = vpack.c.b16 %v4967, %v4960
    %v5633 = vpack.c.b16 %v4968, %v4961
    %v5634 = vpack.c.b16 %v4969, %v4962
    %v5635 = vpack.c.b16 %v4970, %v4963
    %v5636 = vpack.c.b16 %v4978, %v4971
    %v5637 = vpack.c.b16 %v4979, %v4972
    %v5638 = vpack.c.b16 %v4980, %v4973
    %v5639 = vpack.c.b16 %v4981, %v4974
    %v5640 = vpack.c.b16 %v4982, %v4975
    %v5641 = vpack.c.b16 %v4983, %v4976
    %v5642 = vpack.c.b16 %v4984, %v4977
    %v5643 = vpack.c.b16 %v4992, %v4985
    %v5644 = vpack.c.b16 %v4993, %v4986
    %v5645 = vpack.c.b16 %v4994, %v4987
    %v5646 = vpack.c.b16 %v4995, %v4988
    %v5647 = vpack.c.b16 %v4996, %v4989
    %v5648 = vpack.c.b16 %v4997, %v4990
    %v5649 = vpack.c.b16 %v4998, %v4991
    %v5650 = vpack.c.b16 %v5006, %v4999
    %v5651 = vpack.c.b16 %v5007, %v5000
    %v5652 = vpack.c.b16 %v5008, %v5001
    %v5653 = vpack.c.b16 %v5009, %v5002
    %v5654 = vpack.c.b16 %v5010, %v5003
    %v5655 = vpack.c.b16 %v5011, %v5004
    %v5656 = vpack.c.b16 %v5012, %v5005
    %v5657 = vpack.c.b16 %v5020, %v5013
    %v5658 = vpack.c.b16 %v5021, %v5014
    %v5659 = vpack.c.b16 %v5022, %v5015
    %v5660 = vpack.c.b16 %v5023, %v5016
    %v5661 = vpack.c.b16 %v5024, %v5017
    %v5662 = vpack.c.b16 %v5025, %v5018
    %v5663 = vpack.c.b16 %v5026, %v5019
    %v5664 = vpack.c.b16 %v5034, %v5027
    %v5665 = vpack.c.b16 %v5035, %v5028
    %v5666 = vpack.c.b16 %v5036, %v5029
    %v5667 = vpack.c.b16 %v5037, %v5030
    %v5668 = vpack.c.b16 %v5038, %v5031
    %v5669 = vpack.c.b16 %v5039, %v5032
    %v5670 = vpack.c.b16 %v5040, %v5033
    %v5671 = vpack.c.b16 %v5048, %v5041
    %v5672 = vpack.c.b16 %v5049, %v5042
    %v5673 = vpack.c.b16 %v5050, %v5043
    %v5674 = vpack.c.b16 %v5051, %v5044
    %v5675 = vpack.c.b16 %v5052, %v5045
    %v5676 = vpack.c.b16 %v5053, %v5046
    %v5677 = vpack.c.b16 %v5054, %v5047
    %v5678 = vpack.c.b16 %v5062, %v5055
    %v5679 = vpack.c.b16 %v5063, %v5056
    %v5680 = vpack.c.b16 %v5064, %v5057
    %v5681 = vpack.c.b16 %v5065, %v5058
    %v5682 = vpack.c.b16 %v5066, %v5059
    %v5683 = vpack.c.b16 %v5067, %v5060
    %v5684 = vpack.c.b16 %v5068, %v5061
    %v5685 = vpack.c.b16 %v5076, %v5069
    %v5686 = vpack.c.b16 %v5077, %v5070
    %v5687 = vpack.c.b16 %v5078, %v5071
    %v5688 = vpack.c.b16 %v5079, %v5072
    %v5689 = vpack.c.b16 %v5080, %v5073
    %v5690 = vpack.c.b16 %v5081, %v5074
    %v5691 = vpack.c.b16 %v5082, %v5075
    %v5692 = vpack.c.b16 %v5090, %v5083
    %v5693 = vpack.c.b16 %v5091, %v5084
    %v5694 = vpack.c.b16 %v5092, %v5085
    %v5695 = vpack.c.b16 %v5093, %v5086
    %v5696 = vpack.c.b16 %v5094, %v5087
    %v5697 = vpack.c.b16 %v5095, %v5088
    %v5698 = vpack.c.b16 %v5096, %v5089
    %v5699 = vpack.c.b16 %v5104, %v5097
    %v5700 = vpack.c.b16 %v5105, %v5098
    %v5701 = vpack.c.b16 %v5106, %v5099
    %v5702 = vpack.c.b16 %v5107, %v5100
    %v5703 = vpack.c.b16 %v5108, %v5101
    %v5704 = vpack.c.b16 %v5109, %v5102
    %v5705 = vpack.c.b16 %v5110, %v5103
    %v5706 = vpack.c.b16 %v5118, %v5111
    %v5707 = vpack.c.b16 %v5119, %v5112
    %v5708 = vpack.c.b16 %v5120, %v5113
    %v5709 = vpack.c.b16 %v5121, %v5114
    %v5710 = vpack.c.b16 %v5122, %v5115
    %v5711 = vpack.c.b16 %v5123, %v5116
    %v5712 = vpack.c.b16 %v5124, %v5117
    %v5713 = vpack.c.b16 %v5132, %v5125
    %v5714 = vpack.c.b16 %v5133, %v5126
    %v5715 = vpack.c.b16 %v5134, %v5127
    %v5716 = vpack.c.b16 %v5135, %v5128
    %v5717 = vpack.c.b16 %v5136, %v5129
    %v5718 = vpack.c.b16 %v5137, %v5130
    %v5719 = vpack.c.b16 %v5138, %v5131
    %v5720 = vpack.c.b16 %v5146, %v5139
    %v5721 = vpack.c.b16 %v5147, %v5140
    %v5722 = vpack.c.b16 %v5148, %v5141
    %v5723 = vpack.c.b16 %v5149, %v5142
    %v5724 = vpack.c.b16 %v5150, %v5143
    %v5725 = vpack.c.b16 %v5151, %v5144
    %v5726 = vpack.c.b16 %v5152, %v5145
    %v5727 = vpack.c.b16 %v5160, %v5153
    %v5728 = vpack.c.b16 %v5161, %v5154
    %v5729 = vpack.c.b16 %v5162, %v5155
    %v5730 = vpack.c.b16 %v5163, %v5156
    %v5731 = vpack.c.b16 %v5164, %v5157
    %v5732 = vpack.c.b16 %v5165, %v5158
    %v5733 = vpack.c.b16 %v5166, %v5159
    %v5734 = vpack.c.b16 %v5174, %v5167
    %v5735 = vpack.c.b16 %v5175, %v5168
    %v5736 = vpack.c.b16 %v5176, %v5169
    %v5737 = vpack.c.b16 %v5177, %v5170
    %v5738 = vpack.c.b16 %v5178, %v5171
    %v5739 = vpack.c.b16 %v5179, %v5172
    %v5740 = vpack.c.b16 %v5180, %v5173
    %v5741 = vpack.c.b16 %v5188, %v5181
    %v5742 = vpack.c.b16 %v5189, %v5182
    %v5743 = vpack.c.b16 %v5190, %v5183
    %v5744 = vpack.c.b16 %v5191, %v5184
    %v5745 = vpack.c.b16 %v5192, %v5185
    %v5746 = vpack.c.b16 %v5193, %v5186
    %v5747 = vpack.c.b16 %v5194, %v5187
    %v5748 = vpack.c.b16 %v5202, %v5195
    %v5749 = vpack.c.b16 %v5203, %v5196
    %v5750 = vpack.c.b16 %v5204, %v5197
    %v5751 = vpack.c.b16 %v5205, %v5198
    %v5752 = vpack.c.b16 %v5206, %v5199
    %v5753 = vpack.c.b16 %v5207, %v5200
    %v5754 = vpack.c.b16 %v5208, %v5201
    %v5755 = vpack.c.b16 %v5216, %v5209
    %v5756 = vpack.c.b16 %v5217, %v5210
    %v5757 = vpack.c.b16 %v5218, %v5211
    %v5758 = vpack.c.b16 %v5219, %v5212
    %v5759 = vpack.c.b16 %v5220, %v5213
    %v5760 = vpack.c.b16 %v5221, %v5214
    %v5761 = vpack.c.b16 %v5222, %v5215
    %v5762 = vpack.c.b16 %v5230, %v5223
    %v5763 = vpack.c.b16 %v5231, %v5224
    %v5764 = vpack.c.b16 %v5232, %v5225
    %v5765 = vpack.c.b16 %v5233, %v5226
    %v5766 = vpack.c.b16 %v5234, %v5227
    %v5767 = vpack.c.b16 %v5235, %v5228
    %v5768 = vpack.c.b16 %v5236, %v5229
    %v5769 = vpack.c.b16 %v5244, %v5237
    %v5770 = vpack.c.b16 %v5245, %v5238
    %v5771 = vpack.c.b16 %v5246, %v5239
    %v5772 = vpack.c.b16 %v5247, %v5240
    %v5773 = vpack.c.b16 %v5248, %v5241
    %v5774 = vpack.c.b16 %v5249, %v5242
    %v5775 = vpack.c.b16 %v5250, %v5243
    %v5776 = vpack.c.b16 %v5258, %v5251
    %v5777 = vpack.c.b16 %v5259, %v5252
    %v5778 = vpack.c.b16 %v5260, %v5253
    %v5779 = vpack.c.b16 %v5261, %v5254
    %v5780 = vpack.c.b16 %v5262, %v5255
    %v5781 = vpack.c.b16 %v5263, %v5256
    %v5782 = vpack.c.b16 %v5264, %v5257
    %v5783 = vpack.c.b16 %v5272, %v5265
    %v5784 = vpack.c.b16 %v5273, %v5266
    %v5785 = vpack.c.b16 %v5274, %v5267
    %v5786 = vpack.c.b16 %v5275, %v5268
    %v5787 = vpack.c.b16 %v5276, %v5269
    %v5788 = vpack.c.b16 %v5277, %v5270
    %v5789 = vpack.c.b16 %v5278, %v5271
    %v5790 = vpack.c.b16 %v5286, %v5279
    %v5791 = vpack.c.b16 %v5287, %v5280
    %v5792 = vpack.c.b16 %v5288, %v5281
    %v5793 = vpack.c.b16 %v5289, %v5282
    %v5794 = vpack.c.b16 %v5290, %v5283
    %v5795 = vpack.c.b16 %v5291, %v5284
    %v5796 = vpack.c.b16 %v5292, %v5285
    %v5797 = vpack.c.b16 %v5300, %v5293
    %v5798 = vpack.c.b16 %v5301, %v5294
    %v5799 = vpack.c.b16 %v5302, %v5295
    %v5800 = vpack.c.b16 %v5303, %v5296
    %v5801 = vpack.c.b16 %v5304, %v5297
    %v5802 = vpack.c.b16 %v5305, %v5298
    %v5803 = vpack.c.b16 %v5306, %v5299
    %v5804 = vpack.c.b16 %v5314, %v5307
    %v5805 = vpack.c.b16 %v5315, %v5308
    %v5806 = vpack.c.b16 %v5316, %v5309
    %v5807 = vpack.c.b16 %v5317, %v5310
    %v5808 = vpack.c.b16 %v5318, %v5311
    %v5809 = vpack.c.b16 %v5319, %v5312
    %v5810 = vpack.c.b16 %v5320, %v5313
    %v5811 = vpack.c.b16 %v5328, %v5321
    %v5812 = vpack.c.b16 %v5329, %v5322
    %v5813 = vpack.c.b16 %v5330, %v5323
    %v5814 = vpack.c.b16 %v5331, %v5324
    %v5815 = vpack.c.b16 %v5332, %v5325
    %v5816 = vpack.c.b16 %v5333, %v5326
    %v5817 = vpack.c.b16 %v5334, %v5327
    %v5818 = vpack.c.b16 %v5342, %v5335
    %v5819 = vpack.c.b16 %v5343, %v5336
    %v5820 = vpack.c.b16 %v5344, %v5337
    %v5821 = vpack.c.b16 %v5345, %v5338
    %v5822 = vpack.c.b16 %v5346, %v5339
    %v5823 = vpack.c.b16 %v5347, %v5340
    %v5824 = vpack.c.b16 %v5348, %v5341
    %v5825 = vpack.c.b16 %v5356, %v5349
    %v5826 = vpack.c.b16 %v5357, %v5350
    %v5827 = vpack.c.b16 %v5358, %v5351
    %v5828 = vpack.c.b16 %v5359, %v5352
    %v5829 = vpack.c.b16 %v5360, %v5353
    %v5830 = vpack.c.b16 %v5361, %v5354
    %v5831 = vpack.c.b16 %v5362, %v5355
    %v5832 = vpack.c.b16 %v5370, %v5363
    %v5833 = vpack.c.b16 %v5371, %v5364
    %v5834 = vpack.c.b16 %v5372, %v5365
    %v5835 = vpack.c.b16 %v5373, %v5366
    %v5836 = vpack.c.b16 %v5374, %v5367
    %v5837 = vpack.c.b16 %v5375, %v5368
    %v5838 = vpack.c.b16 %v5376, %v5369
    %v5839 = vpack.c.b16 %v5384, %v5377
    %v5840 = vpack.c.b16 %v5385, %v5378
    %v5841 = vpack.c.b16 %v5386, %v5379
    %v5842 = vpack.c.b16 %v5387, %v5380
    %v5843 = vpack.c.b16 %v5388, %v5381
    %v5844 = vpack.c.b16 %v5389, %v5382
    %v5845 = vpack.c.b16 %v5390, %v5383
    %v5846 = vpack.c.b16 %v5398, %v5391
    %v5847 = vpack.c.b16 %v5399, %v5392
    %v5848 = vpack.c.b16 %v5400, %v5393
    %v5849 = vpack.c.b16 %v5401, %v5394
    %v5850 = vpack.c.b16 %v5402, %v5395
    %v5851 = vpack.c.b16 %v5403, %v5396
    %v5852 = vpack.c.b16 %v5404, %v5397
    %6301 = vmatpush.bf16.msra.mxu0 %v5454
    %6302 = vmatpush.bf16.msra.mxu0 %v5447
    %6303 = vmatpush.bf16.msra.mxu0 %v5440
    %6304 = vmatpush.bf16.msra.mxu0 %v5433
    %6305 = vmatpush.bf16.msra.mxu0 %v5426
    %6306 = vmatpush.bf16.msra.mxu0 %v5419
    %6307 = vmatpush.bf16.msra.mxu0 %v5412
    %6308 = vmatpush.bf16.msra.mxu0 %v5405
    %6309 = vmatmul.bf16.gmra.mxu0 %v3974
    %v6310 = vpop.f32.mrf.mxu0
    %v6311 = vadd.f32 %v3983, %v6310
    %v6312 = vpop.f32.mrf.mxu0
    %6313 = vdwg.mxu0
    %6314 = vmatpush.bf16.msra.mxu0 %v5510
    %6315 = vmatpush.bf16.msra.mxu0 %v5503
    %6316 = vmatpush.bf16.msra.mxu0 %v5496
    %6317 = vmatpush.bf16.msra.mxu0 %v5489
    %6318 = vmatpush.bf16.msra.mxu0 %v5482
    %6319 = vmatpush.bf16.msra.mxu0 %v5475
    %6320 = vmatpush.bf16.msra.mxu0 %v5468
    %6321 = vmatpush.bf16.msra.mxu0 %v5461
    %6322 = vmatmul.bf16.gmra.mxu0 %v3975
    %v6323 = vpop.f32.mrf.mxu0
    %v6324 = vadd.f32 %v6311, %v6323
    %v6325 = vpop.f32.mrf.mxu0
    %6326 = vdwg.mxu0
    %6327 = vmatpush.bf16.msra.mxu0 %v5566
    %6328 = vmatpush.bf16.msra.mxu0 %v5559
    %6329 = vmatpush.bf16.msra.mxu0 %v5552
    %6330 = vmatpush.bf16.msra.mxu0 %v5545
    %6331 = vmatpush.bf16.msra.mxu0 %v5538
    %6332 = vmatpush.bf16.msra.mxu0 %v5531
    %6333 = vmatpush.bf16.msra.mxu0 %v5524
    %6334 = vmatpush.bf16.msra.mxu0 %v5517
    %6335 = vmatmul.bf16.gmra.mxu0 %v3976
    %v6336 = vpop.f32.mrf.mxu0
    %v6337 = vadd.f32 %v6324, %v6336
    %v6338 = vpop.f32.mrf.mxu0
    %6339 = vdwg.mxu0
    %6340 = vmatpush.bf16.msra.mxu0 %v5622
    %6341 = vmatpush.bf16.msra.mxu0 %v5615
    %6342 = vmatpush.bf16.msra.mxu0 %v5608
    %6343 = vmatpush.bf16.msra.mxu0 %v5601
    %6344 = vmatpush.bf16.msra.mxu0 %v5594
    %6345 = vmatpush.bf16.msra.mxu0 %v5587
    %6346 = vmatpush.bf16.msra.mxu0 %v5580
    %6347 = vmatpush.bf16.msra.mxu0 %v5573
    %6348 = vmatmul.bf16.gmra.mxu0 %v3977
    %v6349 = vpop.f32.mrf.mxu0
    %v6350 = vadd.f32 %v6337, %v6349
    %v6351 = vpop.f32.mrf.mxu0
    %6352 = vdwg.mxu0
    %6353 = vmatpush.bf16.msra.mxu0 %v5678
    %6354 = vmatpush.bf16.msra.mxu0 %v5671
    %6355 = vmatpush.bf16.msra.mxu0 %v5664
    %6356 = vmatpush.bf16.msra.mxu0 %v5657
    %6357 = vmatpush.bf16.msra.mxu0 %v5650
    %6358 = vmatpush.bf16.msra.mxu0 %v5643
    %6359 = vmatpush.bf16.msra.mxu0 %v5636
    %6360 = vmatpush.bf16.msra.mxu0 %v5629
    %6361 = vmatmul.bf16.gmra.mxu0 %v3978
    %v6362 = vpop.f32.mrf.mxu0
    %v6363 = vadd.f32 %v6350, %v6362
    %v6364 = vpop.f32.mrf.mxu0
    %6365 = vdwg.mxu0
    %6366 = vmatpush.bf16.msra.mxu0 %v5734
    %6367 = vmatpush.bf16.msra.mxu0 %v5727
    %6368 = vmatpush.bf16.msra.mxu0 %v5720
    %6369 = vmatpush.bf16.msra.mxu0 %v5713
    %6370 = vmatpush.bf16.msra.mxu0 %v5706
    %6371 = vmatpush.bf16.msra.mxu0 %v5699
    %6372 = vmatpush.bf16.msra.mxu0 %v5692
    %6373 = vmatpush.bf16.msra.mxu0 %v5685
    %6374 = vmatmul.bf16.gmra.mxu0 %v3979
    %v6375 = vpop.f32.mrf.mxu0
    %v6376 = vadd.f32 %v6363, %v6375
    %v6377 = vpop.f32.mrf.mxu0
    %6378 = vdwg.mxu0
    %6379 = vmatpush.bf16.msra.mxu0 %v5790
    %6380 = vmatpush.bf16.msra.mxu0 %v5783
    %6381 = vmatpush.bf16.msra.mxu0 %v5776
    %6382 = vmatpush.bf16.msra.mxu0 %v5769
    %6383 = vmatpush.bf16.msra.mxu0 %v5762
    %6384 = vmatpush.bf16.msra.mxu0 %v5755
    %6385 = vmatpush.bf16.msra.mxu0 %v5748
    %6386 = vmatpush.bf16.msra.mxu0 %v5741
    %6387 = vmatmul.bf16.gmra.mxu0 %v3980
    %v6388 = vpop.f32.mrf.mxu0
    %v6389 = vadd.f32 %v6376, %v6388
    %v6390 = vpop.f32.mrf.mxu0
    %6391 = vdwg.mxu0
    %6392 = vmatpush.bf16.msra.mxu0 %v5846
    %6393 = vmatpush.bf16.msra.mxu0 %v5839
    %6394 = vmatpush.bf16.msra.mxu0 %v5832
    %6395 = vmatpush.bf16.msra.mxu0 %v5825
    %6396 = vmatpush.bf16.msra.mxu0 %v5818
    %6397 = vmatpush.bf16.msra.mxu0 %v5811
    %6398 = vmatpush.bf16.msra.mxu0 %v5804
    %6399 = vmatpush.bf16.msra.mxu0 %v5797
    %6400 = vmatmul.bf16.gmra.mxu0 %v3981
    %v6401 = vpop.f32.mrf.mxu0
    %v6402 = vadd.f32 %v6389, %v6401
    %v6403 = vpop.f32.mrf.mxu0
    %6404 = vdwg.mxu0
    %6405 = vmatpush.bf16.msra.mxu0 %v5455
    %6406 = vmatpush.bf16.msra.mxu0 %v5448
    %6407 = vmatpush.bf16.msra.mxu0 %v5441
    %6408 = vmatpush.bf16.msra.mxu0 %v5434
    %6409 = vmatpush.bf16.msra.mxu0 %v5427
    %6410 = vmatpush.bf16.msra.mxu0 %v5420
    %6411 = vmatpush.bf16.msra.mxu0 %v5413
    %6412 = vmatpush.bf16.msra.mxu0 %v5406
    %6413 = vmatmul.bf16.gmra.mxu0 %v3974
    %v6414 = vpop.f32.mrf.mxu0
    %v6415 = vadd.f32 %v3984, %v6414
    %v6416 = vpop.f32.mrf.mxu0
    %6417 = vdwg.mxu0
    %6418 = vmatpush.bf16.msra.mxu0 %v5511
    %6419 = vmatpush.bf16.msra.mxu0 %v5504
    %6420 = vmatpush.bf16.msra.mxu0 %v5497
    %6421 = vmatpush.bf16.msra.mxu0 %v5490
    %6422 = vmatpush.bf16.msra.mxu0 %v5483
    %6423 = vmatpush.bf16.msra.mxu0 %v5476
    %6424 = vmatpush.bf16.msra.mxu0 %v5469
    %6425 = vmatpush.bf16.msra.mxu0 %v5462
    %6426 = vmatmul.bf16.gmra.mxu0 %v3975
    %v6427 = vpop.f32.mrf.mxu0
    %v6428 = vadd.f32 %v6415, %v6427
    %v6429 = vpop.f32.mrf.mxu0
    %6430 = vdwg.mxu0
    %6431 = vmatpush.bf16.msra.mxu0 %v5567
    %6432 = vmatpush.bf16.msra.mxu0 %v5560
    %6433 = vmatpush.bf16.msra.mxu0 %v5553
    %6434 = vmatpush.bf16.msra.mxu0 %v5546
    %6435 = vmatpush.bf16.msra.mxu0 %v5539
    %6436 = vmatpush.bf16.msra.mxu0 %v5532
    %6437 = vmatpush.bf16.msra.mxu0 %v5525
    %6438 = vmatpush.bf16.msra.mxu0 %v5518
    %6439 = vmatmul.bf16.gmra.mxu0 %v3976
    %v6440 = vpop.f32.mrf.mxu0
    %v6441 = vadd.f32 %v6428, %v6440
    %v6442 = vpop.f32.mrf.mxu0
    %6443 = vdwg.mxu0
    %6444 = vmatpush.bf16.msra.mxu0 %v5623
    %6445 = vmatpush.bf16.msra.mxu0 %v5616
    %6446 = vmatpush.bf16.msra.mxu0 %v5609
    %6447 = vmatpush.bf16.msra.mxu0 %v5602
    %6448 = vmatpush.bf16.msra.mxu0 %v5595
    %6449 = vmatpush.bf16.msra.mxu0 %v5588
    %6450 = vmatpush.bf16.msra.mxu0 %v5581
    %6451 = vmatpush.bf16.msra.mxu0 %v5574
    %6452 = vmatmul.bf16.gmra.mxu0 %v3977
    %v6453 = vpop.f32.mrf.mxu0
    %v6454 = vadd.f32 %v6441, %v6453
    %v6455 = vpop.f32.mrf.mxu0
    %6456 = vdwg.mxu0
    %6457 = vmatpush.bf16.msra.mxu0 %v5679
    %6458 = vmatpush.bf16.msra.mxu0 %v5672
    %6459 = vmatpush.bf16.msra.mxu0 %v5665
    %6460 = vmatpush.bf16.msra.mxu0 %v5658
    %6461 = vmatpush.bf16.msra.mxu0 %v5651
    %6462 = vmatpush.bf16.msra.mxu0 %v5644
    %6463 = vmatpush.bf16.msra.mxu0 %v5637
    %6464 = vmatpush.bf16.msra.mxu0 %v5630
    %6465 = vmatmul.bf16.gmra.mxu0 %v3978
    %v6466 = vpop.f32.mrf.mxu0
    %v6467 = vadd.f32 %v6454, %v6466
    %v6468 = vpop.f32.mrf.mxu0
    %6469 = vdwg.mxu0
    %6470 = vmatpush.bf16.msra.mxu0 %v5735
    %6471 = vmatpush.bf16.msra.mxu0 %v5728
    %6472 = vmatpush.bf16.msra.mxu0 %v5721
    %6473 = vmatpush.bf16.msra.mxu0 %v5714
    %6474 = vmatpush.bf16.msra.mxu0 %v5707
    %6475 = vmatpush.bf16.msra.mxu0 %v5700
    %6476 = vmatpush.bf16.msra.mxu0 %v5693
    %6477 = vmatpush.bf16.msra.mxu0 %v5686
    %6478 = vmatmul.bf16.gmra.mxu0 %v3979
    %v6479 = vpop.f32.mrf.mxu0
    %v6480 = vadd.f32 %v6467, %v6479
    %v6481 = vpop.f32.mrf.mxu0
    %6482 = vdwg.mxu0
    %6483 = vmatpush.bf16.msra.mxu0 %v5791
    %6484 = vmatpush.bf16.msra.mxu0 %v5784
    %6485 = vmatpush.bf16.msra.mxu0 %v5777
    %6486 = vmatpush.bf16.msra.mxu0 %v5770
    %6487 = vmatpush.bf16.msra.mxu0 %v5763
    %6488 = vmatpush.bf16.msra.mxu0 %v5756
    %6489 = vmatpush.bf16.msra.mxu0 %v5749
    %6490 = vmatpush.bf16.msra.mxu0 %v5742
    %6491 = vmatmul.bf16.gmra.mxu0 %v3980
    %v6492 = vpop.f32.mrf.mxu0
    %v6493 = vadd.f32 %v6480, %v6492
    %v6494 = vpop.f32.mrf.mxu0
    %6495 = vdwg.mxu0
    %6496 = vmatpush.bf16.msra.mxu0 %v5847
    %6497 = vmatpush.bf16.msra.mxu0 %v5840
    %6498 = vmatpush.bf16.msra.mxu0 %v5833
    %6499 = vmatpush.bf16.msra.mxu0 %v5826
    %6500 = vmatpush.bf16.msra.mxu0 %v5819
    %6501 = vmatpush.bf16.msra.mxu0 %v5812
    %6502 = vmatpush.bf16.msra.mxu0 %v5805
    %6503 = vmatpush.bf16.msra.mxu0 %v5798
    %6504 = vmatmul.bf16.gmra.mxu0 %v3981
    %v6505 = vpop.f32.mrf.mxu0
    %v6506 = vadd.f32 %v6493, %v6505
    %v6507 = vpop.f32.mrf.mxu0
    %6508 = vdwg.mxu0
    %6509 = vmatpush.bf16.msra.mxu0 %v5456
    %6510 = vmatpush.bf16.msra.mxu0 %v5449
    %6511 = vmatpush.bf16.msra.mxu0 %v5442
    %6512 = vmatpush.bf16.msra.mxu0 %v5435
    %6513 = vmatpush.bf16.msra.mxu0 %v5428
    %6514 = vmatpush.bf16.msra.mxu0 %v5421
    %6515 = vmatpush.bf16.msra.mxu0 %v5414
    %6516 = vmatpush.bf16.msra.mxu0 %v5407
    %6517 = vmatmul.bf16.gmra.mxu0 %v3974
    %v6518 = vpop.f32.mrf.mxu0
    %v6519 = vadd.f32 %v3985, %v6518
    %v6520 = vpop.f32.mrf.mxu0
    %6521 = vdwg.mxu0
    %6522 = vmatpush.bf16.msra.mxu0 %v5512
    %6523 = vmatpush.bf16.msra.mxu0 %v5505
    %6524 = vmatpush.bf16.msra.mxu0 %v5498
    %6525 = vmatpush.bf16.msra.mxu0 %v5491
    %6526 = vmatpush.bf16.msra.mxu0 %v5484
    %6527 = vmatpush.bf16.msra.mxu0 %v5477
    %6528 = vmatpush.bf16.msra.mxu0 %v5470
    %6529 = vmatpush.bf16.msra.mxu0 %v5463
    %6530 = vmatmul.bf16.gmra.mxu0 %v3975
    %v6531 = vpop.f32.mrf.mxu0
    %v6532 = vadd.f32 %v6519, %v6531
    %v6533 = vpop.f32.mrf.mxu0
    %6534 = vdwg.mxu0
    %6535 = vmatpush.bf16.msra.mxu0 %v5568
    %6536 = vmatpush.bf16.msra.mxu0 %v5561
    %6537 = vmatpush.bf16.msra.mxu0 %v5554
    %6538 = vmatpush.bf16.msra.mxu0 %v5547
    %6539 = vmatpush.bf16.msra.mxu0 %v5540
    %6540 = vmatpush.bf16.msra.mxu0 %v5533
    %6541 = vmatpush.bf16.msra.mxu0 %v5526
    %6542 = vmatpush.bf16.msra.mxu0 %v5519
    %6543 = vmatmul.bf16.gmra.mxu0 %v3976
    %v6544 = vpop.f32.mrf.mxu0
    %v6545 = vadd.f32 %v6532, %v6544
    %v6546 = vpop.f32.mrf.mxu0
    %6547 = vdwg.mxu0
    %6548 = vmatpush.bf16.msra.mxu0 %v5624
    %6549 = vmatpush.bf16.msra.mxu0 %v5617
    %6550 = vmatpush.bf16.msra.mxu0 %v5610
    %6551 = vmatpush.bf16.msra.mxu0 %v5603
    %6552 = vmatpush.bf16.msra.mxu0 %v5596
    %6553 = vmatpush.bf16.msra.mxu0 %v5589
    %6554 = vmatpush.bf16.msra.mxu0 %v5582
    %6555 = vmatpush.bf16.msra.mxu0 %v5575
    %6556 = vmatmul.bf16.gmra.mxu0 %v3977
    %v6557 = vpop.f32.mrf.mxu0
    %v6558 = vadd.f32 %v6545, %v6557
    %v6559 = vpop.f32.mrf.mxu0
    %6560 = vdwg.mxu0
    %6561 = vmatpush.bf16.msra.mxu0 %v5680
    %6562 = vmatpush.bf16.msra.mxu0 %v5673
    %6563 = vmatpush.bf16.msra.mxu0 %v5666
    %6564 = vmatpush.bf16.msra.mxu0 %v5659
    %6565 = vmatpush.bf16.msra.mxu0 %v5652
    %6566 = vmatpush.bf16.msra.mxu0 %v5645
    %6567 = vmatpush.bf16.msra.mxu0 %v5638
    %6568 = vmatpush.bf16.msra.mxu0 %v5631
    %6569 = vmatmul.bf16.gmra.mxu0 %v3978
    %v6570 = vpop.f32.mrf.mxu0
    %v6571 = vadd.f32 %v6558, %v6570
    %v6572 = vpop.f32.mrf.mxu0
    %6573 = vdwg.mxu0
    %6574 = vmatpush.bf16.msra.mxu0 %v5736
    %6575 = vmatpush.bf16.msra.mxu0 %v5729
    %6576 = vmatpush.bf16.msra.mxu0 %v5722
    %6577 = vmatpush.bf16.msra.mxu0 %v5715
    %6578 = vmatpush.bf16.msra.mxu0 %v5708
    %6579 = vmatpush.bf16.msra.mxu0 %v5701
    %6580 = vmatpush.bf16.msra.mxu0 %v5694
    %6581 = vmatpush.bf16.msra.mxu0 %v5687
    %6582 = vmatmul.bf16.gmra.mxu0 %v3979
    %v6583 = vpop.f32.mrf.mxu0
    %v6584 = vadd.f32 %v6571, %v6583
    %v6585 = vpop.f32.mrf.mxu0
    %6586 = vdwg.mxu0
    %6587 = vmatpush.bf16.msra.mxu0 %v5792
    %6588 = vmatpush.bf16.msra.mxu0 %v5785
    %6589 = vmatpush.bf16.msra.mxu0 %v5778
    %6590 = vmatpush.bf16.msra.mxu0 %v5771
    %6591 = vmatpush.bf16.msra.mxu0 %v5764
    %6592 = vmatpush.bf16.msra.mxu0 %v5757
    %6593 = vmatpush.bf16.msra.mxu0 %v5750
    %6594 = vmatpush.bf16.msra.mxu0 %v5743
    %6595 = vmatmul.bf16.gmra.mxu0 %v3980
    %v6596 = vpop.f32.mrf.mxu0
    %v6597 = vadd.f32 %v6584, %v6596
    %v6598 = vpop.f32.mrf.mxu0
    %6599 = vdwg.mxu0
    %6600 = vmatpush.bf16.msra.mxu0 %v5848
    %6601 = vmatpush.bf16.msra.mxu0 %v5841
    %6602 = vmatpush.bf16.msra.mxu0 %v5834
    %6603 = vmatpush.bf16.msra.mxu0 %v5827
    %6604 = vmatpush.bf16.msra.mxu0 %v5820
    %6605 = vmatpush.bf16.msra.mxu0 %v5813
    %6606 = vmatpush.bf16.msra.mxu0 %v5806
    %6607 = vmatpush.bf16.msra.mxu0 %v5799
    %6608 = vmatmul.bf16.gmra.mxu0 %v3981
    %v6609 = vpop.f32.mrf.mxu0
    %v6610 = vadd.f32 %v6597, %v6609
    %v6611 = vpop.f32.mrf.mxu0
    %6612 = vdwg.mxu0
    %6613 = vmatpush.bf16.msra.mxu0 %v5457
    %6614 = vmatpush.bf16.msra.mxu0 %v5450
    %6615 = vmatpush.bf16.msra.mxu0 %v5443
    %6616 = vmatpush.bf16.msra.mxu0 %v5436
    %6617 = vmatpush.bf16.msra.mxu0 %v5429
    %6618 = vmatpush.bf16.msra.mxu0 %v5422
    %6619 = vmatpush.bf16.msra.mxu0 %v5415
    %6620 = vmatpush.bf16.msra.mxu0 %v5408
    %6621 = vmatmul.bf16.gmra.mxu0 %v3974
    %v6622 = vpop.f32.mrf.mxu0
    %v6623 = vadd.f32 %v3986, %v6622
    %v6624 = vpop.f32.mrf.mxu0
    %6625 = vdwg.mxu0
    %6626 = vmatpush.bf16.msra.mxu0 %v5513
    %6627 = vmatpush.bf16.msra.mxu0 %v5506
    %6628 = vmatpush.bf16.msra.mxu0 %v5499
    %6629 = vmatpush.bf16.msra.mxu0 %v5492
    %6630 = vmatpush.bf16.msra.mxu0 %v5485
    %6631 = vmatpush.bf16.msra.mxu0 %v5478
    %6632 = vmatpush.bf16.msra.mxu0 %v5471
    %6633 = vmatpush.bf16.msra.mxu0 %v5464
    %6634 = vmatmul.bf16.gmra.mxu0 %v3975
    %v6635 = vpop.f32.mrf.mxu0
    %v6636 = vadd.f32 %v6623, %v6635
    %v6637 = vpop.f32.mrf.mxu0
    %6638 = vdwg.mxu0
    %6639 = vmatpush.bf16.msra.mxu0 %v5569
    %6640 = vmatpush.bf16.msra.mxu0 %v5562
    %6641 = vmatpush.bf16.msra.mxu0 %v5555
    %6642 = vmatpush.bf16.msra.mxu0 %v5548
    %6643 = vmatpush.bf16.msra.mxu0 %v5541
    %6644 = vmatpush.bf16.msra.mxu0 %v5534
    %6645 = vmatpush.bf16.msra.mxu0 %v5527
    %6646 = vmatpush.bf16.msra.mxu0 %v5520
    %6647 = vmatmul.bf16.gmra.mxu0 %v3976
    %v6648 = vpop.f32.mrf.mxu0
    %v6649 = vadd.f32 %v6636, %v6648
    %v6650 = vpop.f32.mrf.mxu0
    %6651 = vdwg.mxu0
    %6652 = vmatpush.bf16.msra.mxu0 %v5625
    %6653 = vmatpush.bf16.msra.mxu0 %v5618
    %6654 = vmatpush.bf16.msra.mxu0 %v5611
    %6655 = vmatpush.bf16.msra.mxu0 %v5604
    %6656 = vmatpush.bf16.msra.mxu0 %v5597
    %6657 = vmatpush.bf16.msra.mxu0 %v5590
    %6658 = vmatpush.bf16.msra.mxu0 %v5583
    %6659 = vmatpush.bf16.msra.mxu0 %v5576
    %6660 = vmatmul.bf16.gmra.mxu0 %v3977
    %v6661 = vpop.f32.mrf.mxu0
    %v6662 = vadd.f32 %v6649, %v6661
    %v6663 = vpop.f32.mrf.mxu0
    %6664 = vdwg.mxu0
    %6665 = vmatpush.bf16.msra.mxu0 %v5681
    %6666 = vmatpush.bf16.msra.mxu0 %v5674
    %6667 = vmatpush.bf16.msra.mxu0 %v5667
    %6668 = vmatpush.bf16.msra.mxu0 %v5660
    %6669 = vmatpush.bf16.msra.mxu0 %v5653
    %6670 = vmatpush.bf16.msra.mxu0 %v5646
    %6671 = vmatpush.bf16.msra.mxu0 %v5639
    %6672 = vmatpush.bf16.msra.mxu0 %v5632
    %6673 = vmatmul.bf16.gmra.mxu0 %v3978
    %v6674 = vpop.f32.mrf.mxu0
    %v6675 = vadd.f32 %v6662, %v6674
    %v6676 = vpop.f32.mrf.mxu0
    %6677 = vdwg.mxu0
    %6678 = vmatpush.bf16.msra.mxu0 %v5737
    %6679 = vmatpush.bf16.msra.mxu0 %v5730
    %6680 = vmatpush.bf16.msra.mxu0 %v5723
    %6681 = vmatpush.bf16.msra.mxu0 %v5716
    %6682 = vmatpush.bf16.msra.mxu0 %v5709
    %6683 = vmatpush.bf16.msra.mxu0 %v5702
    %6684 = vmatpush.bf16.msra.mxu0 %v5695
    %6685 = vmatpush.bf16.msra.mxu0 %v5688
    %6686 = vmatmul.bf16.gmra.mxu0 %v3979
    %v6687 = vpop.f32.mrf.mxu0
    %v6688 = vadd.f32 %v6675, %v6687
    %v6689 = vpop.f32.mrf.mxu0
    %6690 = vdwg.mxu0
    %6691 = vmatpush.bf16.msra.mxu0 %v5793
    %6692 = vmatpush.bf16.msra.mxu0 %v5786
    %6693 = vmatpush.bf16.msra.mxu0 %v5779
    %6694 = vmatpush.bf16.msra.mxu0 %v5772
    %6695 = vmatpush.bf16.msra.mxu0 %v5765
    %6696 = vmatpush.bf16.msra.mxu0 %v5758
    %6697 = vmatpush.bf16.msra.mxu0 %v5751
    %6698 = vmatpush.bf16.msra.mxu0 %v5744
    %6699 = vmatmul.bf16.gmra.mxu0 %v3980
    %v6700 = vpop.f32.mrf.mxu0
    %v6701 = vadd.f32 %v6688, %v6700
    %v6702 = vpop.f32.mrf.mxu0
    %6703 = vdwg.mxu0
    %6704 = vmatpush.bf16.msra.mxu0 %v5849
    %6705 = vmatpush.bf16.msra.mxu0 %v5842
    %6706 = vmatpush.bf16.msra.mxu0 %v5835
    %6707 = vmatpush.bf16.msra.mxu0 %v5828
    %6708 = vmatpush.bf16.msra.mxu0 %v5821
    %6709 = vmatpush.bf16.msra.mxu0 %v5814
    %6710 = vmatpush.bf16.msra.mxu0 %v5807
    %6711 = vmatpush.bf16.msra.mxu0 %v5800
    %6712 = vmatmul.bf16.gmra.mxu0 %v3981
    %v6713 = vpop.f32.mrf.mxu0
    %v6714 = vadd.f32 %v6701, %v6713
    %v6715 = vpop.f32.mrf.mxu0
    %6716 = vdwg.mxu0
    %6717 = vmatpush.bf16.msra.mxu0 %v5458
    %6718 = vmatpush.bf16.msra.mxu0 %v5451
    %6719 = vmatpush.bf16.msra.mxu0 %v5444
    %6720 = vmatpush.bf16.msra.mxu0 %v5437
    %6721 = vmatpush.bf16.msra.mxu0 %v5430
    %6722 = vmatpush.bf16.msra.mxu0 %v5423
    %6723 = vmatpush.bf16.msra.mxu0 %v5416
    %6724 = vmatpush.bf16.msra.mxu0 %v5409
    %6725 = vmatmul.bf16.gmra.mxu0 %v3974
    %v6726 = vpop.f32.mrf.mxu0
    %v6727 = vadd.f32 %v3987, %v6726
    %v6728 = vpop.f32.mrf.mxu0
    %6729 = vdwg.mxu0
    %6730 = vmatpush.bf16.msra.mxu0 %v5514
    %6731 = vmatpush.bf16.msra.mxu0 %v5507
    %6732 = vmatpush.bf16.msra.mxu0 %v5500
    %6733 = vmatpush.bf16.msra.mxu0 %v5493
    %6734 = vmatpush.bf16.msra.mxu0 %v5486
    %6735 = vmatpush.bf16.msra.mxu0 %v5479
    %6736 = vmatpush.bf16.msra.mxu0 %v5472
    %6737 = vmatpush.bf16.msra.mxu0 %v5465
    %6738 = vmatmul.bf16.gmra.mxu0 %v3975
    %v6739 = vpop.f32.mrf.mxu0
    %v6740 = vadd.f32 %v6727, %v6739
    %v6741 = vpop.f32.mrf.mxu0
    %6742 = vdwg.mxu0
    %6743 = vmatpush.bf16.msra.mxu0 %v5570
    %6744 = vmatpush.bf16.msra.mxu0 %v5563
    %6745 = vmatpush.bf16.msra.mxu0 %v5556
    %6746 = vmatpush.bf16.msra.mxu0 %v5549
    %6747 = vmatpush.bf16.msra.mxu0 %v5542
    %6748 = vmatpush.bf16.msra.mxu0 %v5535
    %6749 = vmatpush.bf16.msra.mxu0 %v5528
    %6750 = vmatpush.bf16.msra.mxu0 %v5521
    %6751 = vmatmul.bf16.gmra.mxu0 %v3976
    %v6752 = vpop.f32.mrf.mxu0
    %v6753 = vadd.f32 %v6740, %v6752
    %v6754 = vpop.f32.mrf.mxu0
    %6755 = vdwg.mxu0
    %6756 = vmatpush.bf16.msra.mxu0 %v5626
    %6757 = vmatpush.bf16.msra.mxu0 %v5619
    %6758 = vmatpush.bf16.msra.mxu0 %v5612
    %6759 = vmatpush.bf16.msra.mxu0 %v5605
    %6760 = vmatpush.bf16.msra.mxu0 %v5598
    %6761 = vmatpush.bf16.msra.mxu0 %v5591
    %6762 = vmatpush.bf16.msra.mxu0 %v5584
    %6763 = vmatpush.bf16.msra.mxu0 %v5577
    %6764 = vmatmul.bf16.gmra.mxu0 %v3977
    %v6765 = vpop.f32.mrf.mxu0
    %v6766 = vadd.f32 %v6753, %v6765
    %v6767 = vpop.f32.mrf.mxu0
    %6768 = vdwg.mxu0
    %6769 = vmatpush.bf16.msra.mxu0 %v5682
    %6770 = vmatpush.bf16.msra.mxu0 %v5675
    %6771 = vmatpush.bf16.msra.mxu0 %v5668
    %6772 = vmatpush.bf16.msra.mxu0 %v5661
    %6773 = vmatpush.bf16.msra.mxu0 %v5654
    %6774 = vmatpush.bf16.msra.mxu0 %v5647
    %6775 = vmatpush.bf16.msra.mxu0 %v5640
    %6776 = vmatpush.bf16.msra.mxu0 %v5633
    %6777 = vmatmul.bf16.gmra.mxu0 %v3978
    %v6778 = vpop.f32.mrf.mxu0
    %v6779 = vadd.f32 %v6766, %v6778
    %v6780 = vpop.f32.mrf.mxu0
    %6781 = vdwg.mxu0
    %6782 = vmatpush.bf16.msra.mxu0 %v5738
    %6783 = vmatpush.bf16.msra.mxu0 %v5731
    %6784 = vmatpush.bf16.msra.mxu0 %v5724
    %6785 = vmatpush.bf16.msra.mxu0 %v5717
    %6786 = vmatpush.bf16.msra.mxu0 %v5710
    %6787 = vmatpush.bf16.msra.mxu0 %v5703
    %6788 = vmatpush.bf16.msra.mxu0 %v5696
    %6789 = vmatpush.bf16.msra.mxu0 %v5689
    %6790 = vmatmul.bf16.gmra.mxu0 %v3979
    %v6791 = vpop.f32.mrf.mxu0
    %v6792 = vadd.f32 %v6779, %v6791
    %v6793 = vpop.f32.mrf.mxu0
    %6794 = vdwg.mxu0
    %6795 = vmatpush.bf16.msra.mxu0 %v5794
    %6796 = vmatpush.bf16.msra.mxu0 %v5787
    %6797 = vmatpush.bf16.msra.mxu0 %v5780
    %6798 = vmatpush.bf16.msra.mxu0 %v5773
    %6799 = vmatpush.bf16.msra.mxu0 %v5766
    %6800 = vmatpush.bf16.msra.mxu0 %v5759
    %6801 = vmatpush.bf16.msra.mxu0 %v5752
    %6802 = vmatpush.bf16.msra.mxu0 %v5745
    %6803 = vmatmul.bf16.gmra.mxu0 %v3980
    %v6804 = vpop.f32.mrf.mxu0
    %v6805 = vadd.f32 %v6792, %v6804
    %v6806 = vpop.f32.mrf.mxu0
    %6807 = vdwg.mxu0
    %6808 = vmatpush.bf16.msra.mxu0 %v5850
    %6809 = vmatpush.bf16.msra.mxu0 %v5843
    %6810 = vmatpush.bf16.msra.mxu0 %v5836
    %6811 = vmatpush.bf16.msra.mxu0 %v5829
    %6812 = vmatpush.bf16.msra.mxu0 %v5822
    %6813 = vmatpush.bf16.msra.mxu0 %v5815
    %6814 = vmatpush.bf16.msra.mxu0 %v5808
    %6815 = vmatpush.bf16.msra.mxu0 %v5801
    %6816 = vmatmul.bf16.gmra.mxu0 %v3981
    %v6817 = vpop.f32.mrf.mxu0
    %v6818 = vadd.f32 %v6805, %v6817
    %v6819 = vpop.f32.mrf.mxu0
    %6820 = vdwg.mxu0
    %6821 = vmatpush.bf16.msra.mxu0 %v5459
    %6822 = vmatpush.bf16.msra.mxu0 %v5452
    %6823 = vmatpush.bf16.msra.mxu0 %v5445
    %6824 = vmatpush.bf16.msra.mxu0 %v5438
    %6825 = vmatpush.bf16.msra.mxu0 %v5431
    %6826 = vmatpush.bf16.msra.mxu0 %v5424
    %6827 = vmatpush.bf16.msra.mxu0 %v5417
    %6828 = vmatpush.bf16.msra.mxu0 %v5410
    %6829 = vmatmul.bf16.gmra.mxu0 %v3974
    %v6830 = vpop.f32.mrf.mxu0
    %v6831 = vadd.f32 %v3988, %v6830
    %v6832 = vpop.f32.mrf.mxu0
    %6833 = vdwg.mxu0
    %6834 = vmatpush.bf16.msra.mxu0 %v5515
    %6835 = vmatpush.bf16.msra.mxu0 %v5508
    %6836 = vmatpush.bf16.msra.mxu0 %v5501
    %6837 = vmatpush.bf16.msra.mxu0 %v5494
    %6838 = vmatpush.bf16.msra.mxu0 %v5487
    %6839 = vmatpush.bf16.msra.mxu0 %v5480
    %6840 = vmatpush.bf16.msra.mxu0 %v5473
    %6841 = vmatpush.bf16.msra.mxu0 %v5466
    %6842 = vmatmul.bf16.gmra.mxu0 %v3975
    %v6843 = vpop.f32.mrf.mxu0
    %v6844 = vadd.f32 %v6831, %v6843
    %v6845 = vpop.f32.mrf.mxu0
    %6846 = vdwg.mxu0
    %6847 = vmatpush.bf16.msra.mxu0 %v5571
    %6848 = vmatpush.bf16.msra.mxu0 %v5564
    %6849 = vmatpush.bf16.msra.mxu0 %v5557
    %6850 = vmatpush.bf16.msra.mxu0 %v5550
    %6851 = vmatpush.bf16.msra.mxu0 %v5543
    %6852 = vmatpush.bf16.msra.mxu0 %v5536
    %6853 = vmatpush.bf16.msra.mxu0 %v5529
    %6854 = vmatpush.bf16.msra.mxu0 %v5522
    %6855 = vmatmul.bf16.gmra.mxu0 %v3976
    %v6856 = vpop.f32.mrf.mxu0
    %v6857 = vadd.f32 %v6844, %v6856
    %v6858 = vpop.f32.mrf.mxu0
    %6859 = vdwg.mxu0
    %6860 = vmatpush.bf16.msra.mxu0 %v5627
    %6861 = vmatpush.bf16.msra.mxu0 %v5620
    %6862 = vmatpush.bf16.msra.mxu0 %v5613
    %6863 = vmatpush.bf16.msra.mxu0 %v5606
    %6864 = vmatpush.bf16.msra.mxu0 %v5599
    %6865 = vmatpush.bf16.msra.mxu0 %v5592
    %6866 = vmatpush.bf16.msra.mxu0 %v5585
    %6867 = vmatpush.bf16.msra.mxu0 %v5578
    %6868 = vmatmul.bf16.gmra.mxu0 %v3977
    %v6869 = vpop.f32.mrf.mxu0
    %v6870 = vadd.f32 %v6857, %v6869
    %v6871 = vpop.f32.mrf.mxu0
    %6872 = vdwg.mxu0
    %6873 = vmatpush.bf16.msra.mxu0 %v5683
    %6874 = vmatpush.bf16.msra.mxu0 %v5676
    %6875 = vmatpush.bf16.msra.mxu0 %v5669
    %6876 = vmatpush.bf16.msra.mxu0 %v5662
    %6877 = vmatpush.bf16.msra.mxu0 %v5655
    %6878 = vmatpush.bf16.msra.mxu0 %v5648
    %6879 = vmatpush.bf16.msra.mxu0 %v5641
    %6880 = vmatpush.bf16.msra.mxu0 %v5634
    %6881 = vmatmul.bf16.gmra.mxu0 %v3978
    %v6882 = vpop.f32.mrf.mxu0
    %v6883 = vadd.f32 %v6870, %v6882
    %v6884 = vpop.f32.mrf.mxu0
    %6885 = vdwg.mxu0
    %6886 = vmatpush.bf16.msra.mxu0 %v5739
    %6887 = vmatpush.bf16.msra.mxu0 %v5732
    %6888 = vmatpush.bf16.msra.mxu0 %v5725
    %6889 = vmatpush.bf16.msra.mxu0 %v5718
    %6890 = vmatpush.bf16.msra.mxu0 %v5711
    %6891 = vmatpush.bf16.msra.mxu0 %v5704
    %6892 = vmatpush.bf16.msra.mxu0 %v5697
    %6893 = vmatpush.bf16.msra.mxu0 %v5690
    %6894 = vmatmul.bf16.gmra.mxu0 %v3979
    %v6895 = vpop.f32.mrf.mxu0
    %v6896 = vadd.f32 %v6883, %v6895
    %v6897 = vpop.f32.mrf.mxu0
    %6898 = vdwg.mxu0
    %6899 = vmatpush.bf16.msra.mxu0 %v5795
    %6900 = vmatpush.bf16.msra.mxu0 %v5788
    %6901 = vmatpush.bf16.msra.mxu0 %v5781
    %6902 = vmatpush.bf16.msra.mxu0 %v5774
    %6903 = vmatpush.bf16.msra.mxu0 %v5767
    %6904 = vmatpush.bf16.msra.mxu0 %v5760
    %6905 = vmatpush.bf16.msra.mxu0 %v5753
    %6906 = vmatpush.bf16.msra.mxu0 %v5746
    %6907 = vmatmul.bf16.gmra.mxu0 %v3980
    %v6908 = vpop.f32.mrf.mxu0
    %v6909 = vadd.f32 %v6896, %v6908
    %v6910 = vpop.f32.mrf.mxu0
    %6911 = vdwg.mxu0
    %6912 = vmatpush.bf16.msra.mxu0 %v5851
    %6913 = vmatpush.bf16.msra.mxu0 %v5844
    %6914 = vmatpush.bf16.msra.mxu0 %v5837
    %6915 = vmatpush.bf16.msra.mxu0 %v5830
    %6916 = vmatpush.bf16.msra.mxu0 %v5823
    %6917 = vmatpush.bf16.msra.mxu0 %v5816
    %6918 = vmatpush.bf16.msra.mxu0 %v5809
    %6919 = vmatpush.bf16.msra.mxu0 %v5802
    %6920 = vmatmul.bf16.gmra.mxu0 %v3981
    %v6921 = vpop.f32.mrf.mxu0
    %v6922 = vadd.f32 %v6909, %v6921
    %v6923 = vpop.f32.mrf.mxu0
    %6924 = vdwg.mxu0
    %6925 = vmatpush.bf16.msra.mxu0 %v5460
    %6926 = vmatpush.bf16.msra.mxu0 %v5453
    %6927 = vmatpush.bf16.msra.mxu0 %v5446
    %6928 = vmatpush.bf16.msra.mxu0 %v5439
    %6929 = vmatpush.bf16.msra.mxu0 %v5432
    %6930 = vmatpush.bf16.msra.mxu0 %v5425
    %6931 = vmatpush.bf16.msra.mxu0 %v5418
    %6932 = vmatpush.bf16.msra.mxu0 %v5411
    %6933 = vmatmul.bf16.gmra.mxu0 %v3974
    %v6934 = vpop.f32.mrf.mxu0
    %v6935 = vadd.f32 %v3989, %v6934
    %v6936 = vpop.f32.mrf.mxu0
    %6937 = vdwg.mxu0
    %6938 = vmatpush.bf16.msra.mxu0 %v5516
    %6939 = vmatpush.bf16.msra.mxu0 %v5509
    %6940 = vmatpush.bf16.msra.mxu0 %v5502
    %6941 = vmatpush.bf16.msra.mxu0 %v5495
    %6942 = vmatpush.bf16.msra.mxu0 %v5488
    %6943 = vmatpush.bf16.msra.mxu0 %v5481
    %6944 = vmatpush.bf16.msra.mxu0 %v5474
    %6945 = vmatpush.bf16.msra.mxu0 %v5467
    %6946 = vmatmul.bf16.gmra.mxu0 %v3975
    %v6947 = vpop.f32.mrf.mxu0
    %v6948 = vadd.f32 %v6935, %v6947
    %v6949 = vpop.f32.mrf.mxu0
    %6950 = vdwg.mxu0
    %6951 = vmatpush.bf16.msra.mxu0 %v5572
    %6952 = vmatpush.bf16.msra.mxu0 %v5565
    %6953 = vmatpush.bf16.msra.mxu0 %v5558
    %6954 = vmatpush.bf16.msra.mxu0 %v5551
    %6955 = vmatpush.bf16.msra.mxu0 %v5544
    %6956 = vmatpush.bf16.msra.mxu0 %v5537
    %6957 = vmatpush.bf16.msra.mxu0 %v5530
    %6958 = vmatpush.bf16.msra.mxu0 %v5523
    %6959 = vmatmul.bf16.gmra.mxu0 %v3976
    %v6960 = vpop.f32.mrf.mxu0
    %v6961 = vadd.f32 %v6948, %v6960
    %v6962 = vpop.f32.mrf.mxu0
    %6963 = vdwg.mxu0
    %6964 = vmatpush.bf16.msra.mxu0 %v5628
    %6965 = vmatpush.bf16.msra.mxu0 %v5621
    %6966 = vmatpush.bf16.msra.mxu0 %v5614
    %6967 = vmatpush.bf16.msra.mxu0 %v5607
    %6968 = vmatpush.bf16.msra.mxu0 %v5600
    %6969 = vmatpush.bf16.msra.mxu0 %v5593
    %6970 = vmatpush.bf16.msra.mxu0 %v5586
    %6971 = vmatpush.bf16.msra.mxu0 %v5579
    %6972 = vmatmul.bf16.gmra.mxu0 %v3977
    %v6973 = vpop.f32.mrf.mxu0
    %v6974 = vadd.f32 %v6961, %v6973
    %v6975 = vpop.f32.mrf.mxu0
    %6976 = vdwg.mxu0
    %6977 = vmatpush.bf16.msra.mxu0 %v5684
    %6978 = vmatpush.bf16.msra.mxu0 %v5677
    %6979 = vmatpush.bf16.msra.mxu0 %v5670
    %6980 = vmatpush.bf16.msra.mxu0 %v5663
    %6981 = vmatpush.bf16.msra.mxu0 %v5656
    %6982 = vmatpush.bf16.msra.mxu0 %v5649
    %6983 = vmatpush.bf16.msra.mxu0 %v5642
    %6984 = vmatpush.bf16.msra.mxu0 %v5635
    %6985 = vmatmul.bf16.gmra.mxu0 %v3978
    %v6986 = vpop.f32.mrf.mxu0
    %v6987 = vadd.f32 %v6974, %v6986
    %v6988 = vpop.f32.mrf.mxu0
    %6989 = vdwg.mxu0
    %6990 = vmatpush.bf16.msra.mxu0 %v5740
    %6991 = vmatpush.bf16.msra.mxu0 %v5733
    %6992 = vmatpush.bf16.msra.mxu0 %v5726
    %6993 = vmatpush.bf16.msra.mxu0 %v5719
    %6994 = vmatpush.bf16.msra.mxu0 %v5712
    %6995 = vmatpush.bf16.msra.mxu0 %v5705
    %6996 = vmatpush.bf16.msra.mxu0 %v5698
    %6997 = vmatpush.bf16.msra.mxu0 %v5691
    %6998 = vmatmul.bf16.gmra.mxu0 %v3979
    %v6999 = vpop.f32.mrf.mxu0
    %v7000 = vadd.f32 %v6987, %v6999
    %v7001 = vpop.f32.mrf.mxu0
    %7002 = vdwg.mxu0
    %7003 = vmatpush.bf16.msra.mxu0 %v5796
    %7004 = vmatpush.bf16.msra.mxu0 %v5789
    %7005 = vmatpush.bf16.msra.mxu0 %v5782
    %7006 = vmatpush.bf16.msra.mxu0 %v5775
    %7007 = vmatpush.bf16.msra.mxu0 %v5768
    %7008 = vmatpush.bf16.msra.mxu0 %v5761
    %7009 = vmatpush.bf16.msra.mxu0 %v5754
    %7010 = vmatpush.bf16.msra.mxu0 %v5747
    %7011 = vmatmul.bf16.gmra.mxu0 %v3980
    %v7012 = vpop.f32.mrf.mxu0
    %v7013 = vadd.f32 %v7000, %v7012
    %v7014 = vpop.f32.mrf.mxu0
    %7015 = vdwg.mxu0
    %7016 = vmatpush.bf16.msra.mxu0 %v5852
    %7017 = vmatpush.bf16.msra.mxu0 %v5845
    %7018 = vmatpush.bf16.msra.mxu0 %v5838
    %7019 = vmatpush.bf16.msra.mxu0 %v5831
    %7020 = vmatpush.bf16.msra.mxu0 %v5824
    %7021 = vmatpush.bf16.msra.mxu0 %v5817
    %7022 = vmatpush.bf16.msra.mxu0 %v5810
    %7023 = vmatpush.bf16.msra.mxu0 %v5803
    %7024 = vmatmul.bf16.gmra.mxu0 %v3981
    %v7025 = vpop.f32.mrf.mxu0
    %v7026 = vadd.f32 %v7013, %v7025
    %v7027 = vpop.f32.mrf.mxu0
    %7028 = vdwg.mxu0
    %v7029 = vtanh.pop %v6402
    %v7030 = vtanh.pop %v6506
    %v7031 = vtanh.pop %v6610
    %v7032 = vtanh.pop %v6714
    %v7033 = vtanh.pop %v6818
    %v7034 = vtanh.pop %v6922
    %v7035 = vtanh.pop %v7026
    %7036 = vst [vmem:[%s8] sm:$0xff] %v7029
    %7037 = vst [vmem:[%s8 + $0x8] sm:$0xff] %v7030
    %7038 = vst [vmem:[%s8 + $0x10] sm:$0xff] %v7031
    %7039 = vst [vmem:[%s8 + $0x18] sm:$0xff] %v7032
    %7040 = vst [vmem:[%s8 + $0x20] sm:$0xff] %v7033
    %7041 = vst [vmem:[%s8 + $0x28] sm:$0xff] %v7034
    %7042 = vst [vmem:[%s8 + $0x30] sm:$0xff] %v7035
    // Predicated region
    $region50: #{generator_forward.1} parent=1 // pred_check
      _
    $region51: #{generator_forward.1} parent=1 // pred_check_branch
      %7044 = sbr.rel (0) target = $region53
    $region52: #{generator_forward.1} parent=1 // pred_region
      _
    $region53: #{generator_forward.1} parent=1 // pred_fallthru
      _
    // Predicated region
    $region54: #{generator_forward.1} parent=1 // pred_check
      _
    $region55: #{generator_forward.1} parent=1 // pred_check_branch
      %7046 = sbr.rel (0) target = $region57
    $region56: #{generator_forward.1} parent=1 // pred_region
      _
    $region57: #{generator_forward.1} parent=1 // pred_fallthru
      _
    %7047 = vsyncpa [#allocation7], 1
    %7048 = vsyncpa [#allocation9], 1
    %7049 = vsyncpa [#allocation12], 1
  %7050 = vsyncmov [#allocation4]
  %s7051 = vpop.sfrf %7050
  %p7052 = scmp.eq.s32.totalorder %s7051, 0
  %p7053 = pneg %p7052
  %7055 = shalt.err (%p7053)
  %s7056 = scalar_lea.sflag [#allocation4], 1
  %7057 = vsyncmov %s7056
  %s7058 = vpop.sfrf %7057
  %p7059 = scmp.eq.s32.totalorder %s7058, 0
  %p7060 = pneg %p7059
  %7062 = shalt.err (%p7060)

</llo_original>
